<compile_context>
chip_gen: v7x
topology: tpu7x:2x2x1
jax: 0.10.0
libtpu: 0.0.40
codegen_flags: <defaults>
</compile_context>

<pallas_src>
import math

import jax
import jax.numpy as jnp
from jax.experimental import pallas as pl
from jax.experimental.pallas import tpu as pltpu  # noqa: F401  (kept for TPU-specific params if scaled up)

# ---- small ViT config (PyTorch defaults scaled down, consistent shapes) ----
B = 2          # batch
C_IN = 3       # in_channels
IMG = 16       # image_size
PATCH = 4      # patches (patch size)
GH = GW = IMG // PATCH
SP = GH * GW               # 16 patches
S = SP + 1                 # +1 class token -> seq_len = 17
S_PAD = 24                 # per-batch block padded to an 8-sublane multiple
N_TOK = B * S_PAD          # 48 rows in the fused token slab
K_IN = C_IN * PATCH * PATCH  # 48 im2col features per patch
DIM = 32                   # dim
FF_DIM = 64                # ff_dim
HEADS = 4                  # num_heads
DH = DIM // HEADS
LAYERS = 2                 # num_layers
NCLS = 10                  # num_classes
EPS = 1e-6                 # LayerNorm eps
Q_SCALE = 1.0 / math.sqrt(DH)

# packed-slab layout ---------------------------------------------------------
WCOLS = 3 * DIM                      # 96-lane weight slab
LROWS = 2 * DIM + FF_DIM             # 128 rows / layer: [wqkv] [wo|w1] [w2]
FC_ROW = K_IN + LAYERS * LROWS       # 304 (multiple of 8)
W_ROWS = FC_ROW + DIM                # 336
VPL = 8                              # vector rows per layer
V_ROWS = LAYERS * VPL + 3            # 19 (final ln_s, ln_b, fc_b)

# TODO(synk): nn.Dropout(p=0.1) is stochastic; implemented as identity (eval-mode).


# ---------------------------------------------------------------------------
# shared math (used both inside the kernel and in the pure-JAX reference)
# ---------------------------------------------------------------------------
def _layernorm(x, scale, bias):
    mu = jnp.mean(x, axis=-1, keepdims=True)
    var = jnp.mean(jnp.square(x - mu), axis=-1, keepdims=True)
    return (x - mu) * jax.lax.rsqrt(var + EPS) * scale + bias


def _erf(x):
    # Abramowitz & Stegun 7.1.26 (max abs err 1.5e-7 => float32-exact).
    p = 0.3275911
    a1, a2, a3, a4, a5 = 0.254829592, -0.284496736, 1.421413741, -1.453152027, 1.061405429
    ax = jnp.abs(x)
    t = 1.0 / (1.0 + p * ax)
    poly = ((((a5 * t + a4) * t + a3) * t + a2) * t + a1) * t
    y = 1.0 - poly * jnp.exp(-ax * ax)
    return jnp.where(x >= 0, y, -y)


def _gelu(x):
    return 0.5 * x * (1.0 + _erf(x * (1.0 / math.sqrt(2.0))))


# ---------------------------------------------------------------------------
# single fused Pallas kernel: patch-embed -> LAYERS x transformer -> head
# ---------------------------------------------------------------------------
def vit_fused_kernel(patches_ref, add_ref, w_ref, v_ref, o_ref):
    # Block-diagonal attention mask (also masks the 7 padded key rows per
    # batch block).  Built once from 2-D iota; reused by every head/layer.
    qi = jax.lax.broadcasted_iota(jnp.int32, (N_TOK, N_TOK), 0)
    ki = jax.lax.broadcasted_iota(jnp.int32, (N_TOK, N_TOK), 1)
    valid = None
    for bi in range(B):
        lo = bi * S_PAD
        blk = (qi >= lo) & (qi < lo + S_PAD) & (ki >= lo) & (ki < lo + S)
        valid = blk if valid is None else (valid | blk)
    mask = jnp.where(valid, jnp.float32(0.0), jnp.float32(-1e9))

    # Patch embedding for the full padded slab: class-token / pad rows of
    # `patches` are zero and `add` already carries conv bias + positional
    # embedding + class token, so one matmul + add builds the token slab.
    x = jnp.dot(patches_ref[...], w_ref[0:K_IN, 0:DIM],
                preferred_element_type=jnp.float32) + add_ref[...]

    for l in range(LAYERS):                       # static unroll, weights resident in VMEM
        wb = K_IN + l * LROWS                     # 8-aligned weight-slab base
        vb = l * VPL                              # vector-slab base
        ln1_s = v_ref[vb + 0:vb + 1, 0:DIM]
        ln1_b = v_ref[vb + 1:vb + 2, 0:DIM]
        bqkv = v_ref[vb + 2:vb + 3, 0:3 * DIM]
        bo = v_ref[vb + 3:vb + 4, 0:DIM]
        ln2_s = v_ref[vb + 4:vb + 5, 0:DIM]
        ln2_b = v_ref[vb + 5:vb + 6, 0:DIM]
        b1 = v_ref[vb + 6:vb + 7, 0:FF_DIM]
        b2 = v_ref[vb + 7:vb + 8, 0:DIM]

        # --- multi-head self-attention (pre-LN), batch-fused via the mask ---
        h = _layernorm(x, ln1_s, ln1_b)
        qkv = jnp.dot(h, w_ref[wb:wb + DIM, 0:3 * DIM],
                      preferred_element_type=jnp.float32) + bqkv      # (N_TOK, 3*DIM)
        heads = []
        for hh in range(HEADS):                   # static loop over heads only
            c = hh * DH
            qh = qkv[:, c:c + DH]                 # 1/sqrt(DH) folded into wqkv/bqkv
            kh = qkv[:, DIM + c:DIM + c + DH]
            vh = qkv[:, 2 * DIM + c:2 * DIM + c + DH]
            s = jax.lax.dot_general(qh, kh, (((1,), (1,)), ((), ())),
                                    preferred_element_type=jnp.float32) + mask
            s = s - jnp.max(s, axis=-1, keepdims=True)
            p = jnp.exp(s)
            oh = jnp.dot(p, vh, preferred_element_type=jnp.float32)   # (N_TOK, DH)
            # exact f32 normalization applied to the small per-head output
            heads.append(oh * (1.0 / jnp.sum(p, axis=-1, keepdims=True)))
        att = jnp.concatenate(heads, axis=-1)                         # lane concat -> (N_TOK, DIM)
        att = jnp.dot(att, w_ref[wb + DIM:wb + 2 * DIM, 0:DIM],
                      preferred_element_type=jnp.float32) + bo        # single wo matmul
        x = x + att

        # --- position-wise feed-forward (pre-LN) ---
        h = _layernorm(x, ln2_s, ln2_b)
        h = jnp.dot(h, w_ref[wb + DIM:wb + 2 * DIM, DIM:DIM + FF_DIM],
                    preferred_element_type=jnp.float32) + b1
        h = _gelu(h)
        h = jnp.dot(h, w_ref[wb + 2 * DIM:wb + 2 * DIM + FF_DIM, 0:DIM],
                    preferred_element_type=jnp.float32) + b2
        x = x + h

    # --- classifier head: class-token rows at 0 and S_PAD (8-aligned) ---
    vb = LAYERS * VPL
    cls_rows = jnp.concatenate(
        [x[bi * S_PAD:bi * S_PAD + 1, :] for bi in range(B)], axis=0)  # (B, DIM)
    hcls = _layernorm(cls_rows, v_ref[vb:vb + 1, 0:DIM], v_ref[vb + 1:vb + 2, 0:DIM])
    o_ref[...] = jnp.dot(hcls, w_ref[FC_ROW:FC_ROW + DIM, 0:NCLS],
                         preferred_element_type=jnp.float32) + v_ref[vb + 2:vb + 3, 0:NCLS]


# ---------------------------------------------------------------------------
# parameter init (deterministic, shapes follow the PyTorch module)
# ---------------------------------------------------------------------------
def init_params(key):
    ks = jax.random.split(key, 8 + LAYERS)

    def lin(k, fan_in, fan_out):
        kw, kb = jax.random.split(k)
        bound = math.sqrt(6.0 / (fan_in + fan_out))      # xavier_uniform
        w = jax.random.uniform(kw, (fan_in, fan_out), jnp.float32, -bound, bound)
        b = 1e-6 * jax.random.normal(kb, (1, fan_out), jnp.float32)
        return w, b

    params = {}
    # patch embedding Conv2d(C_IN, DIM, k=PATCH, s=PATCH), stored as (C*fh*fw, DIM)
    cbound = 1.0 / math.sqrt(K_IN)
    params['patch_w'] = jax.random.uniform(ks[0], (K_IN, DIM), jnp.float32, -cbound, cbound)
    params['patch_b'] = jax.random.uniform(ks[1], (1, DIM), jnp.float32, -cbound, cbound)
    params['cls'] = jnp.zeros((1, 1, DIM), jnp.float32)                        # class_token
    params['pos'] = 0.02 * jax.random.normal(ks[2], (1, S, DIM), jnp.float32)  # pos embedding

    blocks = []
    for l in range(LAYERS):
        kk = jax.random.split(ks[3 + l], 6)
        wq, bq = lin(kk[0], DIM, DIM)
        wk, bk = lin(kk[1], DIM, DIM)
        wv, bv = lin(kk[2], DIM, DIM)
        wo, bo = lin(kk[3], DIM, DIM)
        w1, b1 = lin(kk[4], DIM, FF_DIM)
        w2, b2 = lin(kk[5], FF_DIM, DIM)
        blocks.append(dict(
            ln1_s=jnp.ones((1, DIM), jnp.float32), ln1_b=jnp.zeros((1, DIM), jnp.float32),
            wq=wq, bq=bq, wk=wk, bk=bk, wv=wv, bv=bv, wo=wo, bo=bo,
            ln2_s=jnp.ones((1, DIM), jnp.float32), ln2_b=jnp.zeros((1, DIM), jnp.float32),
            w1=w1, b1=b1, w2=w2, b2=b2))
    params['blocks'] = blocks

    params['ln_s'] = jnp.ones((1, DIM), jnp.float32)
    params['ln_b'] = jnp.zeros((1, DIM), jnp.float32)
    # NOTE: the reference init sets fc weight/bias to 0 (output would be all-zero);
    # we use small deterministic random weights so the kernel is exercised.
    wfc, bfc = lin(ks[3 + LAYERS], DIM, NCLS)
    params['fc_w'] = wfc
    params['fc_b'] = bfc
    return params


# ---------------------------------------------------------------------------
# host-side glue: im2col + operand packing (layout massaging only)
# ---------------------------------------------------------------------------
def extract_patches(x):
    # x: (B, C, H, W) NCHW -> (B*SP, C*fh*fw); patch order row-major (gh, gw),
    # per-patch flatten order (C, fh, fw) matching Conv2d weight flatten.
    b, c, _, _ = x.shape
    x = x.reshape(b, c, GH, PATCH, GW, PATCH)
    x = x.transpose(0, 2, 4, 1, 3, 5)
    return x.reshape(b * GH * GW, c * PATCH * PATCH)


def _pack_operands(x, params):
    b = x.shape[0]
    # padded im2col patches: zero row at the class-token slot + 7 pad rows
    patches = extract_patches(x).reshape(b, SP, K_IN)
    patches_pad = jnp.zeros((b, S_PAD, K_IN), jnp.float32).at[:, 1:S, :].set(patches)
    patches_pad = patches_pad.reshape(b * S_PAD, K_IN)

    # additive token bias: class token + pos embedding (+ conv bias at patch rows)
    pos = params['pos'][0]                                            # (S, DIM)
    add_blk = jnp.zeros((S_PAD, DIM), jnp.float32)
    add_blk = add_blk.at[0].set(params['cls'][0, 0] + pos[0])
    add_blk = add_blk.at[1:S].set(params['patch_b'] + pos[1:])
    add = jnp.broadcast_to(add_blk[None], (b, S_PAD, DIM)).reshape(b * S_PAD, DIM)

    # one weight slab + one LN/bias vector slab (4 operands total)
    w = jnp.zeros((W_ROWS, WCOLS), jnp.float32)
    v = jnp.zeros((V_ROWS, WCOLS), jnp.float32)
    w = w.at[0:K_IN, 0:DIM].set(params['patch_w'])
    for l, blk in enumerate(params['blocks']):
        wb = K_IN + l * LROWS
        vb = l * VPL
        # fold the 1/sqrt(DH) score scale into the Q columns of the fused QKV
        w_qkv = jnp.concatenate([blk['wq'] * Q_SCALE, blk['wk'], blk['wv']], axis=1)
        b_qkv = jnp.concatenate([blk['bq'] * Q_SCALE, blk['bk'], blk['bv']], axis=1)
        w = w.at[wb:wb + DIM, 0:3 * DIM].set(w_qkv)
        w = w.at[wb + DIM:wb + 2 * DIM, 0:DIM].set(blk['wo'])
        w = w.at[wb + DIM:wb + 2 * DIM, DIM:DIM + FF_DIM].set(blk['w1'])
        w = w.at[wb + 2 * DIM:wb + 2 * DIM + FF_DIM, 0:DIM].set(blk['w2'])
        v = v.at[vb + 0, 0:DIM].set(blk['ln1_s'][0])
        v = v.at[vb + 1, 0:DIM].set(blk['ln1_b'][0])
        v = v.at[vb + 2, 0:3 * DIM].set(b_qkv[0])
        v = v.at[vb + 3, 0:DIM].set(blk['bo'][0])
        v = v.at[vb + 4, 0:DIM].set(blk['ln2_s'][0])
        v = v.at[vb + 5, 0:DIM].set(blk['ln2_b'][0])
        v = v.at[vb + 6, 0:FF_DIM].set(blk['b1'][0])
        v = v.at[vb + 7, 0:DIM].set(blk['b2'][0])
    w = w.at[FC_ROW:FC_ROW + DIM, 0:NCLS].set(params['fc_w'])
    v = v.at[LAYERS * VPL + 0, 0:DIM].set(params['ln_s'][0])
    v = v.at[LAYERS * VPL + 1, 0:DIM].set(params['ln_b'][0])
    v = v.at[LAYERS * VPL + 2, 0:NCLS].set(params['fc_b'][0])
    return patches_pad, add, w, v


def vit_forward(x, params):
    b = x.shape[0]
    assert b == B, "kernel is specialized for the static batch size B"
    patches_pad, add, w, v = _pack_operands(x, params)
    return pl.pallas_call(
        vit_fused_kernel,
        out_shape=jax.ShapeDtypeStruct((b, NCLS), jnp.float32),
    )(patches_pad, add, w, v)


# ---------------------------------------------------------------------------
# pure-JAX reference
# ---------------------------------------------------------------------------
def vit_reference(x, params):
    b = x.shape[0]
    emb = extract_patches(x) @ params['patch_w'] + params['patch_b']
    emb = emb.reshape(b, SP, DIM)
    cls = jnp.broadcast_to(params['cls'], (b, 1, DIM))
    tok = jnp.concatenate([cls, emb], axis=1) + params['pos']
    for blk in params['blocks']:
        h = _layernorm(tok, blk['ln1_s'], blk['ln1_b'])
        q = (h @ blk['wq'] + blk['bq']).reshape(b, S, HEADS, DH).transpose(0, 2, 1, 3)
        k = (h @ blk['wk'] + blk['bk']).reshape(b, S, HEADS, DH).transpose(0, 2, 1, 3)
        v = (h @ blk['wv'] + blk['bv']).reshape(b, S, HEADS, DH).transpose(0, 2, 1, 3)
        scores = jnp.einsum('bhqd,bhkd->bhqk', q, k) / math.sqrt(DH)
        p = jax.nn.softmax(scores, axis=-1)
        att = jnp.einsum('bhqk,bhkd->bhqd', p, v).transpose(0, 2, 1, 3).reshape(b, S, DIM)
        tok = tok + (att @ blk['wo'] + blk['bo'])
        h = _layernorm(tok, blk['ln2_s'], blk['ln2_b'])
        tok = tok + (_gelu(h @ blk['w1'] + blk['b1']) @ blk['w2'] + blk['b2'])
    h = _layernorm(tok[:, 0], params['ln_s'], params['ln_b'])
    return h @ params['fc_w'] + params['fc_b']


if __name__ == "__main__":
    key = jax.random.PRNGKey(0)
    kx, kp = jax.random.split(key)
    x = jax.random.normal(kx, (B, C_IN, IMG, IMG), jnp.float32)
    params = init_params(kp)

    out = vit_forward(x, params)
    out = jax.block_until_ready(out)

    ref = vit_reference(x, params)
    assert out.shape == (B, NCLS), out.shape
    max_diff = float(jnp.max(jnp.abs(out - ref)))
    # all-f32 math with exact softmax normalization -> expected diff ~1e-5
    assert jnp.allclose(out, ref, atol=2e-3, rtol=2e-3), f"max abs diff {max_diff}"

    print("KERNEL_OK")
</pallas_src>

<mosaic_0001>
module attributes {stable_mosaic.version = 11 : i64} {
  func.func @vit_fused_kernel(%arg0: memref<48x48xf32, #tpu.memory_space<vmem>>, %arg1: memref<48x32xf32, #tpu.memory_space<vmem>>, %arg2: memref<336x96xf32, #tpu.memory_space<vmem>>, %arg3: memref<19x96xf32, #tpu.memory_space<vmem>>, %arg4: memref<2x10xf32, #tpu.memory_space<vmem>>) attributes {dimension_semantics = [], scalar_prefetch = 0 : i64, scratch_operands = 0 : i64, tpu.core_type = #tpu.core_type<tc>} {
    %0 = tpu.iota {dimensions = array<i32: 0>} : vector<48x48xi32>
    %1 = tpu.iota {dimensions = array<i32: 1>} : vector<48x48xi32>
    %c0_i32 = arith.constant 0 : i32
    %2 = vector.broadcast %c0_i32 : i32 to vector<48x48xi32>
    %3 = arith.cmpi sge, %0, %2 : vector<48x48xi32>
    %c24_i32 = arith.constant 24 : i32
    %4 = vector.broadcast %c24_i32 : i32 to vector<48x48xi32>
    %5 = arith.cmpi slt, %0, %4 : vector<48x48xi32>
    %6 = arith.andi %3, %5 : vector<48x48xi1>
    %c0_i32_0 = arith.constant 0 : i32
    %7 = vector.broadcast %c0_i32_0 : i32 to vector<48x48xi32>
    %8 = arith.cmpi sge, %1, %7 : vector<48x48xi32>
    %9 = arith.andi %6, %8 : vector<48x48xi1>
    %c17_i32 = arith.constant 17 : i32
    %10 = vector.broadcast %c17_i32 : i32 to vector<48x48xi32>
    %11 = arith.cmpi slt, %1, %10 : vector<48x48xi32>
    %12 = arith.andi %9, %11 : vector<48x48xi1>
    %c24_i32_1 = arith.constant 24 : i32
    %13 = vector.broadcast %c24_i32_1 : i32 to vector<48x48xi32>
    %14 = arith.cmpi sge, %0, %13 : vector<48x48xi32>
    %c48_i32 = arith.constant 48 : i32
    %15 = vector.broadcast %c48_i32 : i32 to vector<48x48xi32>
    %16 = arith.cmpi slt, %0, %15 : vector<48x48xi32>
    %17 = arith.andi %14, %16 : vector<48x48xi1>
    %c24_i32_2 = arith.constant 24 : i32
    %18 = vector.broadcast %c24_i32_2 : i32 to vector<48x48xi32>
    %19 = arith.cmpi sge, %1, %18 : vector<48x48xi32>
    %20 = arith.andi %17, %19 : vector<48x48xi1>
    %c41_i32 = arith.constant 41 : i32
    %21 = vector.broadcast %c41_i32 : i32 to vector<48x48xi32>
    %22 = arith.cmpi slt, %1, %21 : vector<48x48xi32>
    %23 = arith.andi %20, %22 : vector<48x48xi1>
    %24 = arith.ori %12, %23 : vector<48x48xi1>
    %cst = arith.constant 0.000000e+00 : f32
    %cst_3 = arith.constant -1.000000e+09 : f32
    %25 = vector.broadcast %cst : f32 to vector<48x48xf32>
    %26 = vector.broadcast %cst_3 : f32 to vector<48x48xf32>
    %27 = arith.select %24, %25, %26 : vector<48x48xi1>, vector<48x48xf32>
    %c0 = arith.constant 0 : index
    %c0_4 = arith.constant 0 : index
    %28 = vector.load %arg0[%c0, %c0_4] : memref<48x48xf32, #tpu.memory_space<vmem>>, vector<48x48xf32>
    %c0_5 = arith.constant 0 : index
    %c0_6 = arith.constant 0 : index
    %29 = vector.load %arg2[%c0_5, %c0_6] : memref<336x96xf32, #tpu.memory_space<vmem>>, vector<48x32xf32>
    %cst_7 = arith.constant dense<0.000000e+00> : vector<48x32xf32>
    %30 = tpu.matmul %28, %29, %cst_7 {dimension_numbers = #tpu.dot_dimension_numbers<[1], [0], [0], [1], [0, 0, 1, 1], [], []>} : vector<48x48xf32>, vector<48x32xf32>, vector<48x32xf32> -> vector<48x32xf32>
    %c0_8 = arith.constant 0 : index
    %c0_9 = arith.constant 0 : index
    %31 = vector.load %arg1[%c0_8, %c0_9] : memref<48x32xf32, #tpu.memory_space<vmem>>, vector<48x32xf32>
    %32 = arith.addf %30, %31 : vector<48x32xf32>
    %c0_10 = arith.constant 0 : index
    %c0_11 = arith.constant 0 : index
    %33 = vector.load %arg3[%c0_10, %c0_11] : memref<19x96xf32, #tpu.memory_space<vmem>>, vector<1x32xf32>
    %c1 = arith.constant 1 : index
    %c0_12 = arith.constant 0 : index
    %34 = vector.load %arg3[%c1, %c0_12] : memref<19x96xf32, #tpu.memory_space<vmem>>, vector<1x32xf32>
    %c2 = arith.constant 2 : index
    %c0_13 = arith.constant 0 : index
    %35 = vector.load %arg3[%c2, %c0_13] : memref<19x96xf32, #tpu.memory_space<vmem>>, vector<1x96xf32>
    %c3 = arith.constant 3 : index
    %c0_14 = arith.constant 0 : index
    %36 = vector.load %arg3[%c3, %c0_14] : memref<19x96xf32, #tpu.memory_space<vmem>>, vector<1x32xf32>
    %c4 = arith.constant 4 : index
    %c0_15 = arith.constant 0 : index
    %37 = vector.load %arg3[%c4, %c0_15] : memref<19x96xf32, #tpu.memory_space<vmem>>, vector<1x32xf32>
    %c5 = arith.constant 5 : index
    %c0_16 = arith.constant 0 : index
    %38 = vector.load %arg3[%c5, %c0_16] : memref<19x96xf32, #tpu.memory_space<vmem>>, vector<1x32xf32>
    %c6 = arith.constant 6 : index
    %c0_17 = arith.constant 0 : index
    %39 = vector.load %arg3[%c6, %c0_17] : memref<19x96xf32, #tpu.memory_space<vmem>>, vector<1x64xf32>
    %c7 = arith.constant 7 : index
    %c0_18 = arith.constant 0 : index
    %40 = vector.load %arg3[%c7, %c0_18] : memref<19x96xf32, #tpu.memory_space<vmem>>, vector<1x32xf32>
    %cst_19 = arith.constant dense<0.000000e+00> : vector<48xf32>
    %41 = vector.multi_reduction <add>, %32, %cst_19 [1] : vector<48x32xf32> to vector<48xf32>
    %42 = vector.shape_cast %41 : vector<48xf32> to vector<48x1xf32>
    %cst_20 = arith.constant 3.200000e+01 : f32
    %43 = vector.broadcast %cst_20 : f32 to vector<48x1xf32>
    %44 = arith.divf %42, %43 : vector<48x1xf32>
    %45 = vector.broadcast %44 : vector<48x1xf32> to vector<48x32xf32>
    %46 = arith.subf %32, %45 : vector<48x32xf32>
    %47 = arith.mulf %46, %46 : vector<48x32xf32>
    %cst_21 = arith.constant dense<0.000000e+00> : vector<48xf32>
    %48 = vector.multi_reduction <add>, %47, %cst_21 [1] : vector<48x32xf32> to vector<48xf32>
    %49 = vector.shape_cast %48 : vector<48xf32> to vector<48x1xf32>
    %cst_22 = arith.constant 3.200000e+01 : f32
    %50 = vector.broadcast %cst_22 : f32 to vector<48x1xf32>
    %51 = arith.divf %49, %50 : vector<48x1xf32>
    %52 = vector.broadcast %44 : vector<48x1xf32> to vector<48x32xf32>
    %53 = arith.subf %32, %52 : vector<48x32xf32>
    %cst_23 = arith.constant 9.99999997E-7 : f32
    %54 = vector.broadcast %cst_23 : f32 to vector<48x1xf32>
    %55 = arith.addf %51, %54 : vector<48x1xf32>
    %56 = math.rsqrt %55 : vector<48x1xf32>
    %57 = vector.broadcast %56 : vector<48x1xf32> to vector<48x32xf32>
    %58 = arith.mulf %53, %57 : vector<48x32xf32>
    %59 = vector.broadcast %33 : vector<1x32xf32> to vector<48x32xf32>
    %60 = arith.mulf %58, %59 : vector<48x32xf32>
    %61 = vector.broadcast %34 : vector<1x32xf32> to vector<48x32xf32>
    %62 = arith.addf %60, %61 : vector<48x32xf32>
    %c48 = arith.constant 48 : index
    %c0_24 = arith.constant 0 : index
    %63 = vector.load %arg2[%c48, %c0_24] : memref<336x96xf32, #tpu.memory_space<vmem>>, vector<32x96xf32>
    %cst_25 = arith.constant dense<0.000000e+00> : vector<48x96xf32>
    %64 = tpu.matmul %62, %63, %cst_25 {dimension_numbers = #tpu.dot_dimension_numbers<[1], [0], [0], [1], [0, 0, 1, 1], [], []>} : vector<48x32xf32>, vector<32x96xf32>, vector<48x96xf32> -> vector<48x96xf32>
    %65 = vector.broadcast %35 : vector<1x96xf32> to vector<48x96xf32>
    %66 = arith.addf %64, %65 : vector<48x96xf32>
    %67 = vector.extract_strided_slice %66 {offsets = [0, 0], sizes = [48, 8], strides = [1, 1]} : vector<48x96xf32> to vector<48x8xf32>
    %68 = vector.extract_strided_slice %66 {offsets = [0, 32], sizes = [48, 8], strides = [1, 1]} : vector<48x96xf32> to vector<48x8xf32>
    %69 = vector.extract_strided_slice %66 {offsets = [0, 64], sizes = [48, 8], strides = [1, 1]} : vector<48x96xf32> to vector<48x8xf32>
    %cst_26 = arith.constant dense<0.000000e+00> : vector<48x48xf32>
    %70 = tpu.matmul %67, %68, %cst_26 {dimension_numbers = #tpu.dot_dimension_numbers<[1], [1], [0], [0], [0, 0, 1, 0], [], []>} : vector<48x8xf32>, vector<48x8xf32>, vector<48x48xf32> -> vector<48x48xf32>
    %71 = arith.addf %70, %27 : vector<48x48xf32>
    %cst_27 = arith.constant dense<0xFF800000> : vector<48xf32>
    %72 = vector.multi_reduction <maximumf>, %71, %cst_27 [1] : vector<48x48xf32> to vector<48xf32>
    %73 = vector.shape_cast %72 : vector<48xf32> to vector<48x1xf32>
    %74 = vector.broadcast %73 : vector<48x1xf32> to vector<48x48xf32>
    %75 = arith.subf %71, %74 : vector<48x48xf32>
    %76 = math.exp %75 : vector<48x48xf32>
    %cst_28 = arith.constant dense<0.000000e+00> : vector<48x8xf32>
    %77 = tpu.matmul %76, %69, %cst_28 {dimension_numbers = #tpu.dot_dimension_numbers<[1], [0], [0], [1], [0, 0, 1, 1], [], []>} : vector<48x48xf32>, vector<48x8xf32>, vector<48x8xf32> -> vector<48x8xf32>
    %cst_29 = arith.constant dense<0.000000e+00> : vector<48xf32>
    %78 = vector.multi_reduction <add>, %76, %cst_29 [1] : vector<48x48xf32> to vector<48xf32>
    %79 = vector.shape_cast %78 : vector<48xf32> to vector<48x1xf32>
    %cst_30 = arith.constant 1.000000e+00 : f32
    %80 = vector.broadcast %cst_30 : f32 to vector<48x1xf32>
    %81 = arith.divf %80, %79 : vector<48x1xf32>
    %82 = vector.broadcast %81 : vector<48x1xf32> to vector<48x8xf32>
    %83 = arith.mulf %77, %82 : vector<48x8xf32>
    %84 = vector.extract_strided_slice %66 {offsets = [0, 8], sizes = [48, 8], strides = [1, 1]} : vector<48x96xf32> to vector<48x8xf32>
    %85 = vector.extract_strided_slice %66 {offsets = [0, 40], sizes = [48, 8], strides = [1, 1]} : vector<48x96xf32> to vector<48x8xf32>
    %86 = vector.extract_strided_slice %66 {offsets = [0, 72], sizes = [48, 8], strides = [1, 1]} : vector<48x96xf32> to vector<48x8xf32>
    %cst_31 = arith.constant dense<0.000000e+00> : vector<48x48xf32>
    %87 = tpu.matmul %84, %85, %cst_31 {dimension_numbers = #tpu.dot_dimension_numbers<[1], [1], [0], [0], [0, 0, 1, 0], [], []>} : vector<48x8xf32>, vector<48x8xf32>, vector<48x48xf32> -> vector<48x48xf32>
    %88 = arith.addf %87, %27 : vector<48x48xf32>
    %cst_32 = arith.constant dense<0xFF800000> : vector<48xf32>
    %89 = vector.multi_reduction <maximumf>, %88, %cst_32 [1] : vector<48x48xf32> to vector<48xf32>
    %90 = vector.shape_cast %89 : vector<48xf32> to vector<48x1xf32>
    %91 = vector.broadcast %90 : vector<48x1xf32> to vector<48x48xf32>
    %92 = arith.subf %88, %91 : vector<48x48xf32>
    %93 = math.exp %92 : vector<48x48xf32>
    %cst_33 = arith.constant dense<0.000000e+00> : vector<48x8xf32>
    %94 = tpu.matmul %93, %86, %cst_33 {dimension_numbers = #tpu.dot_dimension_numbers<[1], [0], [0], [1], [0, 0, 1, 1], [], []>} : vector<48x48xf32>, vector<48x8xf32>, vector<48x8xf32> -> vector<48x8xf32>
    %cst_34 = arith.constant dense<0.000000e+00> : vector<48xf32>
    %95 = vector.multi_reduction <add>, %93, %cst_34 [1] : vector<48x48xf32> to vector<48xf32>
    %96 = vector.shape_cast %95 : vector<48xf32> to vector<48x1xf32>
    %cst_35 = arith.constant 1.000000e+00 : f32
    %97 = vector.broadcast %cst_35 : f32 to vector<48x1xf32>
    %98 = arith.divf %97, %96 : vector<48x1xf32>
    %99 = vector.broadcast %98 : vector<48x1xf32> to vector<48x8xf32>
    %100 = arith.mulf %94, %99 : vector<48x8xf32>
    %101 = vector.extract_strided_slice %66 {offsets = [0, 16], sizes = [48, 8], strides = [1, 1]} : vector<48x96xf32> to vector<48x8xf32>
    %102 = vector.extract_strided_slice %66 {offsets = [0, 48], sizes = [48, 8], strides = [1, 1]} : vector<48x96xf32> to vector<48x8xf32>
    %103 = vector.extract_strided_slice %66 {offsets = [0, 80], sizes = [48, 8], strides = [1, 1]} : vector<48x96xf32> to vector<48x8xf32>
    %cst_36 = arith.constant dense<0.000000e+00> : vector<48x48xf32>
    %104 = tpu.matmul %101, %102, %cst_36 {dimension_numbers = #tpu.dot_dimension_numbers<[1], [1], [0], [0], [0, 0, 1, 0], [], []>} : vector<48x8xf32>, vector<48x8xf32>, vector<48x48xf32> -> vector<48x48xf32>
    %105 = arith.addf %104, %27 : vector<48x48xf32>
    %cst_37 = arith.constant dense<0xFF800000> : vector<48xf32>
    %106 = vector.multi_reduction <maximumf>, %105, %cst_37 [1] : vector<48x48xf32> to vector<48xf32>
    %107 = vector.shape_cast %106 : vector<48xf32> to vector<48x1xf32>
    %108 = vector.broadcast %107 : vector<48x1xf32> to vector<48x48xf32>
    %109 = arith.subf %105, %108 : vector<48x48xf32>
    %110 = math.exp %109 : vector<48x48xf32>
    %cst_38 = arith.constant dense<0.000000e+00> : vector<48x8xf32>
    %111 = tpu.matmul %110, %103, %cst_38 {dimension_numbers = #tpu.dot_dimension_numbers<[1], [0], [0], [1], [0, 0, 1, 1], [], []>} : vector<48x48xf32>, vector<48x8xf32>, vector<48x8xf32> -> vector<48x8xf32>
    %cst_39 = arith.constant dense<0.000000e+00> : vector<48xf32>
    %112 = vector.multi_reduction <add>, %110, %cst_39 [1] : vector<48x48xf32> to vector<48xf32>
    %113 = vector.shape_cast %112 : vector<48xf32> to vector<48x1xf32>
    %cst_40 = arith.constant 1.000000e+00 : f32
    %114 = vector.broadcast %cst_40 : f32 to vector<48x1xf32>
    %115 = arith.divf %114, %113 : vector<48x1xf32>
    %116 = vector.broadcast %115 : vector<48x1xf32> to vector<48x8xf32>
    %117 = arith.mulf %111, %116 : vector<48x8xf32>
    %118 = vector.extract_strided_slice %66 {offsets = [0, 24], sizes = [48, 8], strides = [1, 1]} : vector<48x96xf32> to vector<48x8xf32>
    %119 = vector.extract_strided_slice %66 {offsets = [0, 56], sizes = [48, 8], strides = [1, 1]} : vector<48x96xf32> to vector<48x8xf32>
    %120 = vector.extract_strided_slice %66 {offsets = [0, 88], sizes = [48, 8], strides = [1, 1]} : vector<48x96xf32> to vector<48x8xf32>
    %cst_41 = arith.constant dense<0.000000e+00> : vector<48x48xf32>
    %121 = tpu.matmul %118, %119, %cst_41 {dimension_numbers = #tpu.dot_dimension_numbers<[1], [1], [0], [0], [0, 0, 1, 0], [], []>} : vector<48x8xf32>, vector<48x8xf32>, vector<48x48xf32> -> vector<48x48xf32>
    %122 = arith.addf %121, %27 : vector<48x48xf32>
    %cst_42 = arith.constant dense<0xFF800000> : vector<48xf32>
    %123 = vector.multi_reduction <maximumf>, %122, %cst_42 [1] : vector<48x48xf32> to vector<48xf32>
    %124 = vector.shape_cast %123 : vector<48xf32> to vector<48x1xf32>
    %125 = vector.broadcast %124 : vector<48x1xf32> to vector<48x48xf32>
    %126 = arith.subf %122, %125 : vector<48x48xf32>
    %127 = math.exp %126 : vector<48x48xf32>
    %cst_43 = arith.constant dense<0.000000e+00> : vector<48x8xf32>
    %128 = tpu.matmul %127, %120, %cst_43 {dimension_numbers = #tpu.dot_dimension_numbers<[1], [0], [0], [1], [0, 0, 1, 1], [], []>} : vector<48x48xf32>, vector<48x8xf32>, vector<48x8xf32> -> vector<48x8xf32>
    %cst_44 = arith.constant dense<0.000000e+00> : vector<48xf32>
    %129 = vector.multi_reduction <add>, %127, %cst_44 [1] : vector<48x48xf32> to vector<48xf32>
    %130 = vector.shape_cast %129 : vector<48xf32> to vector<48x1xf32>
    %cst_45 = arith.constant 1.000000e+00 : f32
    %131 = vector.broadcast %cst_45 : f32 to vector<48x1xf32>
    %132 = arith.divf %131, %130 : vector<48x1xf32>
    %133 = vector.broadcast %132 : vector<48x1xf32> to vector<48x8xf32>
    %134 = arith.mulf %128, %133 : vector<48x8xf32>
    %135 = tpu.concatenate %83, %100, %117, %134 in 1 : vector<48x8xf32>, vector<48x8xf32>, vector<48x8xf32>, vector<48x8xf32> -> vector<48x32xf32>
    %c80 = arith.constant 80 : index
    %c0_46 = arith.constant 0 : index
    %136 = vector.load %arg2[%c80, %c0_46] : memref<336x96xf32, #tpu.memory_space<vmem>>, vector<32x32xf32>
    %cst_47 = arith.constant dense<0.000000e+00> : vector<48x32xf32>
    %137 = tpu.matmul %135, %136, %cst_47 {dimension_numbers = #tpu.dot_dimension_numbers<[1], [0], [0], [1], [0, 0, 1, 1], [], []>} : vector<48x32xf32>, vector<32x32xf32>, vector<48x32xf32> -> vector<48x32xf32>
    %138 = vector.broadcast %36 : vector<1x32xf32> to vector<48x32xf32>
    %139 = arith.addf %137, %138 : vector<48x32xf32>
    %140 = arith.addf %32, %139 : vector<48x32xf32>
    %cst_48 = arith.constant dense<0.000000e+00> : vector<48xf32>
    %141 = vector.multi_reduction <add>, %140, %cst_48 [1] : vector<48x32xf32> to vector<48xf32>
    %142 = vector.shape_cast %141 : vector<48xf32> to vector<48x1xf32>
    %cst_49 = arith.constant 3.200000e+01 : f32
    %143 = vector.broadcast %cst_49 : f32 to vector<48x1xf32>
    %144 = arith.divf %142, %143 : vector<48x1xf32>
    %145 = vector.broadcast %144 : vector<48x1xf32> to vector<48x32xf32>
    %146 = arith.subf %140, %145 : vector<48x32xf32>
    %147 = arith.mulf %146, %146 : vector<48x32xf32>
    %cst_50 = arith.constant dense<0.000000e+00> : vector<48xf32>
    %148 = vector.multi_reduction <add>, %147, %cst_50 [1] : vector<48x32xf32> to vector<48xf32>
    %149 = vector.shape_cast %148 : vector<48xf32> to vector<48x1xf32>
    %cst_51 = arith.constant 3.200000e+01 : f32
    %150 = vector.broadcast %cst_51 : f32 to vector<48x1xf32>
    %151 = arith.divf %149, %150 : vector<48x1xf32>
    %152 = vector.broadcast %144 : vector<48x1xf32> to vector<48x32xf32>
    %153 = arith.subf %140, %152 : vector<48x32xf32>
    %cst_52 = arith.constant 9.99999997E-7 : f32
    %154 = vector.broadcast %cst_52 : f32 to vector<48x1xf32>
    %155 = arith.addf %151, %154 : vector<48x1xf32>
    %156 = math.rsqrt %155 : vector<48x1xf32>
    %157 = vector.broadcast %156 : vector<48x1xf32> to vector<48x32xf32>
    %158 = arith.mulf %153, %157 : vector<48x32xf32>
    %159 = vector.broadcast %37 : vector<1x32xf32> to vector<48x32xf32>
    %160 = arith.mulf %158, %159 : vector<48x32xf32>
    %161 = vector.broadcast %38 : vector<1x32xf32> to vector<48x32xf32>
    %162 = arith.addf %160, %161 : vector<48x32xf32>
    %c80_53 = arith.constant 80 : index
    %c32 = arith.constant 32 : index
    %163 = vector.load %arg2[%c80_53, %c32] : memref<336x96xf32, #tpu.memory_space<vmem>>, vector<32x64xf32>
    %cst_54 = arith.constant dense<0.000000e+00> : vector<48x64xf32>
    %164 = tpu.matmul %162, %163, %cst_54 {dimension_numbers = #tpu.dot_dimension_numbers<[1], [0], [0], [1], [0, 0, 1, 1], [], []>} : vector<48x32xf32>, vector<32x64xf32>, vector<48x64xf32> -> vector<48x64xf32>
    %165 = vector.broadcast %39 : vector<1x64xf32> to vector<48x64xf32>
    %166 = arith.addf %164, %165 : vector<48x64xf32>
    %cst_55 = arith.constant 5.000000e-01 : f32
    %167 = vector.broadcast %cst_55 : f32 to vector<48x64xf32>
    %168 = arith.mulf %167, %166 : vector<48x64xf32>
    %cst_56 = arith.constant 0.707106769 : f32
    %169 = vector.broadcast %cst_56 : f32 to vector<48x64xf32>
    %170 = arith.mulf %166, %169 : vector<48x64xf32>
    %171 = math.absf %170 : vector<48x64xf32>
    %cst_57 = arith.constant 0.327591091 : f32
    %172 = vector.broadcast %cst_57 : f32 to vector<48x64xf32>
    %173 = arith.mulf %172, %171 : vector<48x64xf32>
    %cst_58 = arith.constant 1.000000e+00 : f32
    %174 = vector.broadcast %cst_58 : f32 to vector<48x64xf32>
    %175 = arith.addf %174, %173 : vector<48x64xf32>
    %cst_59 = arith.constant 1.000000e+00 : f32
    %176 = vector.broadcast %cst_59 : f32 to vector<48x64xf32>
    %177 = arith.divf %176, %175 : vector<48x64xf32>
    %cst_60 = arith.constant 1.06140542 : f32
    %178 = vector.broadcast %cst_60 : f32 to vector<48x64xf32>
    %179 = arith.mulf %178, %177 : vector<48x64xf32>
    %cst_61 = arith.constant -1.45315206 : f32
    %180 = vector.broadcast %cst_61 : f32 to vector<48x64xf32>
    %181 = arith.addf %179, %180 : vector<48x64xf32>
    %182 = arith.mulf %181, %177 : vector<48x64xf32>
    %cst_62 = arith.constant 1.42141378 : f32
    %183 = vector.broadcast %cst_62 : f32 to vector<48x64xf32>
    %184 = arith.addf %182, %183 : vector<48x64xf32>
    %185 = arith.mulf %184, %177 : vector<48x64xf32>
    %cst_63 = arith.constant -0.284496725 : f32
    %186 = vector.broadcast %cst_63 : f32 to vector<48x64xf32>
    %187 = arith.addf %185, %186 : vector<48x64xf32>
    %188 = arith.mulf %187, %177 : vector<48x64xf32>
    %cst_64 = arith.constant 0.254829586 : f32
    %189 = vector.broadcast %cst_64 : f32 to vector<48x64xf32>
    %190 = arith.addf %188, %189 : vector<48x64xf32>
    %191 = arith.mulf %190, %177 : vector<48x64xf32>
    %cst_65 = arith.constant 0.000000e+00 : f32
    %192 = vector.broadcast %cst_65 : f32 to vector<48x64xf32>
    %193 = arith.subf %192, %171 : vector<48x64xf32>
    %194 = arith.mulf %193, %171 : vector<48x64xf32>
    %195 = math.exp %194 : vector<48x64xf32>
    %196 = arith.mulf %191, %195 : vector<48x64xf32>
    %cst_66 = arith.constant 1.000000e+00 : f32
    %197 = vector.broadcast %cst_66 : f32 to vector<48x64xf32>
    %198 = arith.subf %197, %196 : vector<48x64xf32>
    %cst_67 = arith.constant 0.000000e+00 : f32
    %199 = vector.broadcast %cst_67 : f32 to vector<48x64xf32>
    %200 = arith.cmpf oge, %170, %199 : vector<48x64xf32>
    %cst_68 = arith.constant 0.000000e+00 : f32
    %201 = vector.broadcast %cst_68 : f32 to vector<48x64xf32>
    %202 = arith.subf %201, %198 : vector<48x64xf32>
    %203 = arith.select %200, %198, %202 : vector<48x64xi1>, vector<48x64xf32>
    %cst_69 = arith.constant 1.000000e+00 : f32
    %204 = vector.broadcast %cst_69 : f32 to vector<48x64xf32>
    %205 = arith.addf %204, %203 : vector<48x64xf32>
    %206 = arith.mulf %168, %205 : vector<48x64xf32>
    %c112 = arith.constant 112 : index
    %c0_70 = arith.constant 0 : index
    %207 = vector.load %arg2[%c112, %c0_70] : memref<336x96xf32, #tpu.memory_space<vmem>>, vector<64x32xf32>
    %cst_71 = arith.constant dense<0.000000e+00> : vector<48x32xf32>
    %208 = tpu.matmul %206, %207, %cst_71 {dimension_numbers = #tpu.dot_dimension_numbers<[1], [0], [0], [1], [0, 0, 1, 1], [], []>} : vector<48x64xf32>, vector<64x32xf32>, vector<48x32xf32> -> vector<48x32xf32>
    %209 = vector.broadcast %40 : vector<1x32xf32> to vector<48x32xf32>
    %210 = arith.addf %208, %209 : vector<48x32xf32>
    %211 = arith.addf %140, %210 : vector<48x32xf32>
    %c8 = arith.constant 8 : index
    %c0_72 = arith.constant 0 : index
    %212 = vector.load %arg3[%c8, %c0_72] : memref<19x96xf32, #tpu.memory_space<vmem>>, vector<1x32xf32>
    %c9 = arith.constant 9 : index
    %c0_73 = arith.constant 0 : index
    %213 = vector.load %arg3[%c9, %c0_73] : memref<19x96xf32, #tpu.memory_space<vmem>>, vector<1x32xf32>
    %c10 = arith.constant 10 : index
    %c0_74 = arith.constant 0 : index
    %214 = vector.load %arg3[%c10, %c0_74] : memref<19x96xf32, #tpu.memory_space<vmem>>, vector<1x96xf32>
    %c11 = arith.constant 11 : index
    %c0_75 = arith.constant 0 : index
    %215 = vector.load %arg3[%c11, %c0_75] : memref<19x96xf32, #tpu.memory_space<vmem>>, vector<1x32xf32>
    %c12 = arith.constant 12 : index
    %c0_76 = arith.constant 0 : index
    %216 = vector.load %arg3[%c12, %c0_76] : memref<19x96xf32, #tpu.memory_space<vmem>>, vector<1x32xf32>
    %c13 = arith.constant 13 : index
    %c0_77 = arith.constant 0 : index
    %217 = vector.load %arg3[%c13, %c0_77] : memref<19x96xf32, #tpu.memory_space<vmem>>, vector<1x32xf32>
    %c14 = arith.constant 14 : index
    %c0_78 = arith.constant 0 : index
    %218 = vector.load %arg3[%c14, %c0_78] : memref<19x96xf32, #tpu.memory_space<vmem>>, vector<1x64xf32>
    %c15 = arith.constant 15 : index
    %c0_79 = arith.constant 0 : index
    %219 = vector.load %arg3[%c15, %c0_79] : memref<19x96xf32, #tpu.memory_space<vmem>>, vector<1x32xf32>
    %cst_80 = arith.constant dense<0.000000e+00> : vector<48xf32>
    %220 = vector.multi_reduction <add>, %211, %cst_80 [1] : vector<48x32xf32> to vector<48xf32>
    %221 = vector.shape_cast %220 : vector<48xf32> to vector<48x1xf32>
    %cst_81 = arith.constant 3.200000e+01 : f32
    %222 = vector.broadcast %cst_81 : f32 to vector<48x1xf32>
    %223 = arith.divf %221, %222 : vector<48x1xf32>
    %224 = vector.broadcast %223 : vector<48x1xf32> to vector<48x32xf32>
    %225 = arith.subf %211, %224 : vector<48x32xf32>
    %226 = arith.mulf %225, %225 : vector<48x32xf32>
    %cst_82 = arith.constant dense<0.000000e+00> : vector<48xf32>
    %227 = vector.multi_reduction <add>, %226, %cst_82 [1] : vector<48x32xf32> to vector<48xf32>
    %228 = vector.shape_cast %227 : vector<48xf32> to vector<48x1xf32>
    %cst_83 = arith.constant 3.200000e+01 : f32
    %229 = vector.broadcast %cst_83 : f32 to vector<48x1xf32>
    %230 = arith.divf %228, %229 : vector<48x1xf32>
    %231 = vector.broadcast %223 : vector<48x1xf32> to vector<48x32xf32>
    %232 = arith.subf %211, %231 : vector<48x32xf32>
    %cst_84 = arith.constant 9.99999997E-7 : f32
    %233 = vector.broadcast %cst_84 : f32 to vector<48x1xf32>
    %234 = arith.addf %230, %233 : vector<48x1xf32>
    %235 = math.rsqrt %234 : vector<48x1xf32>
    %236 = vector.broadcast %235 : vector<48x1xf32> to vector<48x32xf32>
    %237 = arith.mulf %232, %236 : vector<48x32xf32>
    %238 = vector.broadcast %212 : vector<1x32xf32> to vector<48x32xf32>
    %239 = arith.mulf %237, %238 : vector<48x32xf32>
    %240 = vector.broadcast %213 : vector<1x32xf32> to vector<48x32xf32>
    %241 = arith.addf %239, %240 : vector<48x32xf32>
    %c176 = arith.constant 176 : index
    %c0_85 = arith.constant 0 : index
    %242 = vector.load %arg2[%c176, %c0_85] : memref<336x96xf32, #tpu.memory_space<vmem>>, vector<32x96xf32>
    %cst_86 = arith.constant dense<0.000000e+00> : vector<48x96xf32>
    %243 = tpu.matmul %241, %242, %cst_86 {dimension_numbers = #tpu.dot_dimension_numbers<[1], [0], [0], [1], [0, 0, 1, 1], [], []>} : vector<48x32xf32>, vector<32x96xf32>, vector<48x96xf32> -> vector<48x96xf32>
    %244 = vector.broadcast %214 : vector<1x96xf32> to vector<48x96xf32>
    %245 = arith.addf %243, %244 : vector<48x96xf32>
    %246 = vector.extract_strided_slice %245 {offsets = [0, 0], sizes = [48, 8], strides = [1, 1]} : vector<48x96xf32> to vector<48x8xf32>
    %247 = vector.extract_strided_slice %245 {offsets = [0, 32], sizes = [48, 8], strides = [1, 1]} : vector<48x96xf32> to vector<48x8xf32>
    %248 = vector.extract_strided_slice %245 {offsets = [0, 64], sizes = [48, 8], strides = [1, 1]} : vector<48x96xf32> to vector<48x8xf32>
    %cst_87 = arith.constant dense<0.000000e+00> : vector<48x48xf32>
    %249 = tpu.matmul %246, %247, %cst_87 {dimension_numbers = #tpu.dot_dimension_numbers<[1], [1], [0], [0], [0, 0, 1, 0], [], []>} : vector<48x8xf32>, vector<48x8xf32>, vector<48x48xf32> -> vector<48x48xf32>
    %250 = arith.addf %249, %27 : vector<48x48xf32>
    %cst_88 = arith.constant dense<0xFF800000> : vector<48xf32>
    %251 = vector.multi_reduction <maximumf>, %250, %cst_88 [1] : vector<48x48xf32> to vector<48xf32>
    %252 = vector.shape_cast %251 : vector<48xf32> to vector<48x1xf32>
    %253 = vector.broadcast %252 : vector<48x1xf32> to vector<48x48xf32>
    %254 = arith.subf %250, %253 : vector<48x48xf32>
    %255 = math.exp %254 : vector<48x48xf32>
    %cst_89 = arith.constant dense<0.000000e+00> : vector<48x8xf32>
    %256 = tpu.matmul %255, %248, %cst_89 {dimension_numbers = #tpu.dot_dimension_numbers<[1], [0], [0], [1], [0, 0, 1, 1], [], []>} : vector<48x48xf32>, vector<48x8xf32>, vector<48x8xf32> -> vector<48x8xf32>
    %cst_90 = arith.constant dense<0.000000e+00> : vector<48xf32>
    %257 = vector.multi_reduction <add>, %255, %cst_90 [1] : vector<48x48xf32> to vector<48xf32>
    %258 = vector.shape_cast %257 : vector<48xf32> to vector<48x1xf32>
    %cst_91 = arith.constant 1.000000e+00 : f32
    %259 = vector.broadcast %cst_91 : f32 to vector<48x1xf32>
    %260 = arith.divf %259, %258 : vector<48x1xf32>
    %261 = vector.broadcast %260 : vector<48x1xf32> to vector<48x8xf32>
    %262 = arith.mulf %256, %261 : vector<48x8xf32>
    %263 = vector.extract_strided_slice %245 {offsets = [0, 8], sizes = [48, 8], strides = [1, 1]} : vector<48x96xf32> to vector<48x8xf32>
    %264 = vector.extract_strided_slice %245 {offsets = [0, 40], sizes = [48, 8], strides = [1, 1]} : vector<48x96xf32> to vector<48x8xf32>
    %265 = vector.extract_strided_slice %245 {offsets = [0, 72], sizes = [48, 8], strides = [1, 1]} : vector<48x96xf32> to vector<48x8xf32>
    %cst_92 = arith.constant dense<0.000000e+00> : vector<48x48xf32>
    %266 = tpu.matmul %263, %264, %cst_92 {dimension_numbers = #tpu.dot_dimension_numbers<[1], [1], [0], [0], [0, 0, 1, 0], [], []>} : vector<48x8xf32>, vector<48x8xf32>, vector<48x48xf32> -> vector<48x48xf32>
    %267 = arith.addf %266, %27 : vector<48x48xf32>
    %cst_93 = arith.constant dense<0xFF800000> : vector<48xf32>
    %268 = vector.multi_reduction <maximumf>, %267, %cst_93 [1] : vector<48x48xf32> to vector<48xf32>
    %269 = vector.shape_cast %268 : vector<48xf32> to vector<48x1xf32>
    %270 = vector.broadcast %269 : vector<48x1xf32> to vector<48x48xf32>
    %271 = arith.subf %267, %270 : vector<48x48xf32>
    %272 = math.exp %271 : vector<48x48xf32>
    %cst_94 = arith.constant dense<0.000000e+00> : vector<48x8xf32>
    %273 = tpu.matmul %272, %265, %cst_94 {dimension_numbers = #tpu.dot_dimension_numbers<[1], [0], [0], [1], [0, 0, 1, 1], [], []>} : vector<48x48xf32>, vector<48x8xf32>, vector<48x8xf32> -> vector<48x8xf32>
    %cst_95 = arith.constant dense<0.000000e+00> : vector<48xf32>
    %274 = vector.multi_reduction <add>, %272, %cst_95 [1] : vector<48x48xf32> to vector<48xf32>
    %275 = vector.shape_cast %274 : vector<48xf32> to vector<48x1xf32>
    %cst_96 = arith.constant 1.000000e+00 : f32
    %276 = vector.broadcast %cst_96 : f32 to vector<48x1xf32>
    %277 = arith.divf %276, %275 : vector<48x1xf32>
    %278 = vector.broadcast %277 : vector<48x1xf32> to vector<48x8xf32>
    %279 = arith.mulf %273, %278 : vector<48x8xf32>
    %280 = vector.extract_strided_slice %245 {offsets = [0, 16], sizes = [48, 8], strides = [1, 1]} : vector<48x96xf32> to vector<48x8xf32>
    %281 = vector.extract_strided_slice %245 {offsets = [0, 48], sizes = [48, 8], strides = [1, 1]} : vector<48x96xf32> to vector<48x8xf32>
    %282 = vector.extract_strided_slice %245 {offsets = [0, 80], sizes = [48, 8], strides = [1, 1]} : vector<48x96xf32> to vector<48x8xf32>
    %cst_97 = arith.constant dense<0.000000e+00> : vector<48x48xf32>
    %283 = tpu.matmul %280, %281, %cst_97 {dimension_numbers = #tpu.dot_dimension_numbers<[1], [1], [0], [0], [0, 0, 1, 0], [], []>} : vector<48x8xf32>, vector<48x8xf32>, vector<48x48xf32> -> vector<48x48xf32>
    %284 = arith.addf %283, %27 : vector<48x48xf32>
    %cst_98 = arith.constant dense<0xFF800000> : vector<48xf32>
    %285 = vector.multi_reduction <maximumf>, %284, %cst_98 [1] : vector<48x48xf32> to vector<48xf32>
    %286 = vector.shape_cast %285 : vector<48xf32> to vector<48x1xf32>
    %287 = vector.broadcast %286 : vector<48x1xf32> to vector<48x48xf32>
    %288 = arith.subf %284, %287 : vector<48x48xf32>
    %289 = math.exp %288 : vector<48x48xf32>
    %cst_99 = arith.constant dense<0.000000e+00> : vector<48x8xf32>
    %290 = tpu.matmul %289, %282, %cst_99 {dimension_numbers = #tpu.dot_dimension_numbers<[1], [0], [0], [1], [0, 0, 1, 1], [], []>} : vector<48x48xf32>, vector<48x8xf32>, vector<48x8xf32> -> vector<48x8xf32>
    %cst_100 = arith.constant dense<0.000000e+00> : vector<48xf32>
    %291 = vector.multi_reduction <add>, %289, %cst_100 [1] : vector<48x48xf32> to vector<48xf32>
    %292 = vector.shape_cast %291 : vector<48xf32> to vector<48x1xf32>
    %cst_101 = arith.constant 1.000000e+00 : f32
    %293 = vector.broadcast %cst_101 : f32 to vector<48x1xf32>
    %294 = arith.divf %293, %292 : vector<48x1xf32>
    %295 = vector.broadcast %294 : vector<48x1xf32> to vector<48x8xf32>
    %296 = arith.mulf %290, %295 : vector<48x8xf32>
    %297 = vector.extract_strided_slice %245 {offsets = [0, 24], sizes = [48, 8], strides = [1, 1]} : vector<48x96xf32> to vector<48x8xf32>
    %298 = vector.extract_strided_slice %245 {offsets = [0, 56], sizes = [48, 8], strides = [1, 1]} : vector<48x96xf32> to vector<48x8xf32>
    %299 = vector.extract_strided_slice %245 {offsets = [0, 88], sizes = [48, 8], strides = [1, 1]} : vector<48x96xf32> to vector<48x8xf32>
    %cst_102 = arith.constant dense<0.000000e+00> : vector<48x48xf32>
    %300 = tpu.matmul %297, %298, %cst_102 {dimension_numbers = #tpu.dot_dimension_numbers<[1], [1], [0], [0], [0, 0, 1, 0], [], []>} : vector<48x8xf32>, vector<48x8xf32>, vector<48x48xf32> -> vector<48x48xf32>
    %301 = arith.addf %300, %27 : vector<48x48xf32>
    %cst_103 = arith.constant dense<0xFF800000> : vector<48xf32>
    %302 = vector.multi_reduction <maximumf>, %301, %cst_103 [1] : vector<48x48xf32> to vector<48xf32>
    %303 = vector.shape_cast %302 : vector<48xf32> to vector<48x1xf32>
    %304 = vector.broadcast %303 : vector<48x1xf32> to vector<48x48xf32>
    %305 = arith.subf %301, %304 : vector<48x48xf32>
    %306 = math.exp %305 : vector<48x48xf32>
    %cst_104 = arith.constant dense<0.000000e+00> : vector<48x8xf32>
    %307 = tpu.matmul %306, %299, %cst_104 {dimension_numbers = #tpu.dot_dimension_numbers<[1], [0], [0], [1], [0, 0, 1, 1], [], []>} : vector<48x48xf32>, vector<48x8xf32>, vector<48x8xf32> -> vector<48x8xf32>
    %cst_105 = arith.constant dense<0.000000e+00> : vector<48xf32>
    %308 = vector.multi_reduction <add>, %306, %cst_105 [1] : vector<48x48xf32> to vector<48xf32>
    %309 = vector.shape_cast %308 : vector<48xf32> to vector<48x1xf32>
    %cst_106 = arith.constant 1.000000e+00 : f32
    %310 = vector.broadcast %cst_106 : f32 to vector<48x1xf32>
    %311 = arith.divf %310, %309 : vector<48x1xf32>
    %312 = vector.broadcast %311 : vector<48x1xf32> to vector<48x8xf32>
    %313 = arith.mulf %307, %312 : vector<48x8xf32>
    %314 = tpu.concatenate %262, %279, %296, %313 in 1 : vector<48x8xf32>, vector<48x8xf32>, vector<48x8xf32>, vector<48x8xf32> -> vector<48x32xf32>
    %c208 = arith.constant 208 : index
    %c0_107 = arith.constant 0 : index
    %315 = vector.load %arg2[%c208, %c0_107] : memref<336x96xf32, #tpu.memory_space<vmem>>, vector<32x32xf32>
    %cst_108 = arith.constant dense<0.000000e+00> : vector<48x32xf32>
    %316 = tpu.matmul %314, %315, %cst_108 {dimension_numbers = #tpu.dot_dimension_numbers<[1], [0], [0], [1], [0, 0, 1, 1], [], []>} : vector<48x32xf32>, vector<32x32xf32>, vector<48x32xf32> -> vector<48x32xf32>
    %317 = vector.broadcast %215 : vector<1x32xf32> to vector<48x32xf32>
    %318 = arith.addf %316, %317 : vector<48x32xf32>
    %319 = arith.addf %211, %318 : vector<48x32xf32>
    %cst_109 = arith.constant dense<0.000000e+00> : vector<48xf32>
    %320 = vector.multi_reduction <add>, %319, %cst_109 [1] : vector<48x32xf32> to vector<48xf32>
    %321 = vector.shape_cast %320 : vector<48xf32> to vector<48x1xf32>
    %cst_110 = arith.constant 3.200000e+01 : f32
    %322 = vector.broadcast %cst_110 : f32 to vector<48x1xf32>
    %323 = arith.divf %321, %322 : vector<48x1xf32>
    %324 = vector.broadcast %323 : vector<48x1xf32> to vector<48x32xf32>
    %325 = arith.subf %319, %324 : vector<48x32xf32>
    %326 = arith.mulf %325, %325 : vector<48x32xf32>
    %cst_111 = arith.constant dense<0.000000e+00> : vector<48xf32>
    %327 = vector.multi_reduction <add>, %326, %cst_111 [1] : vector<48x32xf32> to vector<48xf32>
    %328 = vector.shape_cast %327 : vector<48xf32> to vector<48x1xf32>
    %cst_112 = arith.constant 3.200000e+01 : f32
    %329 = vector.broadcast %cst_112 : f32 to vector<48x1xf32>
    %330 = arith.divf %328, %329 : vector<48x1xf32>
    %331 = vector.broadcast %323 : vector<48x1xf32> to vector<48x32xf32>
    %332 = arith.subf %319, %331 : vector<48x32xf32>
    %cst_113 = arith.constant 9.99999997E-7 : f32
    %333 = vector.broadcast %cst_113 : f32 to vector<48x1xf32>
    %334 = arith.addf %330, %333 : vector<48x1xf32>
    %335 = math.rsqrt %334 : vector<48x1xf32>
    %336 = vector.broadcast %335 : vector<48x1xf32> to vector<48x32xf32>
    %337 = arith.mulf %332, %336 : vector<48x32xf32>
    %338 = vector.broadcast %216 : vector<1x32xf32> to vector<48x32xf32>
    %339 = arith.mulf %337, %338 : vector<48x32xf32>
    %340 = vector.broadcast %217 : vector<1x32xf32> to vector<48x32xf32>
    %341 = arith.addf %339, %340 : vector<48x32xf32>
    %c208_114 = arith.constant 208 : index
    %c32_115 = arith.constant 32 : index
    %342 = vector.load %arg2[%c208_114, %c32_115] : memref<336x96xf32, #tpu.memory_space<vmem>>, vector<32x64xf32>
    %cst_116 = arith.constant dense<0.000000e+00> : vector<48x64xf32>
    %343 = tpu.matmul %341, %342, %cst_116 {dimension_numbers = #tpu.dot_dimension_numbers<[1], [0], [0], [1], [0, 0, 1, 1], [], []>} : vector<48x32xf32>, vector<32x64xf32>, vector<48x64xf32> -> vector<48x64xf32>
    %344 = vector.broadcast %218 : vector<1x64xf32> to vector<48x64xf32>
    %345 = arith.addf %343, %344 : vector<48x64xf32>
    %cst_117 = arith.constant 5.000000e-01 : f32
    %346 = vector.broadcast %cst_117 : f32 to vector<48x64xf32>
    %347 = arith.mulf %346, %345 : vector<48x64xf32>
    %cst_118 = arith.constant 0.707106769 : f32
    %348 = vector.broadcast %cst_118 : f32 to vector<48x64xf32>
    %349 = arith.mulf %345, %348 : vector<48x64xf32>
    %350 = math.absf %349 : vector<48x64xf32>
    %cst_119 = arith.constant 0.327591091 : f32
    %351 = vector.broadcast %cst_119 : f32 to vector<48x64xf32>
    %352 = arith.mulf %351, %350 : vector<48x64xf32>
    %cst_120 = arith.constant 1.000000e+00 : f32
    %353 = vector.broadcast %cst_120 : f32 to vector<48x64xf32>
    %354 = arith.addf %353, %352 : vector<48x64xf32>
    %cst_121 = arith.constant 1.000000e+00 : f32
    %355 = vector.broadcast %cst_121 : f32 to vector<48x64xf32>
    %356 = arith.divf %355, %354 : vector<48x64xf32>
    %cst_122 = arith.constant 1.06140542 : f32
    %357 = vector.broadcast %cst_122 : f32 to vector<48x64xf32>
    %358 = arith.mulf %357, %356 : vector<48x64xf32>
    %cst_123 = arith.constant -1.45315206 : f32
    %359 = vector.broadcast %cst_123 : f32 to vector<48x64xf32>
    %360 = arith.addf %358, %359 : vector<48x64xf32>
    %361 = arith.mulf %360, %356 : vector<48x64xf32>
    %cst_124 = arith.constant 1.42141378 : f32
    %362 = vector.broadcast %cst_124 : f32 to vector<48x64xf32>
    %363 = arith.addf %361, %362 : vector<48x64xf32>
    %364 = arith.mulf %363, %356 : vector<48x64xf32>
    %cst_125 = arith.constant -0.284496725 : f32
    %365 = vector.broadcast %cst_125 : f32 to vector<48x64xf32>
    %366 = arith.addf %364, %365 : vector<48x64xf32>
    %367 = arith.mulf %366, %356 : vector<48x64xf32>
    %cst_126 = arith.constant 0.254829586 : f32
    %368 = vector.broadcast %cst_126 : f32 to vector<48x64xf32>
    %369 = arith.addf %367, %368 : vector<48x64xf32>
    %370 = arith.mulf %369, %356 : vector<48x64xf32>
    %cst_127 = arith.constant 0.000000e+00 : f32
    %371 = vector.broadcast %cst_127 : f32 to vector<48x64xf32>
    %372 = arith.subf %371, %350 : vector<48x64xf32>
    %373 = arith.mulf %372, %350 : vector<48x64xf32>
    %374 = math.exp %373 : vector<48x64xf32>
    %375 = arith.mulf %370, %374 : vector<48x64xf32>
    %cst_128 = arith.constant 1.000000e+00 : f32
    %376 = vector.broadcast %cst_128 : f32 to vector<48x64xf32>
    %377 = arith.subf %376, %375 : vector<48x64xf32>
    %cst_129 = arith.constant 0.000000e+00 : f32
    %378 = vector.broadcast %cst_129 : f32 to vector<48x64xf32>
    %379 = arith.cmpf oge, %349, %378 : vector<48x64xf32>
    %cst_130 = arith.constant 0.000000e+00 : f32
    %380 = vector.broadcast %cst_130 : f32 to vector<48x64xf32>
    %381 = arith.subf %380, %377 : vector<48x64xf32>
    %382 = arith.select %379, %377, %381 : vector<48x64xi1>, vector<48x64xf32>
    %cst_131 = arith.constant 1.000000e+00 : f32
    %383 = vector.broadcast %cst_131 : f32 to vector<48x64xf32>
    %384 = arith.addf %383, %382 : vector<48x64xf32>
    %385 = arith.mulf %347, %384 : vector<48x64xf32>
    %c240 = arith.constant 240 : index
    %c0_132 = arith.constant 0 : index
    %386 = vector.load %arg2[%c240, %c0_132] : memref<336x96xf32, #tpu.memory_space<vmem>>, vector<64x32xf32>
    %cst_133 = arith.constant dense<0.000000e+00> : vector<48x32xf32>
    %387 = tpu.matmul %385, %386, %cst_133 {dimension_numbers = #tpu.dot_dimension_numbers<[1], [0], [0], [1], [0, 0, 1, 1], [], []>} : vector<48x64xf32>, vector<64x32xf32>, vector<48x32xf32> -> vector<48x32xf32>
    %388 = vector.broadcast %219 : vector<1x32xf32> to vector<48x32xf32>
    %389 = arith.addf %387, %388 : vector<48x32xf32>
    %390 = arith.addf %319, %389 : vector<48x32xf32>
    %391 = vector.extract_strided_slice %390 {offsets = [0, 0], sizes = [1, 32], strides = [1, 1]} : vector<48x32xf32> to vector<1x32xf32>
    %392 = vector.extract_strided_slice %390 {offsets = [24, 0], sizes = [1, 32], strides = [1, 1]} : vector<48x32xf32> to vector<1x32xf32>
    %393 = tpu.concatenate %391, %392 in 0 : vector<1x32xf32>, vector<1x32xf32> -> vector<2x32xf32>
    %c16 = arith.constant 16 : index
    %c0_134 = arith.constant 0 : index
    %394 = vector.load %arg3[%c16, %c0_134] : memref<19x96xf32, #tpu.memory_space<vmem>>, vector<1x32xf32>
    %c17 = arith.constant 17 : index
    %c0_135 = arith.constant 0 : index
    %395 = vector.load %arg3[%c17, %c0_135] : memref<19x96xf32, #tpu.memory_space<vmem>>, vector<1x32xf32>
    %cst_136 = arith.constant dense<0.000000e+00> : vector<2xf32>
    %396 = vector.multi_reduction <add>, %393, %cst_136 [1] : vector<2x32xf32> to vector<2xf32>
    %397 = vector.shape_cast %396 : vector<2xf32> to vector<2x1xf32>
    %cst_137 = arith.constant 3.200000e+01 : f32
    %398 = vector.broadcast %cst_137 : f32 to vector<2x1xf32>
    %399 = arith.divf %397, %398 : vector<2x1xf32>
    %400 = vector.broadcast %399 : vector<2x1xf32> to vector<2x32xf32>
    %401 = arith.subf %393, %400 : vector<2x32xf32>
    %402 = arith.mulf %401, %401 : vector<2x32xf32>
    %cst_138 = arith.constant dense<0.000000e+00> : vector<2xf32>
    %403 = vector.multi_reduction <add>, %402, %cst_138 [1] : vector<2x32xf32> to vector<2xf32>
    %404 = vector.shape_cast %403 : vector<2xf32> to vector<2x1xf32>
    %cst_139 = arith.constant 3.200000e+01 : f32
    %405 = vector.broadcast %cst_139 : f32 to vector<2x1xf32>
    %406 = arith.divf %404, %405 : vector<2x1xf32>
    %407 = vector.broadcast %399 : vector<2x1xf32> to vector<2x32xf32>
    %408 = arith.subf %393, %407 : vector<2x32xf32>
    %cst_140 = arith.constant 9.99999997E-7 : f32
    %409 = vector.broadcast %cst_140 : f32 to vector<2x1xf32>
    %410 = arith.addf %406, %409 : vector<2x1xf32>
    %411 = math.rsqrt %410 : vector<2x1xf32>
    %412 = vector.broadcast %411 : vector<2x1xf32> to vector<2x32xf32>
    %413 = arith.mulf %408, %412 : vector<2x32xf32>
    %414 = vector.broadcast %394 : vector<1x32xf32> to vector<2x32xf32>
    %415 = arith.mulf %413, %414 : vector<2x32xf32>
    %416 = vector.broadcast %395 : vector<1x32xf32> to vector<2x32xf32>
    %417 = arith.addf %415, %416 : vector<2x32xf32>
    %c304 = arith.constant 304 : index
    %c0_141 = arith.constant 0 : index
    %418 = vector.load %arg2[%c304, %c0_141] : memref<336x96xf32, #tpu.memory_space<vmem>>, vector<32x10xf32>
    %cst_142 = arith.constant dense<0.000000e+00> : vector<2x10xf32>
    %419 = tpu.matmul %417, %418, %cst_142 {dimension_numbers = #tpu.dot_dimension_numbers<[1], [0], [0], [1], [0, 0, 1, 1], [], []>} : vector<2x32xf32>, vector<32x10xf32>, vector<2x10xf32> -> vector<2x10xf32>
    %c18 = arith.constant 18 : index
    %c0_143 = arith.constant 0 : index
    %420 = vector.load %arg3[%c18, %c0_143] : memref<19x96xf32, #tpu.memory_space<vmem>>, vector<1x10xf32>
    %421 = vector.broadcast %420 : vector<1x10xf32> to vector<2x10xf32>
    %422 = arith.addf %419, %421 : vector<2x10xf32>
    %c0_144 = arith.constant 0 : index
    %c0_145 = arith.constant 0 : index
    %423 = vector.load %arg4[%c0_144, %c0_145] : memref<2x10xf32, #tpu.memory_space<vmem>>, vector<2x10xf32>
    tpu.vector_store %arg4[%c0_144, %c0_145], %422 {strides = array<i32>} : memref<2x10xf32, #tpu.memory_space<vmem>>, vector<2x10xf32>,
    return
  }
}

</mosaic_0001>

<llo_original>
// kernel: tpu_custom_call.1
$region0: #{tpu_custom_call.1}
  #allocation0 [shape = 'u32[]', space=smem, size = 0x4, offset = 0x4, fixed_abs, tag = 'smem constant byte address 0x4 - core index']
  #allocation1 [shape = 'u32[144,128]{1,0:T(1,128)}', space=vmem, size = 0x12000, scoped, tag = 'internal scratch']
  %s0 = inlined_call_operand.vmem [shape: f32[48,48], index: 0, kind: input, shape index: {}]
  %s1 = inlined_call_operand.vmem [shape: f32[48,32], index: 1, kind: input, shape index: {}]
  %s2 = inlined_call_operand.vmem [shape: f32[336,96], index: 2, kind: input, shape index: {}]
  %s3 = inlined_call_operand.vmem [shape: f32[19,96], index: 3, kind: input, shape index: {}]
  %s4 = inlined_call_operand.hbm [shape: f32[2,10], index: 4, kind: output, shape index: {}]
  %s5 = sld [smem:[#allocation0]]
  $region26: #{tpu_custom_call.1} parent=0
    _
  %s7 = ssub.s32 1, %s5
  %s8 = scalar_select 0, %s7, %s5
  $region1: #{tpu_custom_call.1} parent=0
    #allocation2 [shape = 'u8[1024]{0}', space=vmem, size = 0x400, scoped, tag = 'output window, operand 0, single buffered']
    #allocation3 [shape = 's32[1]{0}', space=sflag, size = 0x4, scoped, tag = 'scoped memory for tpu_custom_call.1']
    %9 = vsyncpa [#allocation3], 0
    // Predicated region
    $region2: #{tpu_custom_call.1} parent=1 // pred_check
      _
    $region3: #{tpu_custom_call.1} parent=1 // pred_check_branch
      %11 = sbr.rel (0) target = $region5
    $region4: #{tpu_custom_call.1} parent=1 // pred_region
      _
    $region5: #{tpu_custom_call.1} parent=1 // pred_fallthru
      _
    // Predicated region
    $region6: #{tpu_custom_call.1} parent=1 // pred_check
      _
    $region7: #{tpu_custom_call.1} parent=1 // pred_check_branch
      %13 = sbr.rel (0) target = $region9
    $region8: #{tpu_custom_call.1} parent=1 // pred_region
      _
    $region9: #{tpu_custom_call.1} parent=1 // pred_fallthru
      _
    // Predicated region
    $region10: #{tpu_custom_call.1} parent=1 // pred_check
      _
    $region11: #{tpu_custom_call.1} parent=1 // pred_check_branch
      %15 = sbr.rel (0) target = $region13
    $region12: #{tpu_custom_call.1} parent=1 // pred_region
      _
    $region13: #{tpu_custom_call.1} parent=1 // pred_fallthru
      _
    // Predicated region
    $region14: #{tpu_custom_call.1} parent=1 // pred_check
      _
    $region15: #{tpu_custom_call.1} parent=1 // pred_check_branch
      %17 = sbr.rel (0) target = $region17
    $region16: #{tpu_custom_call.1} parent=1 // pred_region
      _
    $region17: #{tpu_custom_call.1} parent=1 // pred_fallthru
      _
    %v18 = vlaneseq
    %v19 = vshrl.u32 %v18, 7
    %v20 = vadd.s32 %v19, 8
    %v21 = vadd.s32 %v19, 16
    %v22 = vadd.s32 %v19, 24
    %v23 = vadd.s32 %v19, 32
    %v24 = vadd.s32 %v19, 40
    %v25 = vlaneseq
    %v26 = vand.u32 %v25, 127
    %vm27 = vcmp.ge.s32.totalorder %v19, 0
    %vm28 = vcmp.ge.s32.totalorder %v20, 0
    %vm29 = vcmp.ge.s32.totalorder %v21, 0
    %vm30 = vcmp.ge.s32.totalorder %v22, 0
    %vm31 = vcmp.ge.s32.totalorder %v23, 0
    %vm32 = vcmp.ge.s32.totalorder %v24, 0
    %vm33 = vcmp.lt.s32.totalorder %v19, 24
    %vm34 = vcmp.lt.s32.totalorder %v20, 24
    %vm35 = vcmp.lt.s32.totalorder %v21, 24
    %vm36 = vcmp.lt.s32.totalorder %v22, 24
    %vm37 = vcmp.lt.s32.totalorder %v23, 24
    %vm38 = vcmp.lt.s32.totalorder %v24, 24
    %vm39 = vmand %vm27, %vm33
    %vm40 = vmand %vm28, %vm34
    %vm41 = vmand %vm29, %vm35
    %vm42 = vmand %vm30, %vm36
    %vm43 = vmand %vm31, %vm37
    %vm44 = vmand %vm32, %vm38
    %vm45 = vcmp.ge.s32.totalorder %v26, 0
    %vm46 = vmand %vm39, %vm45
    %vm47 = vmand %vm40, %vm45
    %vm48 = vmand %vm41, %vm45
    %vm49 = vmand %vm42, %vm45
    %vm50 = vmand %vm43, %vm45
    %vm51 = vmand %vm44, %vm45
    %vm52 = vcmp.lt.s32.totalorder %v26, 17
    %vm53 = vmand %vm46, %vm52
    %vm54 = vmand %vm47, %vm52
    %vm55 = vmand %vm48, %vm52
    %vm56 = vmand %vm49, %vm52
    %vm57 = vmand %vm50, %vm52
    %vm58 = vmand %vm51, %vm52
    %vm59 = vcmp.ge.s32.totalorder %v19, 24
    %vm60 = vcmp.ge.s32.totalorder %v20, 24
    %vm61 = vcmp.ge.s32.totalorder %v21, 24
    %vm62 = vcmp.ge.s32.totalorder %v22, 24
    %vm63 = vcmp.ge.s32.totalorder %v23, 24
    %vm64 = vcmp.ge.s32.totalorder %v24, 24
    %vm65 = vcmp.lt.s32.totalorder %v19, 48
    %vm66 = vcmp.lt.s32.totalorder %v20, 48
    %vm67 = vcmp.lt.s32.totalorder %v21, 48
    %vm68 = vcmp.lt.s32.totalorder %v22, 48
    %vm69 = vcmp.lt.s32.totalorder %v23, 48
    %vm70 = vcmp.lt.s32.totalorder %v24, 48
    %vm71 = vmand %vm59, %vm65
    %vm72 = vmand %vm60, %vm66
    %vm73 = vmand %vm61, %vm67
    %vm74 = vmand %vm62, %vm68
    %vm75 = vmand %vm63, %vm69
    %vm76 = vmand %vm64, %vm70
    %vm77 = vcmp.ge.s32.totalorder %v26, 24
    %vm78 = vmand %vm71, %vm77
    %vm79 = vmand %vm72, %vm77
    %vm80 = vmand %vm73, %vm77
    %vm81 = vmand %vm74, %vm77
    %vm82 = vmand %vm75, %vm77
    %vm83 = vmand %vm76, %vm77
    %vm84 = vcmp.lt.s32.totalorder %v26, 41
    %vm85 = vmand %vm78, %vm84
    %vm86 = vmand %vm79, %vm84
    %vm87 = vmand %vm80, %vm84
    %vm88 = vmand %vm81, %vm84
    %vm89 = vmand %vm82, %vm84
    %vm90 = vmand %vm83, %vm84
    %vm91 = vmor %vm53, %vm85
    %vm92 = vmor %vm54, %vm86
    %vm93 = vmor %vm55, %vm87
    %vm94 = vmor %vm56, %vm88
    %vm95 = vmor %vm57, %vm89
    %vm96 = vmor %vm58, %vm90
    %v97 = vsel %vm91, 0.0, -1e+09
    %v98 = vsel %vm92, 0.0, -1e+09
    %v99 = vsel %vm93, 0.0, -1e+09
    %v100 = vsel %vm94, 0.0, -1e+09
    %v101 = vsel %vm95, 0.0, -1e+09
    %v102 = vsel %vm96, 0.0, -1e+09
    %v103 = vld [vmem:[%s0] sm:$0xff]
    %v104 = vld [vmem:[%s0 + $0x8] sm:$0xff]
    %v105 = vld [vmem:[%s0 + $0x10] sm:$0xff]
    %v106 = vld [vmem:[%s0 + $0x18] sm:$0xff]
    %v107 = vld [vmem:[%s0 + $0x20] sm:$0xff]
    %v108 = vld [vmem:[%s0 + $0x28] sm:$0xff]
    %v109 = vld [vmem:[%s2] sm:$0xff]
    %v110 = vld [vmem:[%s2 + $0x8] sm:$0xff]
    %v111 = vld [vmem:[%s2 + $0x10] sm:$0xff]
    %v112 = vld [vmem:[%s2 + $0x18] sm:$0xff]
    %v113 = vld [vmem:[%s2 + $0x20] sm:$0xff]
    %v114 = vld [vmem:[%s2 + $0x28] sm:$0xff]
    %v115 = vld [vmem:[%s1] sm:$0xff]
    %v116 = vld [vmem:[%s1 + $0x8] sm:$0xff]
    %v117 = vld [vmem:[%s1 + $0x10] sm:$0xff]
    %v118 = vld [vmem:[%s1 + $0x18] sm:$0xff]
    %v119 = vld [vmem:[%s1 + $0x20] sm:$0xff]
    %v120 = vld [vmem:[%s1 + $0x28] sm:$0xff]
    %vm121 = vcmask 392192
    %v123 = vsel %vm121, %v103, 0
    %v126 = vsel %vm121, %v104, 0
    %v129 = vsel %vm121, %v105, 0
    %v132 = vsel %vm121, %v106, 0
    %v135 = vsel %vm121, %v107, 0
    %v138 = vsel %vm121, %v108, 0
    %140 = vmatprep.subr.mxu0 0.0
    %141 = vmatpush1.msra.mxu0 %v109
    %142 = vmatprep.subr.mxu0 0.0
    %143 = vmatpush1.msra.mxu0 %v110
    %144 = vmatprep.subr.mxu0 0.0
    %145 = vmatpush1.msra.mxu0 %v111
    %146 = vmatprep.subr.mxu0 0.0
    %147 = vmatpush1.msra.mxu0 %v112
    %148 = vmatprep.subr.mxu0 0.0
    %149 = vmatpush1.msra.mxu0 %v113
    %150 = vmatprep.subr.mxu0 0.0
    %151 = vmatpush1.msra.mxu0 %v114
    %152 = vmatprep.subr.mxu0 0.0
    %153 = vmatpush1.msra.mxu0 0.0
    %154 = vmatprep.subr.mxu0 0.0
    %155 = vmatpush1.msra.mxu0 0.0
    %156 = vmatprep.subr.mxu0 0.0
    %157 = vmatpush1.msra.mxu0 0.0
    %158 = vmatprep.subr.mxu0 0.0
    %159 = vmatpush1.msra.mxu0 0.0
    %160 = vmatprep.subr.mxu0 0.0
    %161 = vmatpush1.msra.mxu0 0.0
    %162 = vmatprep.subr.mxu0 0.0
    %163 = vmatpush1.msra.mxu0 0.0
    %164 = vmatprep.subr.mxu0 0.0
    %165 = vmatpush1.msra.mxu0 0.0
    %166 = vmatprep.subr.mxu0 0.0
    %167 = vmatpush1.msra.mxu0 0.0
    %168 = vmatprep.subr.mxu0 0.0
    %169 = vmatpush1.msra.mxu0 0.0
    %170 = vmatprep.subr.mxu0 0.0
    %171 = vmatpush1.msra.mxu0 0.0
    %172 = vmatprep.subr.mxu0 0.0
    %173 = vmatpush1.msra.mxu0 0.0
    %174 = vmatprep.subr.mxu0 0.0
    %175 = vmatpush1.msra.mxu0 0.0
    %176 = vmatprep.subr.mxu0 0.0
    %177 = vmatpush1.msra.mxu0 0.0
    %178 = vmatprep.subr.mxu0 0.0
    %179 = vmatpush1.msra.mxu0 0.0
    %180 = vmatprep.subr.mxu0 0.0
    %181 = vmatpush1.msra.mxu0 0.0
    %182 = vmatprep.subr.mxu0 0.0
    %183 = vmatpush1.msra.mxu0 0.0
    %184 = vmatprep.subr.mxu0 0.0
    %185 = vmatpush1.msra.mxu0 0.0
    %186 = vmatprep.subr.mxu0 0.0
    %187 = vmatpush1.msra.mxu0 0.0
    %188 = vmatprep.subr.mxu0 0.0
    %189 = vmatpush1.msra.mxu0 0.0
    %190 = vmatprep.subr.mxu0 0.0
    %191 = vmatpush1.msra.mxu0 0.0
    %192 = vmatprep.subr.mxu0 0.0
    %193 = vmatpush1.msra.mxu0 0.0
    %194 = vmatprep.subr.mxu0 0.0
    %195 = vmatpush1.msra.mxu0 0.0
    %196 = vmatprep.subr.mxu0 0.0
    %197 = vmatpush1.msra.mxu0 0.0
    %198 = vmatprep.subr.mxu0 0.0
    %199 = vmatpush1.msra.mxu0 0.0
    %200 = vmatprep.subr.mxu0 0.0
    %201 = vmatpush1.msra.mxu0 0.0
    %202 = vmatprep.subr.mxu0 0.0
    %203 = vmatpush1.msra.mxu0 0.0
    %204 = vmatprep.mubr.f32.mxu0 0.0
    %205 = vmatmul.mubr.f32.gmra.mrb[0].mxu0 %v123
    %v206 = vpop.f32.mrb[0].mxu0
    %v207 = vadd.f32 %v115, %v206
    %v208 = vpop.f32.mrb[0].mxu0
    %209 = vmatprep.mubr.f32.mxu0 0.0
    %210 = vmatmul.mubr.f32.gmra.mrb[0].mxu0 %v126
    %v211 = vpop.f32.mrb[0].mxu0
    %v212 = vadd.f32 %v116, %v211
    %v213 = vpop.f32.mrb[0].mxu0
    %214 = vmatprep.mubr.f32.mxu0 0.0
    %215 = vmatmul.mubr.f32.gmra.mrb[0].mxu0 %v129
    %v216 = vpop.f32.mrb[0].mxu0
    %v217 = vadd.f32 %v117, %v216
    %v218 = vpop.f32.mrb[0].mxu0
    %219 = vmatprep.mubr.f32.mxu0 0.0
    %220 = vmatmul.mubr.f32.gmra.mrb[0].mxu0 %v132
    %v221 = vpop.f32.mrb[0].mxu0
    %v222 = vadd.f32 %v118, %v221
    %v223 = vpop.f32.mrb[0].mxu0
    %224 = vmatprep.mubr.f32.mxu0 0.0
    %225 = vmatmul.mubr.f32.gmra.mrb[0].mxu0 %v135
    %v226 = vpop.f32.mrb[0].mxu0
    %v227 = vadd.f32 %v119, %v226
    %v228 = vpop.f32.mrb[0].mxu0
    %229 = vmatprep.mubr.f32.mxu0 0.0
    %230 = vmatmul.mubr.f32.gmra.mrb[0].mxu0 %v138
    %v231 = vpop.f32.mrb[0].mxu0
    %v232 = vadd.f32 %v120, %v231
    %v233 = vpop.f32.mrb[0].mxu0
    %234 = vdwg.mxu0
    %v235 = vld [vmem:[%s3] sm:$0x1]
    %v236 = vld [vmem:[%s3 + $0x1] sm:$0x1]
    %v237 = vld [vmem:[%s3 + $0x2] sm:$0x1]
    %v238 = vld [vmem:[%s3 + $0x3] sm:$0x1]
    %v239 = vld [vmem:[%s3 + $0x4] sm:$0x1]
    %v240 = vld [vmem:[%s3 + $0x5] sm:$0x1]
    %v241 = vld [vmem:[%s3 + $0x6] sm:$0x1]
    %v242 = vld [vmem:[%s3 + $0x7] sm:$0x1]
    %vm243 = vcmask 261120
    %v244 = vsel %vm243, %v207, 0.0
    %245 = vadd.xlane.f32.xlu0 %v244
    %v246 = vpop.xlane.xlu0 %245
    %v247 = vsel %vm243, %v212, 0.0
    %248 = vadd.xlane.f32.xlu0 %v247
    %v249 = vpop.xlane.xlu0 %248
    %v250 = vsel %vm243, %v217, 0.0
    %251 = vadd.xlane.f32.xlu0 %v250
    %v252 = vpop.xlane.xlu0 %251
    %v253 = vsel %vm243, %v222, 0.0
    %254 = vadd.xlane.f32.xlu0 %v253
    %v255 = vpop.xlane.xlu0 %254
    %v256 = vsel %vm243, %v227, 0.0
    %257 = vadd.xlane.f32.xlu0 %v256
    %v258 = vpop.xlane.xlu0 %257
    %v259 = vsel %vm243, %v232, 0.0
    %260 = vadd.xlane.f32.xlu0 %v259
    %v261 = vpop.xlane.xlu0 %260
    %v262 = vrcp.pop 32.0
    %v263 = vmul.f32 %v246, %v262
    %v264 = vmul.f32 %v249, %v262
    %v265 = vmul.f32 %v252, %v262
    %v266 = vmul.f32 %v255, %v262
    %v267 = vmul.f32 %v258, %v262
    %v268 = vmul.f32 %v261, %v262
    %v269 = vsub.f32 %v207, %v263
    %v270 = vsub.f32 %v212, %v264
    %v271 = vsub.f32 %v217, %v265
    %v272 = vsub.f32 %v222, %v266
    %v273 = vsub.f32 %v227, %v267
    %v274 = vsub.f32 %v232, %v268
    %v275 = vmul.f32 %v269, %v269
    %v276 = vmul.f32 %v270, %v270
    %v277 = vmul.f32 %v271, %v271
    %v278 = vmul.f32 %v272, %v272
    %v279 = vmul.f32 %v273, %v273
    %v280 = vmul.f32 %v274, %v274
    %v281 = vsel %vm243, %v275, 0.0
    %282 = vadd.xlane.f32.xlu0 %v281
    %v283 = vpop.xlane.xlu0 %282
    %v284 = vsel %vm243, %v276, 0.0
    %285 = vadd.xlane.f32.xlu0 %v284
    %v286 = vpop.xlane.xlu0 %285
    %v287 = vsel %vm243, %v277, 0.0
    %288 = vadd.xlane.f32.xlu0 %v287
    %v289 = vpop.xlane.xlu0 %288
    %v290 = vsel %vm243, %v278, 0.0
    %291 = vadd.xlane.f32.xlu0 %v290
    %v292 = vpop.xlane.xlu0 %291
    %v293 = vsel %vm243, %v279, 0.0
    %294 = vadd.xlane.f32.xlu0 %v293
    %v295 = vpop.xlane.xlu0 %294
    %v296 = vsel %vm243, %v280, 0.0
    %297 = vadd.xlane.f32.xlu0 %v296
    %v298 = vpop.xlane.xlu0 %297
    %v299 = vmul.f32 %v283, %v262
    %v300 = vmul.f32 %v286, %v262
    %v301 = vmul.f32 %v289, %v262
    %v302 = vmul.f32 %v292, %v262
    %v303 = vmul.f32 %v295, %v262
    %v304 = vmul.f32 %v298, %v262
    %v305 = vadd.f32 %v299, 1e-06
    %v306 = vadd.f32 %v300, 1e-06
    %v307 = vadd.f32 %v301, 1e-06
    %v308 = vadd.f32 %v302, 1e-06
    %v309 = vadd.f32 %v303, 1e-06
    %v310 = vadd.f32 %v304, 1e-06
    %v311 = vrsqrt.pop %v305
    %v312 = vrsqrt.pop %v306
    %v313 = vrsqrt.pop %v307
    %v314 = vrsqrt.pop %v308
    %v315 = vrsqrt.pop %v309
    %v316 = vrsqrt.pop %v310
    %v317 = vmul.f32 %v269, %v311
    %v318 = vmul.f32 %v270, %v312
    %v319 = vmul.f32 %v271, %v313
    %v320 = vmul.f32 %v272, %v314
    %v321 = vmul.f32 %v273, %v315
    %v322 = vmul.f32 %v274, %v316
    %v323 = vlaneseq
    %v324 = vshrl.u32 %v323, 7
    %v325 = vsub.s32 0, %v324
    %v326 = vrot.slane %v235, %v325
    %v327 = vmul.f32 %v317, %v326
    %v328 = vmul.f32 %v318, %v326
    %v329 = vmul.f32 %v319, %v326
    %v330 = vmul.f32 %v320, %v326
    %v331 = vmul.f32 %v321, %v326
    %v332 = vmul.f32 %v322, %v326
    %v333 = vlaneseq
    %v334 = vshrl.u32 %v333, 7
    %v335 = vsub.s32 0, %v334
    %v336 = vrot.slane %v236, %v335
    %v337 = vadd.f32 %v327, %v336
    %v338 = vadd.f32 %v328, %v336
    %v339 = vadd.f32 %v329, %v336
    %v340 = vadd.f32 %v330, %v336
    %v341 = vadd.f32 %v331, %v336
    %v342 = vadd.f32 %v332, %v336
    %v343 = vld [vmem:[%s2 + $0x30] sm:$0xff]
    %v344 = vld [vmem:[%s2 + $0x38] sm:$0xff]
    %v345 = vld [vmem:[%s2 + $0x40] sm:$0xff]
    %v346 = vld [vmem:[%s2 + $0x48] sm:$0xff]
    %v347 = vlaneseq
    %v348 = vshrl.u32 %v347, 7
    %v349 = vsub.s32 0, %v348
    %v350 = vrot.slane %v237, %v349
    %v352 = vsel %vm243, %v337, 0
    %v355 = vsel %vm243, %v338, 0
    %v358 = vsel %vm243, %v339, 0
    %v361 = vsel %vm243, %v340, 0
    %v364 = vsel %vm243, %v341, 0
    %v367 = vsel %vm243, %v342, 0
    %369 = vmatprep.subr.mxu0 0.0
    %370 = vmatpush1.msra.mxu0 %v343
    %371 = vmatprep.subr.mxu0 0.0
    %372 = vmatpush1.msra.mxu0 %v344
    %373 = vmatprep.subr.mxu0 0.0
    %374 = vmatpush1.msra.mxu0 %v345
    %375 = vmatprep.subr.mxu0 0.0
    %376 = vmatpush1.msra.mxu0 %v346
    %377 = vmatprep.subr.mxu0 0.0
    %378 = vmatpush1.msra.mxu0 0.0
    %379 = vmatprep.subr.mxu0 0.0
    %380 = vmatpush1.msra.mxu0 0.0
    %381 = vmatprep.subr.mxu0 0.0
    %382 = vmatpush1.msra.mxu0 0.0
    %383 = vmatprep.subr.mxu0 0.0
    %384 = vmatpush1.msra.mxu0 0.0
    %385 = vmatprep.subr.mxu0 0.0
    %386 = vmatpush1.msra.mxu0 0.0
    %387 = vmatprep.subr.mxu0 0.0
    %388 = vmatpush1.msra.mxu0 0.0
    %389 = vmatprep.subr.mxu0 0.0
    %390 = vmatpush1.msra.mxu0 0.0
    %391 = vmatprep.subr.mxu0 0.0
    %392 = vmatpush1.msra.mxu0 0.0
    %393 = vmatprep.subr.mxu0 0.0
    %394 = vmatpush1.msra.mxu0 0.0
    %395 = vmatprep.subr.mxu0 0.0
    %396 = vmatpush1.msra.mxu0 0.0
    %397 = vmatprep.subr.mxu0 0.0
    %398 = vmatpush1.msra.mxu0 0.0
    %399 = vmatprep.subr.mxu0 0.0
    %400 = vmatpush1.msra.mxu0 0.0
    %401 = vmatprep.subr.mxu0 0.0
    %402 = vmatpush1.msra.mxu0 0.0
    %403 = vmatprep.subr.mxu0 0.0
    %404 = vmatpush1.msra.mxu0 0.0
    %405 = vmatprep.subr.mxu0 0.0
    %406 = vmatpush1.msra.mxu0 0.0
    %407 = vmatprep.subr.mxu0 0.0
    %408 = vmatpush1.msra.mxu0 0.0
    %409 = vmatprep.subr.mxu0 0.0
    %410 = vmatpush1.msra.mxu0 0.0
    %411 = vmatprep.subr.mxu0 0.0
    %412 = vmatpush1.msra.mxu0 0.0
    %413 = vmatprep.subr.mxu0 0.0
    %414 = vmatpush1.msra.mxu0 0.0
    %415 = vmatprep.subr.mxu0 0.0
    %416 = vmatpush1.msra.mxu0 0.0
    %417 = vmatprep.subr.mxu0 0.0
    %418 = vmatpush1.msra.mxu0 0.0
    %419 = vmatprep.subr.mxu0 0.0
    %420 = vmatpush1.msra.mxu0 0.0
    %421 = vmatprep.subr.mxu0 0.0
    %422 = vmatpush1.msra.mxu0 0.0
    %423 = vmatprep.subr.mxu0 0.0
    %424 = vmatpush1.msra.mxu0 0.0
    %425 = vmatprep.subr.mxu0 0.0
    %426 = vmatpush1.msra.mxu0 0.0
    %427 = vmatprep.subr.mxu0 0.0
    %428 = vmatpush1.msra.mxu0 0.0
    %429 = vmatprep.subr.mxu0 0.0
    %430 = vmatpush1.msra.mxu0 0.0
    %431 = vmatprep.subr.mxu0 0.0
    %432 = vmatpush1.msra.mxu0 0.0
    %433 = vmatprep.mubr.f32.mxu0 0.0
    %434 = vmatmul.mubr.f32.gmra.mrb[0].mxu0 %v352
    %v435 = vpop.f32.mrb[0].mxu0
    %v436 = vadd.f32 %v350, %v435
    %v437 = vpop.f32.mrb[0].mxu0
    %438 = vmatprep.mubr.f32.mxu0 0.0
    %439 = vmatmul.mubr.f32.gmra.mrb[0].mxu0 %v355
    %v440 = vpop.f32.mrb[0].mxu0
    %v441 = vadd.f32 %v350, %v440
    %v442 = vpop.f32.mrb[0].mxu0
    %443 = vmatprep.mubr.f32.mxu0 0.0
    %444 = vmatmul.mubr.f32.gmra.mrb[0].mxu0 %v358
    %v445 = vpop.f32.mrb[0].mxu0
    %v446 = vadd.f32 %v350, %v445
    %v447 = vpop.f32.mrb[0].mxu0
    %448 = vmatprep.mubr.f32.mxu0 0.0
    %449 = vmatmul.mubr.f32.gmra.mrb[0].mxu0 %v361
    %v450 = vpop.f32.mrb[0].mxu0
    %v451 = vadd.f32 %v350, %v450
    %v452 = vpop.f32.mrb[0].mxu0
    %453 = vmatprep.mubr.f32.mxu0 0.0
    %454 = vmatmul.mubr.f32.gmra.mrb[0].mxu0 %v364
    %v455 = vpop.f32.mrb[0].mxu0
    %v456 = vadd.f32 %v350, %v455
    %v457 = vpop.f32.mrb[0].mxu0
    %458 = vmatprep.mubr.f32.mxu0 0.0
    %459 = vmatmul.mubr.f32.gmra.mrb[0].mxu0 %v367
    %v460 = vpop.f32.mrb[0].mxu0
    %v461 = vadd.f32 %v350, %v460
    %v462 = vpop.f32.mrb[0].mxu0
    %463 = vdwg.mxu0
    %470 = vrot.lane.b32.xlu0 %v436, 96
    %v471 = vpop.permute.xlu0 %470
    %472 = vrot.lane.b32.xlu0 %v441, 96
    %v473 = vpop.permute.xlu0 %472
    %474 = vrot.lane.b32.xlu0 %v446, 96
    %v475 = vpop.permute.xlu0 %474
    %476 = vrot.lane.b32.xlu0 %v451, 96
    %v477 = vpop.permute.xlu0 %476
    %478 = vrot.lane.b32.xlu0 %v456, 96
    %v479 = vpop.permute.xlu0 %478
    %480 = vrot.lane.b32.xlu0 %v461, 96
    %v481 = vpop.permute.xlu0 %480
    %vm482 = vcmask 64512
    %v483 = vsel %vm482, %v436, 0
    %v485 = vsel %vm482, %v441, 0
    %v487 = vsel %vm482, %v446, 0
    %v489 = vsel %vm482, %v451, 0
    %v491 = vsel %vm482, %v456, 0
    %v493 = vsel %vm482, %v461, 0
    %v495 = vsel %vm482, %v471, 0
    %v497 = vsel %vm482, %v473, 0
    %v499 = vsel %vm482, %v475, 0
    %v501 = vsel %vm482, %v477, 0
    %v503 = vsel %vm482, %v479, 0
    %v505 = vsel %vm482, %v481, 0
    %507 = vmatprep.subr.mxu0 0.0
    %508 = vmatpush1.xpose.msra.mxu0 %v495
    %509 = vmatprep.subr.mxu0 0.0
    %510 = vmatpush1.xpose.msra.mxu0 %v497
    %511 = vmatprep.subr.mxu0 0.0
    %512 = vmatpush1.xpose.msra.mxu0 %v499
    %513 = vmatprep.subr.mxu0 0.0
    %514 = vmatpush1.xpose.msra.mxu0 %v501
    %515 = vmatprep.subr.mxu0 0.0
    %516 = vmatpush1.xpose.msra.mxu0 %v503
    %517 = vmatprep.subr.mxu0 0.0
    %518 = vmatpush1.xpose.msra.mxu0 %v505
    %519 = vmatprep.subr.mxu0 0.0
    %520 = vmatpush1.xpose.msra.mxu0 0.0
    %521 = vmatprep.subr.mxu0 0.0
    %522 = vmatpush1.xpose.msra.mxu0 0.0
    %523 = vmatprep.subr.mxu0 0.0
    %524 = vmatpush1.xpose.msra.mxu0 0.0
    %525 = vmatprep.subr.mxu0 0.0
    %526 = vmatpush1.xpose.msra.mxu0 0.0
    %527 = vmatprep.subr.mxu0 0.0
    %528 = vmatpush1.xpose.msra.mxu0 0.0
    %529 = vmatprep.subr.mxu0 0.0
    %530 = vmatpush1.xpose.msra.mxu0 0.0
    %531 = vmatprep.subr.mxu0 0.0
    %532 = vmatpush1.xpose.msra.mxu0 0.0
    %533 = vmatprep.subr.mxu0 0.0
    %534 = vmatpush1.xpose.msra.mxu0 0.0
    %535 = vmatprep.subr.mxu0 0.0
    %536 = vmatpush1.xpose.msra.mxu0 0.0
    %537 = vmatprep.subr.mxu0 0.0
    %538 = vmatpush1.xpose.msra.mxu0 0.0
    %539 = vmatprep.subr.mxu0 0.0
    %540 = vmatpush1.xpose.msra.mxu0 0.0
    %541 = vmatprep.subr.mxu0 0.0
    %542 = vmatpush1.xpose.msra.mxu0 0.0
    %543 = vmatprep.subr.mxu0 0.0
    %544 = vmatpush1.xpose.msra.mxu0 0.0
    %545 = vmatprep.subr.mxu0 0.0
    %546 = vmatpush1.xpose.msra.mxu0 0.0
    %547 = vmatprep.subr.mxu0 0.0
    %548 = vmatpush1.xpose.msra.mxu0 0.0
    %549 = vmatprep.subr.mxu0 0.0
    %550 = vmatpush1.xpose.msra.mxu0 0.0
    %551 = vmatprep.subr.mxu0 0.0
    %552 = vmatpush1.xpose.msra.mxu0 0.0
    %553 = vmatprep.subr.mxu0 0.0
    %554 = vmatpush1.xpose.msra.mxu0 0.0
    %555 = vmatprep.subr.mxu0 0.0
    %556 = vmatpush1.xpose.msra.mxu0 0.0
    %557 = vmatprep.subr.mxu0 0.0
    %558 = vmatpush1.xpose.msra.mxu0 0.0
    %559 = vmatprep.subr.mxu0 0.0
    %560 = vmatpush1.xpose.msra.mxu0 0.0
    %561 = vmatprep.subr.mxu0 0.0
    %562 = vmatpush1.xpose.msra.mxu0 0.0
    %563 = vmatprep.subr.mxu0 0.0
    %564 = vmatpush1.xpose.msra.mxu0 0.0
    %565 = vmatprep.subr.mxu0 0.0
    %566 = vmatpush1.xpose.msra.mxu0 0.0
    %567 = vmatprep.subr.mxu0 0.0
    %568 = vmatpush1.xpose.msra.mxu0 0.0
    %569 = vmatprep.subr.mxu0 0.0
    %570 = vmatpush1.xpose.msra.mxu0 0.0
    %571 = vmatprep.mubr.f32.mxu0 0.0
    %572 = vmatmul.mubr.f32.gmra.mrb[0].mxu0 %v483
    %v573 = vpop.f32.mrb[0].mxu0
    %v574 = vadd.f32 %v97, %v573
    %v575 = vpop.f32.mrb[0].mxu0
    %576 = vmatprep.mubr.f32.mxu0 0.0
    %577 = vmatmul.mubr.f32.gmra.mrb[0].mxu0 %v485
    %v578 = vpop.f32.mrb[0].mxu0
    %v579 = vadd.f32 %v98, %v578
    %v580 = vpop.f32.mrb[0].mxu0
    %581 = vmatprep.mubr.f32.mxu0 0.0
    %582 = vmatmul.mubr.f32.gmra.mrb[0].mxu0 %v487
    %v583 = vpop.f32.mrb[0].mxu0
    %v584 = vadd.f32 %v99, %v583
    %v585 = vpop.f32.mrb[0].mxu0
    %586 = vmatprep.mubr.f32.mxu0 0.0
    %587 = vmatmul.mubr.f32.gmra.mrb[0].mxu0 %v489
    %v588 = vpop.f32.mrb[0].mxu0
    %v589 = vadd.f32 %v100, %v588
    %v590 = vpop.f32.mrb[0].mxu0
    %591 = vmatprep.mubr.f32.mxu0 0.0
    %592 = vmatmul.mubr.f32.gmra.mrb[0].mxu0 %v491
    %v593 = vpop.f32.mrb[0].mxu0
    %v594 = vadd.f32 %v101, %v593
    %v595 = vpop.f32.mrb[0].mxu0
    %596 = vmatprep.mubr.f32.mxu0 0.0
    %597 = vmatmul.mubr.f32.gmra.mrb[0].mxu0 %v493
    %v598 = vpop.f32.mrb[0].mxu0
    %v599 = vadd.f32 %v102, %v598
    %v600 = vpop.f32.mrb[0].mxu0
    %601 = vdwg.mxu0
    %v602 = vsel %vm121, %v574, -inf
    %603 = vmax.xlane.f32.xlu0 %v602
    %v604 = vpop.xlane.xlu0 %603
    %v605 = vsel %vm121, %v579, -inf
    %606 = vmax.xlane.f32.xlu0 %v605
    %v607 = vpop.xlane.xlu0 %606
    %v608 = vsel %vm121, %v584, -inf
    %609 = vmax.xlane.f32.xlu0 %v608
    %v610 = vpop.xlane.xlu0 %609
    %v611 = vsel %vm121, %v589, -inf
    %612 = vmax.xlane.f32.xlu0 %v611
    %v613 = vpop.xlane.xlu0 %612
    %v614 = vsel %vm121, %v594, -inf
    %615 = vmax.xlane.f32.xlu0 %v614
    %v616 = vpop.xlane.xlu0 %615
    %v617 = vsel %vm121, %v599, -inf
    %618 = vmax.xlane.f32.xlu0 %v617
    %v619 = vpop.xlane.xlu0 %618
    %v620 = vsub.f32 %v574, %v604
    %v621 = vsub.f32 %v579, %v607
    %v622 = vsub.f32 %v584, %v610
    %v623 = vsub.f32 %v589, %v613
    %v624 = vsub.f32 %v594, %v616
    %v625 = vsub.f32 %v599, %v619
    %v626 = vmul.f32 %v620, 1.442695
    %v627 = vpow.pop %v626
    %v628 = vmul.f32 %v621, 1.442695
    %v629 = vpow.pop %v628
    %v630 = vmul.f32 %v622, 1.442695
    %v631 = vpow.pop %v630
    %v632 = vmul.f32 %v623, 1.442695
    %v633 = vpow.pop %v632
    %v634 = vmul.f32 %v624, 1.442695
    %v635 = vpow.pop %v634
    %v636 = vmul.f32 %v625, 1.442695
    %v637 = vpow.pop %v636
    %638 = vrot.lane.b32.xlu0 %v436, 64
    %v639 = vpop.permute.xlu0 %638
    %640 = vrot.lane.b32.xlu0 %v441, 64
    %v641 = vpop.permute.xlu0 %640
    %642 = vrot.lane.b32.xlu0 %v446, 64
    %v643 = vpop.permute.xlu0 %642
    %644 = vrot.lane.b32.xlu0 %v451, 64
    %v645 = vpop.permute.xlu0 %644
    %646 = vrot.lane.b32.xlu0 %v456, 64
    %v647 = vpop.permute.xlu0 %646
    %648 = vrot.lane.b32.xlu0 %v461, 64
    %v649 = vpop.permute.xlu0 %648
    %v657 = vsel %vm121, %v627, 0
    %v660 = vsel %vm121, %v629, 0
    %v663 = vsel %vm121, %v631, 0
    %v666 = vsel %vm121, %v633, 0
    %v669 = vsel %vm121, %v635, 0
    %v672 = vsel %vm121, %v637, 0
    %674 = vmatprep.subr.mxu0 0.0
    %675 = vmatpush1.msra.mxu0 %v639
    %676 = vmatprep.subr.mxu0 0.0
    %677 = vmatpush1.msra.mxu0 %v641
    %678 = vmatprep.subr.mxu0 0.0
    %679 = vmatpush1.msra.mxu0 %v643
    %680 = vmatprep.subr.mxu0 0.0
    %681 = vmatpush1.msra.mxu0 %v645
    %682 = vmatprep.subr.mxu0 0.0
    %683 = vmatpush1.msra.mxu0 %v647
    %684 = vmatprep.subr.mxu0 0.0
    %685 = vmatpush1.msra.mxu0 %v649
    %686 = vmatprep.subr.mxu0 0.0
    %687 = vmatpush1.msra.mxu0 0.0
    %688 = vmatprep.subr.mxu0 0.0
    %689 = vmatpush1.msra.mxu0 0.0
    %690 = vmatprep.subr.mxu0 0.0
    %691 = vmatpush1.msra.mxu0 0.0
    %692 = vmatprep.subr.mxu0 0.0
    %693 = vmatpush1.msra.mxu0 0.0
    %694 = vmatprep.subr.mxu0 0.0
    %695 = vmatpush1.msra.mxu0 0.0
    %696 = vmatprep.subr.mxu0 0.0
    %697 = vmatpush1.msra.mxu0 0.0
    %698 = vmatprep.subr.mxu0 0.0
    %699 = vmatpush1.msra.mxu0 0.0
    %700 = vmatprep.subr.mxu0 0.0
    %701 = vmatpush1.msra.mxu0 0.0
    %702 = vmatprep.subr.mxu0 0.0
    %703 = vmatpush1.msra.mxu0 0.0
    %704 = vmatprep.subr.mxu0 0.0
    %705 = vmatpush1.msra.mxu0 0.0
    %706 = vmatprep.subr.mxu0 0.0
    %707 = vmatpush1.msra.mxu0 0.0
    %708 = vmatprep.subr.mxu0 0.0
    %709 = vmatpush1.msra.mxu0 0.0
    %710 = vmatprep.subr.mxu0 0.0
    %711 = vmatpush1.msra.mxu0 0.0
    %712 = vmatprep.subr.mxu0 0.0
    %713 = vmatpush1.msra.mxu0 0.0
    %714 = vmatprep.subr.mxu0 0.0
    %715 = vmatpush1.msra.mxu0 0.0
    %716 = vmatprep.subr.mxu0 0.0
    %717 = vmatpush1.msra.mxu0 0.0
    %718 = vmatprep.subr.mxu0 0.0
    %719 = vmatpush1.msra.mxu0 0.0
    %720 = vmatprep.subr.mxu0 0.0
    %721 = vmatpush1.msra.mxu0 0.0
    %722 = vmatprep.subr.mxu0 0.0
    %723 = vmatpush1.msra.mxu0 0.0
    %724 = vmatprep.subr.mxu0 0.0
    %725 = vmatpush1.msra.mxu0 0.0
    %726 = vmatprep.subr.mxu0 0.0
    %727 = vmatpush1.msra.mxu0 0.0
    %728 = vmatprep.subr.mxu0 0.0
    %729 = vmatpush1.msra.mxu0 0.0
    %730 = vmatprep.subr.mxu0 0.0
    %731 = vmatpush1.msra.mxu0 0.0
    %732 = vmatprep.subr.mxu0 0.0
    %733 = vmatpush1.msra.mxu0 0.0
    %734 = vmatprep.subr.mxu0 0.0
    %735 = vmatpush1.msra.mxu0 0.0
    %736 = vmatprep.subr.mxu0 0.0
    %737 = vmatpush1.msra.mxu0 0.0
    %738 = vmatprep.mubr.f32.mxu0 0.0
    %739 = vmatmul.mubr.f32.gmra.mrb[0].mxu0 %v657
    %v740 = vpop.f32.mrb[0].mxu0
    %v741 = vadd.f32 0.0, %v740
    %v742 = vpop.f32.mrb[0].mxu0
    %743 = vmatprep.mubr.f32.mxu0 0.0
    %744 = vmatmul.mubr.f32.gmra.mrb[0].mxu0 %v660
    %v745 = vpop.f32.mrb[0].mxu0
    %v746 = vadd.f32 0.0, %v745
    %v747 = vpop.f32.mrb[0].mxu0
    %748 = vmatprep.mubr.f32.mxu0 0.0
    %749 = vmatmul.mubr.f32.gmra.mrb[0].mxu0 %v663
    %v750 = vpop.f32.mrb[0].mxu0
    %v751 = vadd.f32 0.0, %v750
    %v752 = vpop.f32.mrb[0].mxu0
    %753 = vmatprep.mubr.f32.mxu0 0.0
    %754 = vmatmul.mubr.f32.gmra.mrb[0].mxu0 %v666
    %v755 = vpop.f32.mrb[0].mxu0
    %v756 = vadd.f32 0.0, %v755
    %v757 = vpop.f32.mrb[0].mxu0
    %758 = vmatprep.mubr.f32.mxu0 0.0
    %759 = vmatmul.mubr.f32.gmra.mrb[0].mxu0 %v669
    %v760 = vpop.f32.mrb[0].mxu0
    %v761 = vadd.f32 0.0, %v760
    %v762 = vpop.f32.mrb[0].mxu0
    %763 = vmatprep.mubr.f32.mxu0 0.0
    %764 = vmatmul.mubr.f32.gmra.mrb[0].mxu0 %v672
    %v765 = vpop.f32.mrb[0].mxu0
    %v766 = vadd.f32 0.0, %v765
    %v767 = vpop.f32.mrb[0].mxu0
    %768 = vdwg.mxu0
    %v769 = vsel %vm121, %v627, 0.0
    %770 = vadd.xlane.f32.xlu0 %v769
    %v771 = vpop.xlane.xlu0 %770
    %v772 = vsel %vm121, %v629, 0.0
    %773 = vadd.xlane.f32.xlu0 %v772
    %v774 = vpop.xlane.xlu0 %773
    %v775 = vsel %vm121, %v631, 0.0
    %776 = vadd.xlane.f32.xlu0 %v775
    %v777 = vpop.xlane.xlu0 %776
    %v778 = vsel %vm121, %v633, 0.0
    %779 = vadd.xlane.f32.xlu0 %v778
    %v780 = vpop.xlane.xlu0 %779
    %v781 = vsel %vm121, %v635, 0.0
    %782 = vadd.xlane.f32.xlu0 %v781
    %v783 = vpop.xlane.xlu0 %782
    %v784 = vsel %vm121, %v637, 0.0
    %785 = vadd.xlane.f32.xlu0 %v784
    %v786 = vpop.xlane.xlu0 %785
    %v787 = vrcp.pop %v771
    %v788 = vmul.f32 1.0, %v787
    %v789 = vrcp.pop %v774
    %v790 = vmul.f32 1.0, %v789
    %v791 = vrcp.pop %v777
    %v792 = vmul.f32 1.0, %v791
    %v793 = vrcp.pop %v780
    %v794 = vmul.f32 1.0, %v793
    %v795 = vrcp.pop %v783
    %v796 = vmul.f32 1.0, %v795
    %v797 = vrcp.pop %v786
    %v798 = vmul.f32 1.0, %v797
    %v799 = vmul.f32 %v741, %v788
    %v800 = vmul.f32 %v746, %v790
    %v801 = vmul.f32 %v751, %v792
    %v802 = vmul.f32 %v756, %v794
    %v803 = vmul.f32 %v761, %v796
    %v804 = vmul.f32 %v766, %v798
    %805 = vrot.lane.b32.xlu0 %v436, 120
    %v806 = vpop.permute.xlu0 %805
    %807 = vrot.lane.b32.xlu0 %v441, 120
    %v808 = vpop.permute.xlu0 %807
    %809 = vrot.lane.b32.xlu0 %v446, 120
    %v810 = vpop.permute.xlu0 %809
    %811 = vrot.lane.b32.xlu0 %v451, 120
    %v812 = vpop.permute.xlu0 %811
    %813 = vrot.lane.b32.xlu0 %v456, 120
    %v814 = vpop.permute.xlu0 %813
    %815 = vrot.lane.b32.xlu0 %v461, 120
    %v816 = vpop.permute.xlu0 %815
    %817 = vrot.lane.b32.xlu0 %v436, 88
    %v818 = vpop.permute.xlu0 %817
    %819 = vrot.lane.b32.xlu0 %v441, 88
    %v820 = vpop.permute.xlu0 %819
    %821 = vrot.lane.b32.xlu0 %v446, 88
    %v822 = vpop.permute.xlu0 %821
    %823 = vrot.lane.b32.xlu0 %v451, 88
    %v824 = vpop.permute.xlu0 %823
    %825 = vrot.lane.b32.xlu0 %v456, 88
    %v826 = vpop.permute.xlu0 %825
    %827 = vrot.lane.b32.xlu0 %v461, 88
    %v828 = vpop.permute.xlu0 %827
    %v829 = vsel %vm482, %v806, 0
    %v831 = vsel %vm482, %v808, 0
    %v833 = vsel %vm482, %v810, 0
    %v835 = vsel %vm482, %v812, 0
    %v837 = vsel %vm482, %v814, 0
    %v839 = vsel %vm482, %v816, 0
    %v841 = vsel %vm482, %v818, 0
    %v843 = vsel %vm482, %v820, 0
    %v845 = vsel %vm482, %v822, 0
    %v847 = vsel %vm482, %v824, 0
    %v849 = vsel %vm482, %v826, 0
    %v851 = vsel %vm482, %v828, 0
    %853 = vmatprep.subr.mxu0 0.0
    %854 = vmatpush1.xpose.msra.mxu0 %v841
    %855 = vmatprep.subr.mxu0 0.0
    %856 = vmatpush1.xpose.msra.mxu0 %v843
    %857 = vmatprep.subr.mxu0 0.0
    %858 = vmatpush1.xpose.msra.mxu0 %v845
    %859 = vmatprep.subr.mxu0 0.0
    %860 = vmatpush1.xpose.msra.mxu0 %v847
    %861 = vmatprep.subr.mxu0 0.0
    %862 = vmatpush1.xpose.msra.mxu0 %v849
    %863 = vmatprep.subr.mxu0 0.0
    %864 = vmatpush1.xpose.msra.mxu0 %v851
    %865 = vmatprep.subr.mxu0 0.0
    %866 = vmatpush1.xpose.msra.mxu0 0.0
    %867 = vmatprep.subr.mxu0 0.0
    %868 = vmatpush1.xpose.msra.mxu0 0.0
    %869 = vmatprep.subr.mxu0 0.0
    %870 = vmatpush1.xpose.msra.mxu0 0.0
    %871 = vmatprep.subr.mxu0 0.0
    %872 = vmatpush1.xpose.msra.mxu0 0.0
    %873 = vmatprep.subr.mxu0 0.0
    %874 = vmatpush1.xpose.msra.mxu0 0.0
    %875 = vmatprep.subr.mxu0 0.0
    %876 = vmatpush1.xpose.msra.mxu0 0.0
    %877 = vmatprep.subr.mxu0 0.0
    %878 = vmatpush1.xpose.msra.mxu0 0.0
    %879 = vmatprep.subr.mxu0 0.0
    %880 = vmatpush1.xpose.msra.mxu0 0.0
    %881 = vmatprep.subr.mxu0 0.0
    %882 = vmatpush1.xpose.msra.mxu0 0.0
    %883 = vmatprep.subr.mxu0 0.0
    %884 = vmatpush1.xpose.msra.mxu0 0.0
    %885 = vmatprep.subr.mxu0 0.0
    %886 = vmatpush1.xpose.msra.mxu0 0.0
    %887 = vmatprep.subr.mxu0 0.0
    %888 = vmatpush1.xpose.msra.mxu0 0.0
    %889 = vmatprep.subr.mxu0 0.0
    %890 = vmatpush1.xpose.msra.mxu0 0.0
    %891 = vmatprep.subr.mxu0 0.0
    %892 = vmatpush1.xpose.msra.mxu0 0.0
    %893 = vmatprep.subr.mxu0 0.0
    %894 = vmatpush1.xpose.msra.mxu0 0.0
    %895 = vmatprep.subr.mxu0 0.0
    %896 = vmatpush1.xpose.msra.mxu0 0.0
    %897 = vmatprep.subr.mxu0 0.0
    %898 = vmatpush1.xpose.msra.mxu0 0.0
    %899 = vmatprep.subr.mxu0 0.0
    %900 = vmatpush1.xpose.msra.mxu0 0.0
    %901 = vmatprep.subr.mxu0 0.0
    %902 = vmatpush1.xpose.msra.mxu0 0.0
    %903 = vmatprep.subr.mxu0 0.0
    %904 = vmatpush1.xpose.msra.mxu0 0.0
    %905 = vmatprep.subr.mxu0 0.0
    %906 = vmatpush1.xpose.msra.mxu0 0.0
    %907 = vmatprep.subr.mxu0 0.0
    %908 = vmatpush1.xpose.msra.mxu0 0.0
    %909 = vmatprep.subr.mxu0 0.0
    %910 = vmatpush1.xpose.msra.mxu0 0.0
    %911 = vmatprep.subr.mxu0 0.0
    %912 = vmatpush1.xpose.msra.mxu0 0.0
    %913 = vmatprep.subr.mxu0 0.0
    %914 = vmatpush1.xpose.msra.mxu0 0.0
    %915 = vmatprep.subr.mxu0 0.0
    %916 = vmatpush1.xpose.msra.mxu0 0.0
    %917 = vmatprep.mubr.f32.mxu0 0.0
    %918 = vmatmul.mubr.f32.gmra.mrb[0].mxu0 %v829
    %v919 = vpop.f32.mrb[0].mxu0
    %v920 = vadd.f32 %v97, %v919
    %v921 = vpop.f32.mrb[0].mxu0
    %922 = vmatprep.mubr.f32.mxu0 0.0
    %923 = vmatmul.mubr.f32.gmra.mrb[0].mxu0 %v831
    %v924 = vpop.f32.mrb[0].mxu0
    %v925 = vadd.f32 %v98, %v924
    %v926 = vpop.f32.mrb[0].mxu0
    %927 = vmatprep.mubr.f32.mxu0 0.0
    %928 = vmatmul.mubr.f32.gmra.mrb[0].mxu0 %v833
    %v929 = vpop.f32.mrb[0].mxu0
    %v930 = vadd.f32 %v99, %v929
    %v931 = vpop.f32.mrb[0].mxu0
    %932 = vmatprep.mubr.f32.mxu0 0.0
    %933 = vmatmul.mubr.f32.gmra.mrb[0].mxu0 %v835
    %v934 = vpop.f32.mrb[0].mxu0
    %v935 = vadd.f32 %v100, %v934
    %v936 = vpop.f32.mrb[0].mxu0
    %937 = vmatprep.mubr.f32.mxu0 0.0
    %938 = vmatmul.mubr.f32.gmra.mrb[0].mxu0 %v837
    %v939 = vpop.f32.mrb[0].mxu0
    %v940 = vadd.f32 %v101, %v939
    %v941 = vpop.f32.mrb[0].mxu0
    %942 = vmatprep.mubr.f32.mxu0 0.0
    %943 = vmatmul.mubr.f32.gmra.mrb[0].mxu0 %v839
    %v944 = vpop.f32.mrb[0].mxu0
    %v945 = vadd.f32 %v102, %v944
    %v946 = vpop.f32.mrb[0].mxu0
    %947 = vdwg.mxu0
    %v948 = vsel %vm121, %v920, -inf
    %949 = vmax.xlane.f32.xlu0 %v948
    %v950 = vpop.xlane.xlu0 %949
    %v951 = vsel %vm121, %v925, -inf
    %952 = vmax.xlane.f32.xlu0 %v951
    %v953 = vpop.xlane.xlu0 %952
    %v954 = vsel %vm121, %v930, -inf
    %955 = vmax.xlane.f32.xlu0 %v954
    %v956 = vpop.xlane.xlu0 %955
    %v957 = vsel %vm121, %v935, -inf
    %958 = vmax.xlane.f32.xlu0 %v957
    %v959 = vpop.xlane.xlu0 %958
    %v960 = vsel %vm121, %v940, -inf
    %961 = vmax.xlane.f32.xlu0 %v960
    %v962 = vpop.xlane.xlu0 %961
    %v963 = vsel %vm121, %v945, -inf
    %964 = vmax.xlane.f32.xlu0 %v963
    %v965 = vpop.xlane.xlu0 %964
    %v966 = vsub.f32 %v920, %v950
    %v967 = vsub.f32 %v925, %v953
    %v968 = vsub.f32 %v930, %v956
    %v969 = vsub.f32 %v935, %v959
    %v970 = vsub.f32 %v940, %v962
    %v971 = vsub.f32 %v945, %v965
    %v972 = vmul.f32 %v966, 1.442695
    %v973 = vpow.pop %v972
    %v974 = vmul.f32 %v967, 1.442695
    %v975 = vpow.pop %v974
    %v976 = vmul.f32 %v968, 1.442695
    %v977 = vpow.pop %v976
    %v978 = vmul.f32 %v969, 1.442695
    %v979 = vpow.pop %v978
    %v980 = vmul.f32 %v970, 1.442695
    %v981 = vpow.pop %v980
    %v982 = vmul.f32 %v971, 1.442695
    %v983 = vpow.pop %v982
    %984 = vrot.lane.b32.xlu0 %v436, 56
    %v985 = vpop.permute.xlu0 %984
    %986 = vrot.lane.b32.xlu0 %v441, 56
    %v987 = vpop.permute.xlu0 %986
    %988 = vrot.lane.b32.xlu0 %v446, 56
    %v989 = vpop.permute.xlu0 %988
    %990 = vrot.lane.b32.xlu0 %v451, 56
    %v991 = vpop.permute.xlu0 %990
    %992 = vrot.lane.b32.xlu0 %v456, 56
    %v993 = vpop.permute.xlu0 %992
    %994 = vrot.lane.b32.xlu0 %v461, 56
    %v995 = vpop.permute.xlu0 %994
    %v1003 = vsel %vm121, %v973, 0
    %v1006 = vsel %vm121, %v975, 0
    %v1009 = vsel %vm121, %v977, 0
    %v1012 = vsel %vm121, %v979, 0
    %v1015 = vsel %vm121, %v981, 0
    %v1018 = vsel %vm121, %v983, 0
    %1020 = vmatprep.subr.mxu0 0.0
    %1021 = vmatpush1.msra.mxu0 %v985
    %1022 = vmatprep.subr.mxu0 0.0
    %1023 = vmatpush1.msra.mxu0 %v987
    %1024 = vmatprep.subr.mxu0 0.0
    %1025 = vmatpush1.msra.mxu0 %v989
    %1026 = vmatprep.subr.mxu0 0.0
    %1027 = vmatpush1.msra.mxu0 %v991
    %1028 = vmatprep.subr.mxu0 0.0
    %1029 = vmatpush1.msra.mxu0 %v993
    %1030 = vmatprep.subr.mxu0 0.0
    %1031 = vmatpush1.msra.mxu0 %v995
    %1032 = vmatprep.subr.mxu0 0.0
    %1033 = vmatpush1.msra.mxu0 0.0
    %1034 = vmatprep.subr.mxu0 0.0
    %1035 = vmatpush1.msra.mxu0 0.0
    %1036 = vmatprep.subr.mxu0 0.0
    %1037 = vmatpush1.msra.mxu0 0.0
    %1038 = vmatprep.subr.mxu0 0.0
    %1039 = vmatpush1.msra.mxu0 0.0
    %1040 = vmatprep.subr.mxu0 0.0
    %1041 = vmatpush1.msra.mxu0 0.0
    %1042 = vmatprep.subr.mxu0 0.0
    %1043 = vmatpush1.msra.mxu0 0.0
    %1044 = vmatprep.subr.mxu0 0.0
    %1045 = vmatpush1.msra.mxu0 0.0
    %1046 = vmatprep.subr.mxu0 0.0
    %1047 = vmatpush1.msra.mxu0 0.0
    %1048 = vmatprep.subr.mxu0 0.0
    %1049 = vmatpush1.msra.mxu0 0.0
    %1050 = vmatprep.subr.mxu0 0.0
    %1051 = vmatpush1.msra.mxu0 0.0
    %1052 = vmatprep.subr.mxu0 0.0
    %1053 = vmatpush1.msra.mxu0 0.0
    %1054 = vmatprep.subr.mxu0 0.0
    %1055 = vmatpush1.msra.mxu0 0.0
    %1056 = vmatprep.subr.mxu0 0.0
    %1057 = vmatpush1.msra.mxu0 0.0
    %1058 = vmatprep.subr.mxu0 0.0
    %1059 = vmatpush1.msra.mxu0 0.0
    %1060 = vmatprep.subr.mxu0 0.0
    %1061 = vmatpush1.msra.mxu0 0.0
    %1062 = vmatprep.subr.mxu0 0.0
    %1063 = vmatpush1.msra.mxu0 0.0
    %1064 = vmatprep.subr.mxu0 0.0
    %1065 = vmatpush1.msra.mxu0 0.0
    %1066 = vmatprep.subr.mxu0 0.0
    %1067 = vmatpush1.msra.mxu0 0.0
    %1068 = vmatprep.subr.mxu0 0.0
    %1069 = vmatpush1.msra.mxu0 0.0
    %1070 = vmatprep.subr.mxu0 0.0
    %1071 = vmatpush1.msra.mxu0 0.0
    %1072 = vmatprep.subr.mxu0 0.0
    %1073 = vmatpush1.msra.mxu0 0.0
    %1074 = vmatprep.subr.mxu0 0.0
    %1075 = vmatpush1.msra.mxu0 0.0
    %1076 = vmatprep.subr.mxu0 0.0
    %1077 = vmatpush1.msra.mxu0 0.0
    %1078 = vmatprep.subr.mxu0 0.0
    %1079 = vmatpush1.msra.mxu0 0.0
    %1080 = vmatprep.subr.mxu0 0.0
    %1081 = vmatpush1.msra.mxu0 0.0
    %1082 = vmatprep.subr.mxu0 0.0
    %1083 = vmatpush1.msra.mxu0 0.0
    %1084 = vmatprep.mubr.f32.mxu0 0.0
    %1085 = vmatmul.mubr.f32.gmra.mrb[0].mxu0 %v1003
    %v1086 = vpop.f32.mrb[0].mxu0
    %v1087 = vadd.f32 0.0, %v1086
    %v1088 = vpop.f32.mrb[0].mxu0
    %1089 = vmatprep.mubr.f32.mxu0 0.0
    %1090 = vmatmul.mubr.f32.gmra.mrb[0].mxu0 %v1006
    %v1091 = vpop.f32.mrb[0].mxu0
    %v1092 = vadd.f32 0.0, %v1091
    %v1093 = vpop.f32.mrb[0].mxu0
    %1094 = vmatprep.mubr.f32.mxu0 0.0
    %1095 = vmatmul.mubr.f32.gmra.mrb[0].mxu0 %v1009
    %v1096 = vpop.f32.mrb[0].mxu0
    %v1097 = vadd.f32 0.0, %v1096
    %v1098 = vpop.f32.mrb[0].mxu0
    %1099 = vmatprep.mubr.f32.mxu0 0.0
    %1100 = vmatmul.mubr.f32.gmra.mrb[0].mxu0 %v1012
    %v1101 = vpop.f32.mrb[0].mxu0
    %v1102 = vadd.f32 0.0, %v1101
    %v1103 = vpop.f32.mrb[0].mxu0
    %1104 = vmatprep.mubr.f32.mxu0 0.0
    %1105 = vmatmul.mubr.f32.gmra.mrb[0].mxu0 %v1015
    %v1106 = vpop.f32.mrb[0].mxu0
    %v1107 = vadd.f32 0.0, %v1106
    %v1108 = vpop.f32.mrb[0].mxu0
    %1109 = vmatprep.mubr.f32.mxu0 0.0
    %1110 = vmatmul.mubr.f32.gmra.mrb[0].mxu0 %v1018
    %v1111 = vpop.f32.mrb[0].mxu0
    %v1112 = vadd.f32 0.0, %v1111
    %v1113 = vpop.f32.mrb[0].mxu0
    %1114 = vdwg.mxu0
    %v1115 = vsel %vm121, %v973, 0.0
    %1116 = vadd.xlane.f32.xlu0 %v1115
    %v1117 = vpop.xlane.xlu0 %1116
    %v1118 = vsel %vm121, %v975, 0.0
    %1119 = vadd.xlane.f32.xlu0 %v1118
    %v1120 = vpop.xlane.xlu0 %1119
    %v1121 = vsel %vm121, %v977, 0.0
    %1122 = vadd.xlane.f32.xlu0 %v1121
    %v1123 = vpop.xlane.xlu0 %1122
    %v1124 = vsel %vm121, %v979, 0.0
    %1125 = vadd.xlane.f32.xlu0 %v1124
    %v1126 = vpop.xlane.xlu0 %1125
    %v1127 = vsel %vm121, %v981, 0.0
    %1128 = vadd.xlane.f32.xlu0 %v1127
    %v1129 = vpop.xlane.xlu0 %1128
    %v1130 = vsel %vm121, %v983, 0.0
    %1131 = vadd.xlane.f32.xlu0 %v1130
    %v1132 = vpop.xlane.xlu0 %1131
    %v1133 = vrcp.pop %v1117
    %v1134 = vmul.f32 1.0, %v1133
    %v1135 = vrcp.pop %v1120
    %v1136 = vmul.f32 1.0, %v1135
    %v1137 = vrcp.pop %v1123
    %v1138 = vmul.f32 1.0, %v1137
    %v1139 = vrcp.pop %v1126
    %v1140 = vmul.f32 1.0, %v1139
    %v1141 = vrcp.pop %v1129
    %v1142 = vmul.f32 1.0, %v1141
    %v1143 = vrcp.pop %v1132
    %v1144 = vmul.f32 1.0, %v1143
    %v1145 = vmul.f32 %v1087, %v1134
    %v1146 = vmul.f32 %v1092, %v1136
    %v1147 = vmul.f32 %v1097, %v1138
    %v1148 = vmul.f32 %v1102, %v1140
    %v1149 = vmul.f32 %v1107, %v1142
    %v1150 = vmul.f32 %v1112, %v1144
    %1151 = vrot.lane.b32.xlu0 %v436, 112
    %v1152 = vpop.permute.xlu0 %1151
    %1153 = vrot.lane.b32.xlu0 %v441, 112
    %v1154 = vpop.permute.xlu0 %1153
    %1155 = vrot.lane.b32.xlu0 %v446, 112
    %v1156 = vpop.permute.xlu0 %1155
    %1157 = vrot.lane.b32.xlu0 %v451, 112
    %v1158 = vpop.permute.xlu0 %1157
    %1159 = vrot.lane.b32.xlu0 %v456, 112
    %v1160 = vpop.permute.xlu0 %1159
    %1161 = vrot.lane.b32.xlu0 %v461, 112
    %v1162 = vpop.permute.xlu0 %1161
    %1163 = vrot.lane.b32.xlu0 %v436, 80
    %v1164 = vpop.permute.xlu0 %1163
    %1165 = vrot.lane.b32.xlu0 %v441, 80
    %v1166 = vpop.permute.xlu0 %1165
    %1167 = vrot.lane.b32.xlu0 %v446, 80
    %v1168 = vpop.permute.xlu0 %1167
    %1169 = vrot.lane.b32.xlu0 %v451, 80
    %v1170 = vpop.permute.xlu0 %1169
    %1171 = vrot.lane.b32.xlu0 %v456, 80
    %v1172 = vpop.permute.xlu0 %1171
    %1173 = vrot.lane.b32.xlu0 %v461, 80
    %v1174 = vpop.permute.xlu0 %1173
    %v1175 = vsel %vm482, %v1152, 0
    %v1177 = vsel %vm482, %v1154, 0
    %v1179 = vsel %vm482, %v1156, 0
    %v1181 = vsel %vm482, %v1158, 0
    %v1183 = vsel %vm482, %v1160, 0
    %v1185 = vsel %vm482, %v1162, 0
    %v1187 = vsel %vm482, %v1164, 0
    %v1189 = vsel %vm482, %v1166, 0
    %v1191 = vsel %vm482, %v1168, 0
    %v1193 = vsel %vm482, %v1170, 0
    %v1195 = vsel %vm482, %v1172, 0
    %v1197 = vsel %vm482, %v1174, 0
    %1199 = vmatprep.subr.mxu0 0.0
    %1200 = vmatpush1.xpose.msra.mxu0 %v1187
    %1201 = vmatprep.subr.mxu0 0.0
    %1202 = vmatpush1.xpose.msra.mxu0 %v1189
    %1203 = vmatprep.subr.mxu0 0.0
    %1204 = vmatpush1.xpose.msra.mxu0 %v1191
    %1205 = vmatprep.subr.mxu0 0.0
    %1206 = vmatpush1.xpose.msra.mxu0 %v1193
    %1207 = vmatprep.subr.mxu0 0.0
    %1208 = vmatpush1.xpose.msra.mxu0 %v1195
    %1209 = vmatprep.subr.mxu0 0.0
    %1210 = vmatpush1.xpose.msra.mxu0 %v1197
    %1211 = vmatprep.subr.mxu0 0.0
    %1212 = vmatpush1.xpose.msra.mxu0 0.0
    %1213 = vmatprep.subr.mxu0 0.0
    %1214 = vmatpush1.xpose.msra.mxu0 0.0
    %1215 = vmatprep.subr.mxu0 0.0
    %1216 = vmatpush1.xpose.msra.mxu0 0.0
    %1217 = vmatprep.subr.mxu0 0.0
    %1218 = vmatpush1.xpose.msra.mxu0 0.0
    %1219 = vmatprep.subr.mxu0 0.0
    %1220 = vmatpush1.xpose.msra.mxu0 0.0
    %1221 = vmatprep.subr.mxu0 0.0
    %1222 = vmatpush1.xpose.msra.mxu0 0.0
    %1223 = vmatprep.subr.mxu0 0.0
    %1224 = vmatpush1.xpose.msra.mxu0 0.0
    %1225 = vmatprep.subr.mxu0 0.0
    %1226 = vmatpush1.xpose.msra.mxu0 0.0
    %1227 = vmatprep.subr.mxu0 0.0
    %1228 = vmatpush1.xpose.msra.mxu0 0.0
    %1229 = vmatprep.subr.mxu0 0.0
    %1230 = vmatpush1.xpose.msra.mxu0 0.0
    %1231 = vmatprep.subr.mxu0 0.0
    %1232 = vmatpush1.xpose.msra.mxu0 0.0
    %1233 = vmatprep.subr.mxu0 0.0
    %1234 = vmatpush1.xpose.msra.mxu0 0.0
    %1235 = vmatprep.subr.mxu0 0.0
    %1236 = vmatpush1.xpose.msra.mxu0 0.0
    %1237 = vmatprep.subr.mxu0 0.0
    %1238 = vmatpush1.xpose.msra.mxu0 0.0
    %1239 = vmatprep.subr.mxu0 0.0
    %1240 = vmatpush1.xpose.msra.mxu0 0.0
    %1241 = vmatprep.subr.mxu0 0.0
    %1242 = vmatpush1.xpose.msra.mxu0 0.0
    %1243 = vmatprep.subr.mxu0 0.0
    %1244 = vmatpush1.xpose.msra.mxu0 0.0
    %1245 = vmatprep.subr.mxu0 0.0
    %1246 = vmatpush1.xpose.msra.mxu0 0.0
    %1247 = vmatprep.subr.mxu0 0.0
    %1248 = vmatpush1.xpose.msra.mxu0 0.0
    %1249 = vmatprep.subr.mxu0 0.0
    %1250 = vmatpush1.xpose.msra.mxu0 0.0
    %1251 = vmatprep.subr.mxu0 0.0
    %1252 = vmatpush1.xpose.msra.mxu0 0.0
    %1253 = vmatprep.subr.mxu0 0.0
    %1254 = vmatpush1.xpose.msra.mxu0 0.0
    %1255 = vmatprep.subr.mxu0 0.0
    %1256 = vmatpush1.xpose.msra.mxu0 0.0
    %1257 = vmatprep.subr.mxu0 0.0
    %1258 = vmatpush1.xpose.msra.mxu0 0.0
    %1259 = vmatprep.subr.mxu0 0.0
    %1260 = vmatpush1.xpose.msra.mxu0 0.0
    %1261 = vmatprep.subr.mxu0 0.0
    %1262 = vmatpush1.xpose.msra.mxu0 0.0
    %1263 = vmatprep.mubr.f32.mxu0 0.0
    %1264 = vmatmul.mubr.f32.gmra.mrb[0].mxu0 %v1175
    %v1265 = vpop.f32.mrb[0].mxu0
    %v1266 = vadd.f32 %v97, %v1265
    %v1267 = vpop.f32.mrb[0].mxu0
    %1268 = vmatprep.mubr.f32.mxu0 0.0
    %1269 = vmatmul.mubr.f32.gmra.mrb[0].mxu0 %v1177
    %v1270 = vpop.f32.mrb[0].mxu0
    %v1271 = vadd.f32 %v98, %v1270
    %v1272 = vpop.f32.mrb[0].mxu0
    %1273 = vmatprep.mubr.f32.mxu0 0.0
    %1274 = vmatmul.mubr.f32.gmra.mrb[0].mxu0 %v1179
    %v1275 = vpop.f32.mrb[0].mxu0
    %v1276 = vadd.f32 %v99, %v1275
    %v1277 = vpop.f32.mrb[0].mxu0
    %1278 = vmatprep.mubr.f32.mxu0 0.0
    %1279 = vmatmul.mubr.f32.gmra.mrb[0].mxu0 %v1181
    %v1280 = vpop.f32.mrb[0].mxu0
    %v1281 = vadd.f32 %v100, %v1280
    %v1282 = vpop.f32.mrb[0].mxu0
    %1283 = vmatprep.mubr.f32.mxu0 0.0
    %1284 = vmatmul.mubr.f32.gmra.mrb[0].mxu0 %v1183
    %v1285 = vpop.f32.mrb[0].mxu0
    %v1286 = vadd.f32 %v101, %v1285
    %v1287 = vpop.f32.mrb[0].mxu0
    %1288 = vmatprep.mubr.f32.mxu0 0.0
    %1289 = vmatmul.mubr.f32.gmra.mrb[0].mxu0 %v1185
    %v1290 = vpop.f32.mrb[0].mxu0
    %v1291 = vadd.f32 %v102, %v1290
    %v1292 = vpop.f32.mrb[0].mxu0
    %1293 = vdwg.mxu0
    %v1294 = vsel %vm121, %v1266, -inf
    %1295 = vmax.xlane.f32.xlu0 %v1294
    %v1296 = vpop.xlane.xlu0 %1295
    %v1297 = vsel %vm121, %v1271, -inf
    %1298 = vmax.xlane.f32.xlu0 %v1297
    %v1299 = vpop.xlane.xlu0 %1298
    %v1300 = vsel %vm121, %v1276, -inf
    %1301 = vmax.xlane.f32.xlu0 %v1300
    %v1302 = vpop.xlane.xlu0 %1301
    %v1303 = vsel %vm121, %v1281, -inf
    %1304 = vmax.xlane.f32.xlu0 %v1303
    %v1305 = vpop.xlane.xlu0 %1304
    %v1306 = vsel %vm121, %v1286, -inf
    %1307 = vmax.xlane.f32.xlu0 %v1306
    %v1308 = vpop.xlane.xlu0 %1307
    %v1309 = vsel %vm121, %v1291, -inf
    %1310 = vmax.xlane.f32.xlu0 %v1309
    %v1311 = vpop.xlane.xlu0 %1310
    %v1312 = vsub.f32 %v1266, %v1296
    %v1313 = vsub.f32 %v1271, %v1299
    %v1314 = vsub.f32 %v1276, %v1302
    %v1315 = vsub.f32 %v1281, %v1305
    %v1316 = vsub.f32 %v1286, %v1308
    %v1317 = vsub.f32 %v1291, %v1311
    %v1318 = vmul.f32 %v1312, 1.442695
    %v1319 = vpow.pop %v1318
    %v1320 = vmul.f32 %v1313, 1.442695
    %v1321 = vpow.pop %v1320
    %v1322 = vmul.f32 %v1314, 1.442695
    %v1323 = vpow.pop %v1322
    %v1324 = vmul.f32 %v1315, 1.442695
    %v1325 = vpow.pop %v1324
    %v1326 = vmul.f32 %v1316, 1.442695
    %v1327 = vpow.pop %v1326
    %v1328 = vmul.f32 %v1317, 1.442695
    %v1329 = vpow.pop %v1328
    %1330 = vrot.lane.b32.xlu0 %v436, 48
    %v1331 = vpop.permute.xlu0 %1330
    %1332 = vrot.lane.b32.xlu0 %v441, 48
    %v1333 = vpop.permute.xlu0 %1332
    %1334 = vrot.lane.b32.xlu0 %v446, 48
    %v1335 = vpop.permute.xlu0 %1334
    %1336 = vrot.lane.b32.xlu0 %v451, 48
    %v1337 = vpop.permute.xlu0 %1336
    %1338 = vrot.lane.b32.xlu0 %v456, 48
    %v1339 = vpop.permute.xlu0 %1338
    %1340 = vrot.lane.b32.xlu0 %v461, 48
    %v1341 = vpop.permute.xlu0 %1340
    %v1349 = vsel %vm121, %v1319, 0
    %v1352 = vsel %vm121, %v1321, 0
    %v1355 = vsel %vm121, %v1323, 0
    %v1358 = vsel %vm121, %v1325, 0
    %v1361 = vsel %vm121, %v1327, 0
    %v1364 = vsel %vm121, %v1329, 0
    %1366 = vmatprep.subr.mxu0 0.0
    %1367 = vmatpush1.msra.mxu0 %v1331
    %1368 = vmatprep.subr.mxu0 0.0
    %1369 = vmatpush1.msra.mxu0 %v1333
    %1370 = vmatprep.subr.mxu0 0.0
    %1371 = vmatpush1.msra.mxu0 %v1335
    %1372 = vmatprep.subr.mxu0 0.0
    %1373 = vmatpush1.msra.mxu0 %v1337
    %1374 = vmatprep.subr.mxu0 0.0
    %1375 = vmatpush1.msra.mxu0 %v1339
    %1376 = vmatprep.subr.mxu0 0.0
    %1377 = vmatpush1.msra.mxu0 %v1341
    %1378 = vmatprep.subr.mxu0 0.0
    %1379 = vmatpush1.msra.mxu0 0.0
    %1380 = vmatprep.subr.mxu0 0.0
    %1381 = vmatpush1.msra.mxu0 0.0
    %1382 = vmatprep.subr.mxu0 0.0
    %1383 = vmatpush1.msra.mxu0 0.0
    %1384 = vmatprep.subr.mxu0 0.0
    %1385 = vmatpush1.msra.mxu0 0.0
    %1386 = vmatprep.subr.mxu0 0.0
    %1387 = vmatpush1.msra.mxu0 0.0
    %1388 = vmatprep.subr.mxu0 0.0
    %1389 = vmatpush1.msra.mxu0 0.0
    %1390 = vmatprep.subr.mxu0 0.0
    %1391 = vmatpush1.msra.mxu0 0.0
    %1392 = vmatprep.subr.mxu0 0.0
    %1393 = vmatpush1.msra.mxu0 0.0
    %1394 = vmatprep.subr.mxu0 0.0
    %1395 = vmatpush1.msra.mxu0 0.0
    %1396 = vmatprep.subr.mxu0 0.0
    %1397 = vmatpush1.msra.mxu0 0.0
    %1398 = vmatprep.subr.mxu0 0.0
    %1399 = vmatpush1.msra.mxu0 0.0
    %1400 = vmatprep.subr.mxu0 0.0
    %1401 = vmatpush1.msra.mxu0 0.0
    %1402 = vmatprep.subr.mxu0 0.0
    %1403 = vmatpush1.msra.mxu0 0.0
    %1404 = vmatprep.subr.mxu0 0.0
    %1405 = vmatpush1.msra.mxu0 0.0
    %1406 = vmatprep.subr.mxu0 0.0
    %1407 = vmatpush1.msra.mxu0 0.0
    %1408 = vmatprep.subr.mxu0 0.0
    %1409 = vmatpush1.msra.mxu0 0.0
    %1410 = vmatprep.subr.mxu0 0.0
    %1411 = vmatpush1.msra.mxu0 0.0
    %1412 = vmatprep.subr.mxu0 0.0
    %1413 = vmatpush1.msra.mxu0 0.0
    %1414 = vmatprep.subr.mxu0 0.0
    %1415 = vmatpush1.msra.mxu0 0.0
    %1416 = vmatprep.subr.mxu0 0.0
    %1417 = vmatpush1.msra.mxu0 0.0
    %1418 = vmatprep.subr.mxu0 0.0
    %1419 = vmatpush1.msra.mxu0 0.0
    %1420 = vmatprep.subr.mxu0 0.0
    %1421 = vmatpush1.msra.mxu0 0.0
    %1422 = vmatprep.subr.mxu0 0.0
    %1423 = vmatpush1.msra.mxu0 0.0
    %1424 = vmatprep.subr.mxu0 0.0
    %1425 = vmatpush1.msra.mxu0 0.0
    %1426 = vmatprep.subr.mxu0 0.0
    %1427 = vmatpush1.msra.mxu0 0.0
    %1428 = vmatprep.subr.mxu0 0.0
    %1429 = vmatpush1.msra.mxu0 0.0
    %1430 = vmatprep.mubr.f32.mxu0 0.0
    %1431 = vmatmul.mubr.f32.gmra.mrb[0].mxu0 %v1349
    %v1432 = vpop.f32.mrb[0].mxu0
    %v1433 = vadd.f32 0.0, %v1432
    %v1434 = vpop.f32.mrb[0].mxu0
    %1435 = vmatprep.mubr.f32.mxu0 0.0
    %1436 = vmatmul.mubr.f32.gmra.mrb[0].mxu0 %v1352
    %v1437 = vpop.f32.mrb[0].mxu0
    %v1438 = vadd.f32 0.0, %v1437
    %v1439 = vpop.f32.mrb[0].mxu0
    %1440 = vmatprep.mubr.f32.mxu0 0.0
    %1441 = vmatmul.mubr.f32.gmra.mrb[0].mxu0 %v1355
    %v1442 = vpop.f32.mrb[0].mxu0
    %v1443 = vadd.f32 0.0, %v1442
    %v1444 = vpop.f32.mrb[0].mxu0
    %1445 = vmatprep.mubr.f32.mxu0 0.0
    %1446 = vmatmul.mubr.f32.gmra.mrb[0].mxu0 %v1358
    %v1447 = vpop.f32.mrb[0].mxu0
    %v1448 = vadd.f32 0.0, %v1447
    %v1449 = vpop.f32.mrb[0].mxu0
    %1450 = vmatprep.mubr.f32.mxu0 0.0
    %1451 = vmatmul.mubr.f32.gmra.mrb[0].mxu0 %v1361
    %v1452 = vpop.f32.mrb[0].mxu0
    %v1453 = vadd.f32 0.0, %v1452
    %v1454 = vpop.f32.mrb[0].mxu0
    %1455 = vmatprep.mubr.f32.mxu0 0.0
    %1456 = vmatmul.mubr.f32.gmra.mrb[0].mxu0 %v1364
    %v1457 = vpop.f32.mrb[0].mxu0
    %v1458 = vadd.f32 0.0, %v1457
    %v1459 = vpop.f32.mrb[0].mxu0
    %1460 = vdwg.mxu0
    %v1461 = vsel %vm121, %v1319, 0.0
    %1462 = vadd.xlane.f32.xlu0 %v1461
    %v1463 = vpop.xlane.xlu0 %1462
    %v1464 = vsel %vm121, %v1321, 0.0
    %1465 = vadd.xlane.f32.xlu0 %v1464
    %v1466 = vpop.xlane.xlu0 %1465
    %v1467 = vsel %vm121, %v1323, 0.0
    %1468 = vadd.xlane.f32.xlu0 %v1467
    %v1469 = vpop.xlane.xlu0 %1468
    %v1470 = vsel %vm121, %v1325, 0.0
    %1471 = vadd.xlane.f32.xlu0 %v1470
    %v1472 = vpop.xlane.xlu0 %1471
    %v1473 = vsel %vm121, %v1327, 0.0
    %1474 = vadd.xlane.f32.xlu0 %v1473
    %v1475 = vpop.xlane.xlu0 %1474
    %v1476 = vsel %vm121, %v1329, 0.0
    %1477 = vadd.xlane.f32.xlu0 %v1476
    %v1478 = vpop.xlane.xlu0 %1477
    %v1479 = vrcp.pop %v1463
    %v1480 = vmul.f32 1.0, %v1479
    %v1481 = vrcp.pop %v1466
    %v1482 = vmul.f32 1.0, %v1481
    %v1483 = vrcp.pop %v1469
    %v1484 = vmul.f32 1.0, %v1483
    %v1485 = vrcp.pop %v1472
    %v1486 = vmul.f32 1.0, %v1485
    %v1487 = vrcp.pop %v1475
    %v1488 = vmul.f32 1.0, %v1487
    %v1489 = vrcp.pop %v1478
    %v1490 = vmul.f32 1.0, %v1489
    %v1491 = vmul.f32 %v1433, %v1480
    %v1492 = vmul.f32 %v1438, %v1482
    %v1493 = vmul.f32 %v1443, %v1484
    %v1494 = vmul.f32 %v1448, %v1486
    %v1495 = vmul.f32 %v1453, %v1488
    %v1496 = vmul.f32 %v1458, %v1490
    %1497 = vrot.lane.b32.xlu0 %v436, 104
    %v1498 = vpop.permute.xlu0 %1497
    %1499 = vrot.lane.b32.xlu0 %v441, 104
    %v1500 = vpop.permute.xlu0 %1499
    %1501 = vrot.lane.b32.xlu0 %v446, 104
    %v1502 = vpop.permute.xlu0 %1501
    %1503 = vrot.lane.b32.xlu0 %v451, 104
    %v1504 = vpop.permute.xlu0 %1503
    %1505 = vrot.lane.b32.xlu0 %v456, 104
    %v1506 = vpop.permute.xlu0 %1505
    %1507 = vrot.lane.b32.xlu0 %v461, 104
    %v1508 = vpop.permute.xlu0 %1507
    %1509 = vrot.lane.b32.xlu0 %v436, 72
    %v1510 = vpop.permute.xlu0 %1509
    %1511 = vrot.lane.b32.xlu0 %v441, 72
    %v1512 = vpop.permute.xlu0 %1511
    %1513 = vrot.lane.b32.xlu0 %v446, 72
    %v1514 = vpop.permute.xlu0 %1513
    %1515 = vrot.lane.b32.xlu0 %v451, 72
    %v1516 = vpop.permute.xlu0 %1515
    %1517 = vrot.lane.b32.xlu0 %v456, 72
    %v1518 = vpop.permute.xlu0 %1517
    %1519 = vrot.lane.b32.xlu0 %v461, 72
    %v1520 = vpop.permute.xlu0 %1519
    %v1521 = vsel %vm482, %v1498, 0
    %v1523 = vsel %vm482, %v1500, 0
    %v1525 = vsel %vm482, %v1502, 0
    %v1527 = vsel %vm482, %v1504, 0
    %v1529 = vsel %vm482, %v1506, 0
    %v1531 = vsel %vm482, %v1508, 0
    %v1533 = vsel %vm482, %v1510, 0
    %v1535 = vsel %vm482, %v1512, 0
    %v1537 = vsel %vm482, %v1514, 0
    %v1539 = vsel %vm482, %v1516, 0
    %v1541 = vsel %vm482, %v1518, 0
    %v1543 = vsel %vm482, %v1520, 0
    %1545 = vmatprep.subr.mxu0 0.0
    %1546 = vmatpush1.xpose.msra.mxu0 %v1533
    %1547 = vmatprep.subr.mxu0 0.0
    %1548 = vmatpush1.xpose.msra.mxu0 %v1535
    %1549 = vmatprep.subr.mxu0 0.0
    %1550 = vmatpush1.xpose.msra.mxu0 %v1537
    %1551 = vmatprep.subr.mxu0 0.0
    %1552 = vmatpush1.xpose.msra.mxu0 %v1539
    %1553 = vmatprep.subr.mxu0 0.0
    %1554 = vmatpush1.xpose.msra.mxu0 %v1541
    %1555 = vmatprep.subr.mxu0 0.0
    %1556 = vmatpush1.xpose.msra.mxu0 %v1543
    %1557 = vmatprep.subr.mxu0 0.0
    %1558 = vmatpush1.xpose.msra.mxu0 0.0
    %1559 = vmatprep.subr.mxu0 0.0
    %1560 = vmatpush1.xpose.msra.mxu0 0.0
    %1561 = vmatprep.subr.mxu0 0.0
    %1562 = vmatpush1.xpose.msra.mxu0 0.0
    %1563 = vmatprep.subr.mxu0 0.0
    %1564 = vmatpush1.xpose.msra.mxu0 0.0
    %1565 = vmatprep.subr.mxu0 0.0
    %1566 = vmatpush1.xpose.msra.mxu0 0.0
    %1567 = vmatprep.subr.mxu0 0.0
    %1568 = vmatpush1.xpose.msra.mxu0 0.0
    %1569 = vmatprep.subr.mxu0 0.0
    %1570 = vmatpush1.xpose.msra.mxu0 0.0
    %1571 = vmatprep.subr.mxu0 0.0
    %1572 = vmatpush1.xpose.msra.mxu0 0.0
    %1573 = vmatprep.subr.mxu0 0.0
    %1574 = vmatpush1.xpose.msra.mxu0 0.0
    %1575 = vmatprep.subr.mxu0 0.0
    %1576 = vmatpush1.xpose.msra.mxu0 0.0
    %1577 = vmatprep.subr.mxu0 0.0
    %1578 = vmatpush1.xpose.msra.mxu0 0.0
    %1579 = vmatprep.subr.mxu0 0.0
    %1580 = vmatpush1.xpose.msra.mxu0 0.0
    %1581 = vmatprep.subr.mxu0 0.0
    %1582 = vmatpush1.xpose.msra.mxu0 0.0
    %1583 = vmatprep.subr.mxu0 0.0
    %1584 = vmatpush1.xpose.msra.mxu0 0.0
    %1585 = vmatprep.subr.mxu0 0.0
    %1586 = vmatpush1.xpose.msra.mxu0 0.0
    %1587 = vmatprep.subr.mxu0 0.0
    %1588 = vmatpush1.xpose.msra.mxu0 0.0
    %1589 = vmatprep.subr.mxu0 0.0
    %1590 = vmatpush1.xpose.msra.mxu0 0.0
    %1591 = vmatprep.subr.mxu0 0.0
    %1592 = vmatpush1.xpose.msra.mxu0 0.0
    %1593 = vmatprep.subr.mxu0 0.0
    %1594 = vmatpush1.xpose.msra.mxu0 0.0
    %1595 = vmatprep.subr.mxu0 0.0
    %1596 = vmatpush1.xpose.msra.mxu0 0.0
    %1597 = vmatprep.subr.mxu0 0.0
    %1598 = vmatpush1.xpose.msra.mxu0 0.0
    %1599 = vmatprep.subr.mxu0 0.0
    %1600 = vmatpush1.xpose.msra.mxu0 0.0
    %1601 = vmatprep.subr.mxu0 0.0
    %1602 = vmatpush1.xpose.msra.mxu0 0.0
    %1603 = vmatprep.subr.mxu0 0.0
    %1604 = vmatpush1.xpose.msra.mxu0 0.0
    %1605 = vmatprep.subr.mxu0 0.0
    %1606 = vmatpush1.xpose.msra.mxu0 0.0
    %1607 = vmatprep.subr.mxu0 0.0
    %1608 = vmatpush1.xpose.msra.mxu0 0.0
    %1609 = vmatprep.mubr.f32.mxu0 0.0
    %1610 = vmatmul.mubr.f32.gmra.mrb[0].mxu0 %v1521
    %v1611 = vpop.f32.mrb[0].mxu0
    %v1612 = vadd.f32 %v97, %v1611
    %v1613 = vpop.f32.mrb[0].mxu0
    %1614 = vmatprep.mubr.f32.mxu0 0.0
    %1615 = vmatmul.mubr.f32.gmra.mrb[0].mxu0 %v1523
    %v1616 = vpop.f32.mrb[0].mxu0
    %v1617 = vadd.f32 %v98, %v1616
    %v1618 = vpop.f32.mrb[0].mxu0
    %1619 = vmatprep.mubr.f32.mxu0 0.0
    %1620 = vmatmul.mubr.f32.gmra.mrb[0].mxu0 %v1525
    %v1621 = vpop.f32.mrb[0].mxu0
    %v1622 = vadd.f32 %v99, %v1621
    %v1623 = vpop.f32.mrb[0].mxu0
    %1624 = vmatprep.mubr.f32.mxu0 0.0
    %1625 = vmatmul.mubr.f32.gmra.mrb[0].mxu0 %v1527
    %v1626 = vpop.f32.mrb[0].mxu0
    %v1627 = vadd.f32 %v100, %v1626
    %v1628 = vpop.f32.mrb[0].mxu0
    %1629 = vmatprep.mubr.f32.mxu0 0.0
    %1630 = vmatmul.mubr.f32.gmra.mrb[0].mxu0 %v1529
    %v1631 = vpop.f32.mrb[0].mxu0
    %v1632 = vadd.f32 %v101, %v1631
    %v1633 = vpop.f32.mrb[0].mxu0
    %1634 = vmatprep.mubr.f32.mxu0 0.0
    %1635 = vmatmul.mubr.f32.gmra.mrb[0].mxu0 %v1531
    %v1636 = vpop.f32.mrb[0].mxu0
    %v1637 = vadd.f32 %v102, %v1636
    %v1638 = vpop.f32.mrb[0].mxu0
    %1639 = vdwg.mxu0
    %v1640 = vsel %vm121, %v1612, -inf
    %1641 = vmax.xlane.f32.xlu0 %v1640
    %v1642 = vpop.xlane.xlu0 %1641
    %v1643 = vsel %vm121, %v1617, -inf
    %1644 = vmax.xlane.f32.xlu0 %v1643
    %v1645 = vpop.xlane.xlu0 %1644
    %v1646 = vsel %vm121, %v1622, -inf
    %1647 = vmax.xlane.f32.xlu0 %v1646
    %v1648 = vpop.xlane.xlu0 %1647
    %v1649 = vsel %vm121, %v1627, -inf
    %1650 = vmax.xlane.f32.xlu0 %v1649
    %v1651 = vpop.xlane.xlu0 %1650
    %v1652 = vsel %vm121, %v1632, -inf
    %1653 = vmax.xlane.f32.xlu0 %v1652
    %v1654 = vpop.xlane.xlu0 %1653
    %v1655 = vsel %vm121, %v1637, -inf
    %1656 = vmax.xlane.f32.xlu0 %v1655
    %v1657 = vpop.xlane.xlu0 %1656
    %v1658 = vsub.f32 %v1612, %v1642
    %v1659 = vsub.f32 %v1617, %v1645
    %v1660 = vsub.f32 %v1622, %v1648
    %v1661 = vsub.f32 %v1627, %v1651
    %v1662 = vsub.f32 %v1632, %v1654
    %v1663 = vsub.f32 %v1637, %v1657
    %v1664 = vmul.f32 %v1658, 1.442695
    %v1665 = vpow.pop %v1664
    %v1666 = vmul.f32 %v1659, 1.442695
    %v1667 = vpow.pop %v1666
    %v1668 = vmul.f32 %v1660, 1.442695
    %v1669 = vpow.pop %v1668
    %v1670 = vmul.f32 %v1661, 1.442695
    %v1671 = vpow.pop %v1670
    %v1672 = vmul.f32 %v1662, 1.442695
    %v1673 = vpow.pop %v1672
    %v1674 = vmul.f32 %v1663, 1.442695
    %v1675 = vpow.pop %v1674
    %1676 = vrot.lane.b32.xlu0 %v436, 40
    %v1677 = vpop.permute.xlu0 %1676
    %1678 = vrot.lane.b32.xlu0 %v441, 40
    %v1679 = vpop.permute.xlu0 %1678
    %1680 = vrot.lane.b32.xlu0 %v446, 40
    %v1681 = vpop.permute.xlu0 %1680
    %1682 = vrot.lane.b32.xlu0 %v451, 40
    %v1683 = vpop.permute.xlu0 %1682
    %1684 = vrot.lane.b32.xlu0 %v456, 40
    %v1685 = vpop.permute.xlu0 %1684
    %1686 = vrot.lane.b32.xlu0 %v461, 40
    %v1687 = vpop.permute.xlu0 %1686
    %v1695 = vsel %vm121, %v1665, 0
    %v1698 = vsel %vm121, %v1667, 0
    %v1701 = vsel %vm121, %v1669, 0
    %v1704 = vsel %vm121, %v1671, 0
    %v1707 = vsel %vm121, %v1673, 0
    %v1710 = vsel %vm121, %v1675, 0
    %1712 = vmatprep.subr.mxu0 0.0
    %1713 = vmatpush1.msra.mxu0 %v1677
    %1714 = vmatprep.subr.mxu0 0.0
    %1715 = vmatpush1.msra.mxu0 %v1679
    %1716 = vmatprep.subr.mxu0 0.0
    %1717 = vmatpush1.msra.mxu0 %v1681
    %1718 = vmatprep.subr.mxu0 0.0
    %1719 = vmatpush1.msra.mxu0 %v1683
    %1720 = vmatprep.subr.mxu0 0.0
    %1721 = vmatpush1.msra.mxu0 %v1685
    %1722 = vmatprep.subr.mxu0 0.0
    %1723 = vmatpush1.msra.mxu0 %v1687
    %1724 = vmatprep.subr.mxu0 0.0
    %1725 = vmatpush1.msra.mxu0 0.0
    %1726 = vmatprep.subr.mxu0 0.0
    %1727 = vmatpush1.msra.mxu0 0.0
    %1728 = vmatprep.subr.mxu0 0.0
    %1729 = vmatpush1.msra.mxu0 0.0
    %1730 = vmatprep.subr.mxu0 0.0
    %1731 = vmatpush1.msra.mxu0 0.0
    %1732 = vmatprep.subr.mxu0 0.0
    %1733 = vmatpush1.msra.mxu0 0.0
    %1734 = vmatprep.subr.mxu0 0.0
    %1735 = vmatpush1.msra.mxu0 0.0
    %1736 = vmatprep.subr.mxu0 0.0
    %1737 = vmatpush1.msra.mxu0 0.0
    %1738 = vmatprep.subr.mxu0 0.0
    %1739 = vmatpush1.msra.mxu0 0.0
    %1740 = vmatprep.subr.mxu0 0.0
    %1741 = vmatpush1.msra.mxu0 0.0
    %1742 = vmatprep.subr.mxu0 0.0
    %1743 = vmatpush1.msra.mxu0 0.0
    %1744 = vmatprep.subr.mxu0 0.0
    %1745 = vmatpush1.msra.mxu0 0.0
    %1746 = vmatprep.subr.mxu0 0.0
    %1747 = vmatpush1.msra.mxu0 0.0
    %1748 = vmatprep.subr.mxu0 0.0
    %1749 = vmatpush1.msra.mxu0 0.0
    %1750 = vmatprep.subr.mxu0 0.0
    %1751 = vmatpush1.msra.mxu0 0.0
    %1752 = vmatprep.subr.mxu0 0.0
    %1753 = vmatpush1.msra.mxu0 0.0
    %1754 = vmatprep.subr.mxu0 0.0
    %1755 = vmatpush1.msra.mxu0 0.0
    %1756 = vmatprep.subr.mxu0 0.0
    %1757 = vmatpush1.msra.mxu0 0.0
    %1758 = vmatprep.subr.mxu0 0.0
    %1759 = vmatpush1.msra.mxu0 0.0
    %1760 = vmatprep.subr.mxu0 0.0
    %1761 = vmatpush1.msra.mxu0 0.0
    %1762 = vmatprep.subr.mxu0 0.0
    %1763 = vmatpush1.msra.mxu0 0.0
    %1764 = vmatprep.subr.mxu0 0.0
    %1765 = vmatpush1.msra.mxu0 0.0
    %1766 = vmatprep.subr.mxu0 0.0
    %1767 = vmatpush1.msra.mxu0 0.0
    %1768 = vmatprep.subr.mxu0 0.0
    %1769 = vmatpush1.msra.mxu0 0.0
    %1770 = vmatprep.subr.mxu0 0.0
    %1771 = vmatpush1.msra.mxu0 0.0
    %1772 = vmatprep.subr.mxu0 0.0
    %1773 = vmatpush1.msra.mxu0 0.0
    %1774 = vmatprep.subr.mxu0 0.0
    %1775 = vmatpush1.msra.mxu0 0.0
    %1776 = vmatprep.mubr.f32.mxu0 0.0
    %1777 = vmatmul.mubr.f32.gmra.mrb[0].mxu0 %v1695
    %v1778 = vpop.f32.mrb[0].mxu0
    %v1779 = vadd.f32 0.0, %v1778
    %v1780 = vpop.f32.mrb[0].mxu0
    %1781 = vmatprep.mubr.f32.mxu0 0.0
    %1782 = vmatmul.mubr.f32.gmra.mrb[0].mxu0 %v1698
    %v1783 = vpop.f32.mrb[0].mxu0
    %v1784 = vadd.f32 0.0, %v1783
    %v1785 = vpop.f32.mrb[0].mxu0
    %1786 = vmatprep.mubr.f32.mxu0 0.0
    %1787 = vmatmul.mubr.f32.gmra.mrb[0].mxu0 %v1701
    %v1788 = vpop.f32.mrb[0].mxu0
    %v1789 = vadd.f32 0.0, %v1788
    %v1790 = vpop.f32.mrb[0].mxu0
    %1791 = vmatprep.mubr.f32.mxu0 0.0
    %1792 = vmatmul.mubr.f32.gmra.mrb[0].mxu0 %v1704
    %v1793 = vpop.f32.mrb[0].mxu0
    %v1794 = vadd.f32 0.0, %v1793
    %v1795 = vpop.f32.mrb[0].mxu0
    %1796 = vmatprep.mubr.f32.mxu0 0.0
    %1797 = vmatmul.mubr.f32.gmra.mrb[0].mxu0 %v1707
    %v1798 = vpop.f32.mrb[0].mxu0
    %v1799 = vadd.f32 0.0, %v1798
    %v1800 = vpop.f32.mrb[0].mxu0
    %1801 = vmatprep.mubr.f32.mxu0 0.0
    %1802 = vmatmul.mubr.f32.gmra.mrb[0].mxu0 %v1710
    %v1803 = vpop.f32.mrb[0].mxu0
    %v1804 = vadd.f32 0.0, %v1803
    %v1805 = vpop.f32.mrb[0].mxu0
    %1806 = vdwg.mxu0
    %v1807 = vsel %vm121, %v1665, 0.0
    %1808 = vadd.xlane.f32.xlu0 %v1807
    %v1809 = vpop.xlane.xlu0 %1808
    %v1810 = vsel %vm121, %v1667, 0.0
    %1811 = vadd.xlane.f32.xlu0 %v1810
    %v1812 = vpop.xlane.xlu0 %1811
    %v1813 = vsel %vm121, %v1669, 0.0
    %1814 = vadd.xlane.f32.xlu0 %v1813
    %v1815 = vpop.xlane.xlu0 %1814
    %v1816 = vsel %vm121, %v1671, 0.0
    %1817 = vadd.xlane.f32.xlu0 %v1816
    %v1818 = vpop.xlane.xlu0 %1817
    %v1819 = vsel %vm121, %v1673, 0.0
    %1820 = vadd.xlane.f32.xlu0 %v1819
    %v1821 = vpop.xlane.xlu0 %1820
    %v1822 = vsel %vm121, %v1675, 0.0
    %1823 = vadd.xlane.f32.xlu0 %v1822
    %v1824 = vpop.xlane.xlu0 %1823
    %v1825 = vrcp.pop %v1809
    %v1826 = vmul.f32 1.0, %v1825
    %v1827 = vrcp.pop %v1812
    %v1828 = vmul.f32 1.0, %v1827
    %v1829 = vrcp.pop %v1815
    %v1830 = vmul.f32 1.0, %v1829
    %v1831 = vrcp.pop %v1818
    %v1832 = vmul.f32 1.0, %v1831
    %v1833 = vrcp.pop %v1821
    %v1834 = vmul.f32 1.0, %v1833
    %v1835 = vrcp.pop %v1824
    %v1836 = vmul.f32 1.0, %v1835
    %v1837 = vmul.f32 %v1779, %v1826
    %v1838 = vmul.f32 %v1784, %v1828
    %v1839 = vmul.f32 %v1789, %v1830
    %v1840 = vmul.f32 %v1794, %v1832
    %v1841 = vmul.f32 %v1799, %v1834
    %v1842 = vmul.f32 %v1804, %v1836
    %1849 = vrot.lane.b32.xlu0 %v1145, 8
    %v1850 = vpop.permute.xlu0 %1849
    %1851 = vrot.lane.b32.xlu0 %v1146, 8
    %v1852 = vpop.permute.xlu0 %1851
    %1853 = vrot.lane.b32.xlu0 %v1147, 8
    %v1854 = vpop.permute.xlu0 %1853
    %1855 = vrot.lane.b32.xlu0 %v1148, 8
    %v1856 = vpop.permute.xlu0 %1855
    %1857 = vrot.lane.b32.xlu0 %v1149, 8
    %v1858 = vpop.permute.xlu0 %1857
    %1859 = vrot.lane.b32.xlu0 %v1150, 8
    %v1860 = vpop.permute.xlu0 %1859
    %1873 = vrot.lane.b32.xlu0 %v1491, 16
    %v1874 = vpop.permute.xlu0 %1873
    %1875 = vrot.lane.b32.xlu0 %v1492, 16
    %v1876 = vpop.permute.xlu0 %1875
    %1877 = vrot.lane.b32.xlu0 %v1493, 16
    %v1878 = vpop.permute.xlu0 %1877
    %1879 = vrot.lane.b32.xlu0 %v1494, 16
    %v1880 = vpop.permute.xlu0 %1879
    %1881 = vrot.lane.b32.xlu0 %v1495, 16
    %v1882 = vpop.permute.xlu0 %1881
    %1883 = vrot.lane.b32.xlu0 %v1496, 16
    %v1884 = vpop.permute.xlu0 %1883
    %1897 = vrot.lane.b32.xlu0 %v1837, 24
    %v1898 = vpop.permute.xlu0 %1897
    %1899 = vrot.lane.b32.xlu0 %v1838, 24
    %v1900 = vpop.permute.xlu0 %1899
    %1901 = vrot.lane.b32.xlu0 %v1839, 24
    %v1902 = vpop.permute.xlu0 %1901
    %1903 = vrot.lane.b32.xlu0 %v1840, 24
    %v1904 = vpop.permute.xlu0 %1903
    %1905 = vrot.lane.b32.xlu0 %v1841, 24
    %v1906 = vpop.permute.xlu0 %1905
    %1907 = vrot.lane.b32.xlu0 %v1842, 24
    %v1908 = vpop.permute.xlu0 %1907
    %v1915 = vsel %vm482, %v799, %v1850
    %v1916 = vsel %vm482, %v800, %v1852
    %v1917 = vsel %vm482, %v801, %v1854
    %v1918 = vsel %vm482, %v802, %v1856
    %v1919 = vsel %vm482, %v803, %v1858
    %v1920 = vsel %vm482, %v804, %v1860
    %vm1921 = vcmask 130048
    %v1922 = vsel %vm1921, %v1915, %v1874
    %v1923 = vsel %vm1921, %v1916, %v1876
    %v1924 = vsel %vm1921, %v1917, %v1878
    %v1925 = vsel %vm1921, %v1918, %v1880
    %v1926 = vsel %vm1921, %v1919, %v1882
    %v1927 = vsel %vm1921, %v1920, %v1884
    %vm1928 = vcmask 195584
    %v1929 = vsel %vm1928, %v1922, %v1898
    %v1930 = vsel %vm1928, %v1923, %v1900
    %v1931 = vsel %vm1928, %v1924, %v1902
    %v1932 = vsel %vm1928, %v1925, %v1904
    %v1933 = vsel %vm1928, %v1926, %v1906
    %v1934 = vsel %vm1928, %v1927, %v1908
    %v1935 = vld [vmem:[%s2 + $0x50] sm:$0xff]
    %v1936 = vld [vmem:[%s2 + $0x58] sm:$0xff]
    %v1937 = vld [vmem:[%s2 + $0x60] sm:$0xff]
    %v1938 = vld [vmem:[%s2 + $0x68] sm:$0xff]
    %v1939 = vlaneseq
    %v1940 = vshrl.u32 %v1939, 7
    %v1941 = vsub.s32 0, %v1940
    %v1942 = vrot.slane %v238, %v1941
    %v1944 = vsel %vm243, %v1929, 0
    %v1947 = vsel %vm243, %v1930, 0
    %v1950 = vsel %vm243, %v1931, 0
    %v1953 = vsel %vm243, %v1932, 0
    %v1956 = vsel %vm243, %v1933, 0
    %v1959 = vsel %vm243, %v1934, 0
    %1961 = vmatprep.subr.mxu0 0.0
    %1962 = vmatpush1.msra.mxu0 %v1935
    %1963 = vmatprep.subr.mxu0 0.0
    %1964 = vmatpush1.msra.mxu0 %v1936
    %1965 = vmatprep.subr.mxu0 0.0
    %1966 = vmatpush1.msra.mxu0 %v1937
    %1967 = vmatprep.subr.mxu0 0.0
    %1968 = vmatpush1.msra.mxu0 %v1938
    %1969 = vmatprep.subr.mxu0 0.0
    %1970 = vmatpush1.msra.mxu0 0.0
    %1971 = vmatprep.subr.mxu0 0.0
    %1972 = vmatpush1.msra.mxu0 0.0
    %1973 = vmatprep.subr.mxu0 0.0
    %1974 = vmatpush1.msra.mxu0 0.0
    %1975 = vmatprep.subr.mxu0 0.0
    %1976 = vmatpush1.msra.mxu0 0.0
    %1977 = vmatprep.subr.mxu0 0.0
    %1978 = vmatpush1.msra.mxu0 0.0
    %1979 = vmatprep.subr.mxu0 0.0
    %1980 = vmatpush1.msra.mxu0 0.0
    %1981 = vmatprep.subr.mxu0 0.0
    %1982 = vmatpush1.msra.mxu0 0.0
    %1983 = vmatprep.subr.mxu0 0.0
    %1984 = vmatpush1.msra.mxu0 0.0
    %1985 = vmatprep.subr.mxu0 0.0
    %1986 = vmatpush1.msra.mxu0 0.0
    %1987 = vmatprep.subr.mxu0 0.0
    %1988 = vmatpush1.msra.mxu0 0.0
    %1989 = vmatprep.subr.mxu0 0.0
    %1990 = vmatpush1.msra.mxu0 0.0
    %1991 = vmatprep.subr.mxu0 0.0
    %1992 = vmatpush1.msra.mxu0 0.0
    %1993 = vmatprep.subr.mxu0 0.0
    %1994 = vmatpush1.msra.mxu0 0.0
    %1995 = vmatprep.subr.mxu0 0.0
    %1996 = vmatpush1.msra.mxu0 0.0
    %1997 = vmatprep.subr.mxu0 0.0
    %1998 = vmatpush1.msra.mxu0 0.0
    %1999 = vmatprep.subr.mxu0 0.0
    %2000 = vmatpush1.msra.mxu0 0.0
    %2001 = vmatprep.subr.mxu0 0.0
    %2002 = vmatpush1.msra.mxu0 0.0
    %2003 = vmatprep.subr.mxu0 0.0
    %2004 = vmatpush1.msra.mxu0 0.0
    %2005 = vmatprep.subr.mxu0 0.0
    %2006 = vmatpush1.msra.mxu0 0.0
    %2007 = vmatprep.subr.mxu0 0.0
    %2008 = vmatpush1.msra.mxu0 0.0
    %2009 = vmatprep.subr.mxu0 0.0
    %2010 = vmatpush1.msra.mxu0 0.0
    %2011 = vmatprep.subr.mxu0 0.0
    %2012 = vmatpush1.msra.mxu0 0.0
    %2013 = vmatprep.subr.mxu0 0.0
    %2014 = vmatpush1.msra.mxu0 0.0
    %2015 = vmatprep.subr.mxu0 0.0
    %2016 = vmatpush1.msra.mxu0 0.0
    %2017 = vmatprep.subr.mxu0 0.0
    %2018 = vmatpush1.msra.mxu0 0.0
    %2019 = vmatprep.subr.mxu0 0.0
    %2020 = vmatpush1.msra.mxu0 0.0
    %2021 = vmatprep.subr.mxu0 0.0
    %2022 = vmatpush1.msra.mxu0 0.0
    %2023 = vmatprep.subr.mxu0 0.0
    %2024 = vmatpush1.msra.mxu0 0.0
    %2025 = vmatprep.mubr.f32.mxu0 0.0
    %2026 = vmatmul.mubr.f32.gmra.mrb[0].mxu0 %v1944
    %v2027 = vpop.f32.mrb[0].mxu0
    %v2028 = vadd.f32 %v1942, %v2027
    %v2029 = vpop.f32.mrb[0].mxu0
    %2030 = vmatprep.mubr.f32.mxu0 0.0
    %2031 = vmatmul.mubr.f32.gmra.mrb[0].mxu0 %v1947
    %v2032 = vpop.f32.mrb[0].mxu0
    %v2033 = vadd.f32 %v1942, %v2032
    %v2034 = vpop.f32.mrb[0].mxu0
    %2035 = vmatprep.mubr.f32.mxu0 0.0
    %2036 = vmatmul.mubr.f32.gmra.mrb[0].mxu0 %v1950
    %v2037 = vpop.f32.mrb[0].mxu0
    %v2038 = vadd.f32 %v1942, %v2037
    %v2039 = vpop.f32.mrb[0].mxu0
    %2040 = vmatprep.mubr.f32.mxu0 0.0
    %2041 = vmatmul.mubr.f32.gmra.mrb[0].mxu0 %v1953
    %v2042 = vpop.f32.mrb[0].mxu0
    %v2043 = vadd.f32 %v1942, %v2042
    %v2044 = vpop.f32.mrb[0].mxu0
    %2045 = vmatprep.mubr.f32.mxu0 0.0
    %2046 = vmatmul.mubr.f32.gmra.mrb[0].mxu0 %v1956
    %v2047 = vpop.f32.mrb[0].mxu0
    %v2048 = vadd.f32 %v1942, %v2047
    %v2049 = vpop.f32.mrb[0].mxu0
    %2050 = vmatprep.mubr.f32.mxu0 0.0
    %2051 = vmatmul.mubr.f32.gmra.mrb[0].mxu0 %v1959
    %v2052 = vpop.f32.mrb[0].mxu0
    %v2053 = vadd.f32 %v1942, %v2052
    %v2054 = vpop.f32.mrb[0].mxu0
    %2055 = vdwg.mxu0
    %v2056 = vadd.f32 %v207, %v2028
    %v2057 = vadd.f32 %v212, %v2033
    %v2058 = vadd.f32 %v217, %v2038
    %v2059 = vadd.f32 %v222, %v2043
    %v2060 = vadd.f32 %v227, %v2048
    %v2061 = vadd.f32 %v232, %v2053
    %v2062 = vsel %vm243, %v2056, 0.0
    %2063 = vadd.xlane.f32.xlu0 %v2062
    %v2064 = vpop.xlane.xlu0 %2063
    %v2065 = vsel %vm243, %v2057, 0.0
    %2066 = vadd.xlane.f32.xlu0 %v2065
    %v2067 = vpop.xlane.xlu0 %2066
    %v2068 = vsel %vm243, %v2058, 0.0
    %2069 = vadd.xlane.f32.xlu0 %v2068
    %v2070 = vpop.xlane.xlu0 %2069
    %v2071 = vsel %vm243, %v2059, 0.0
    %2072 = vadd.xlane.f32.xlu0 %v2071
    %v2073 = vpop.xlane.xlu0 %2072
    %v2074 = vsel %vm243, %v2060, 0.0
    %2075 = vadd.xlane.f32.xlu0 %v2074
    %v2076 = vpop.xlane.xlu0 %2075
    %v2077 = vsel %vm243, %v2061, 0.0
    %2078 = vadd.xlane.f32.xlu0 %v2077
    %v2079 = vpop.xlane.xlu0 %2078
    %v2080 = vmul.f32 %v2064, %v262
    %v2081 = vmul.f32 %v2067, %v262
    %v2082 = vmul.f32 %v2070, %v262
    %v2083 = vmul.f32 %v2073, %v262
    %v2084 = vmul.f32 %v2076, %v262
    %v2085 = vmul.f32 %v2079, %v262
    %v2086 = vsub.f32 %v2056, %v2080
    %v2087 = vsub.f32 %v2057, %v2081
    %v2088 = vsub.f32 %v2058, %v2082
    %v2089 = vsub.f32 %v2059, %v2083
    %v2090 = vsub.f32 %v2060, %v2084
    %v2091 = vsub.f32 %v2061, %v2085
    %v2092 = vmul.f32 %v2086, %v2086
    %v2093 = vmul.f32 %v2087, %v2087
    %v2094 = vmul.f32 %v2088, %v2088
    %v2095 = vmul.f32 %v2089, %v2089
    %v2096 = vmul.f32 %v2090, %v2090
    %v2097 = vmul.f32 %v2091, %v2091
    %v2098 = vsel %vm243, %v2092, 0.0
    %2099 = vadd.xlane.f32.xlu0 %v2098
    %v2100 = vpop.xlane.xlu0 %2099
    %v2101 = vsel %vm243, %v2093, 0.0
    %2102 = vadd.xlane.f32.xlu0 %v2101
    %v2103 = vpop.xlane.xlu0 %2102
    %v2104 = vsel %vm243, %v2094, 0.0
    %2105 = vadd.xlane.f32.xlu0 %v2104
    %v2106 = vpop.xlane.xlu0 %2105
    %v2107 = vsel %vm243, %v2095, 0.0
    %2108 = vadd.xlane.f32.xlu0 %v2107
    %v2109 = vpop.xlane.xlu0 %2108
    %v2110 = vsel %vm243, %v2096, 0.0
    %2111 = vadd.xlane.f32.xlu0 %v2110
    %v2112 = vpop.xlane.xlu0 %2111
    %v2113 = vsel %vm243, %v2097, 0.0
    %2114 = vadd.xlane.f32.xlu0 %v2113
    %v2115 = vpop.xlane.xlu0 %2114
    %v2116 = vmul.f32 %v2100, %v262
    %v2117 = vmul.f32 %v2103, %v262
    %v2118 = vmul.f32 %v2106, %v262
    %v2119 = vmul.f32 %v2109, %v262
    %v2120 = vmul.f32 %v2112, %v262
    %v2121 = vmul.f32 %v2115, %v262
    %v2122 = vadd.f32 %v2116, 1e-06
    %v2123 = vadd.f32 %v2117, 1e-06
    %v2124 = vadd.f32 %v2118, 1e-06
    %v2125 = vadd.f32 %v2119, 1e-06
    %v2126 = vadd.f32 %v2120, 1e-06
    %v2127 = vadd.f32 %v2121, 1e-06
    %v2128 = vrsqrt.pop %v2122
    %v2129 = vrsqrt.pop %v2123
    %v2130 = vrsqrt.pop %v2124
    %v2131 = vrsqrt.pop %v2125
    %v2132 = vrsqrt.pop %v2126
    %v2133 = vrsqrt.pop %v2127
    %v2134 = vmul.f32 %v2086, %v2128
    %v2135 = vmul.f32 %v2087, %v2129
    %v2136 = vmul.f32 %v2088, %v2130
    %v2137 = vmul.f32 %v2089, %v2131
    %v2138 = vmul.f32 %v2090, %v2132
    %v2139 = vmul.f32 %v2091, %v2133
    %v2140 = vlaneseq
    %v2141 = vshrl.u32 %v2140, 7
    %v2142 = vsub.s32 0, %v2141
    %v2143 = vrot.slane %v239, %v2142
    %v2144 = vmul.f32 %v2134, %v2143
    %v2145 = vmul.f32 %v2135, %v2143
    %v2146 = vmul.f32 %v2136, %v2143
    %v2147 = vmul.f32 %v2137, %v2143
    %v2148 = vmul.f32 %v2138, %v2143
    %v2149 = vmul.f32 %v2139, %v2143
    %v2150 = vlaneseq
    %v2151 = vshrl.u32 %v2150, 7
    %v2152 = vsub.s32 0, %v2151
    %v2153 = vrot.slane %v240, %v2152
    %v2154 = vadd.f32 %v2144, %v2153
    %v2155 = vadd.f32 %v2145, %v2153
    %v2156 = vadd.f32 %v2146, %v2153
    %v2157 = vadd.f32 %v2147, %v2153
    %v2158 = vadd.f32 %v2148, %v2153
    %v2159 = vadd.f32 %v2149, %v2153
    %v2160 = vlaneseq
    %v2161 = vshrl.u32 %v2160, 7
    %v2162 = vsub.s32 0, %v2161
    %v2163 = vrot.slane %v241, %v2162
    %2168 = vrot.lane.b32.xlu0 %v1935, 96
    %v2169 = vpop.permute.xlu0 %2168
    %2170 = vrot.lane.b32.xlu0 %v1936, 96
    %v2171 = vpop.permute.xlu0 %2170
    %2172 = vrot.lane.b32.xlu0 %v1937, 96
    %v2173 = vpop.permute.xlu0 %2172
    %2174 = vrot.lane.b32.xlu0 %v1938, 96
    %v2175 = vpop.permute.xlu0 %2174
    %v2181 = vsel %vm243, %v2154, 0
    %v2184 = vsel %vm243, %v2155, 0
    %v2187 = vsel %vm243, %v2156, 0
    %v2190 = vsel %vm243, %v2157, 0
    %v2193 = vsel %vm243, %v2158, 0
    %v2196 = vsel %vm243, %v2159, 0
    %2198 = vmatprep.subr.mxu0 0.0
    %2199 = vmatpush1.msra.mxu0 %v2169
    %2200 = vmatprep.subr.mxu0 0.0
    %2201 = vmatpush1.msra.mxu0 %v2171
    %2202 = vmatprep.subr.mxu0 0.0
    %2203 = vmatpush1.msra.mxu0 %v2173
    %2204 = vmatprep.subr.mxu0 0.0
    %2205 = vmatpush1.msra.mxu0 %v2175
    %2206 = vmatprep.subr.mxu0 0.0
    %2207 = vmatpush1.msra.mxu0 0.0
    %2208 = vmatprep.subr.mxu0 0.0
    %2209 = vmatpush1.msra.mxu0 0.0
    %2210 = vmatprep.subr.mxu0 0.0
    %2211 = vmatpush1.msra.mxu0 0.0
    %2212 = vmatprep.subr.mxu0 0.0
    %2213 = vmatpush1.msra.mxu0 0.0
    %2214 = vmatprep.subr.mxu0 0.0
    %2215 = vmatpush1.msra.mxu0 0.0
    %2216 = vmatprep.subr.mxu0 0.0
    %2217 = vmatpush1.msra.mxu0 0.0
    %2218 = vmatprep.subr.mxu0 0.0
    %2219 = vmatpush1.msra.mxu0 0.0
    %2220 = vmatprep.subr.mxu0 0.0
    %2221 = vmatpush1.msra.mxu0 0.0
    %2222 = vmatprep.subr.mxu0 0.0
    %2223 = vmatpush1.msra.mxu0 0.0
    %2224 = vmatprep.subr.mxu0 0.0
    %2225 = vmatpush1.msra.mxu0 0.0
    %2226 = vmatprep.subr.mxu0 0.0
    %2227 = vmatpush1.msra.mxu0 0.0
    %2228 = vmatprep.subr.mxu0 0.0
    %2229 = vmatpush1.msra.mxu0 0.0
    %2230 = vmatprep.subr.mxu0 0.0
    %2231 = vmatpush1.msra.mxu0 0.0
    %2232 = vmatprep.subr.mxu0 0.0
    %2233 = vmatpush1.msra.mxu0 0.0
    %2234 = vmatprep.subr.mxu0 0.0
    %2235 = vmatpush1.msra.mxu0 0.0
    %2236 = vmatprep.subr.mxu0 0.0
    %2237 = vmatpush1.msra.mxu0 0.0
    %2238 = vmatprep.subr.mxu0 0.0
    %2239 = vmatpush1.msra.mxu0 0.0
    %2240 = vmatprep.subr.mxu0 0.0
    %2241 = vmatpush1.msra.mxu0 0.0
    %2242 = vmatprep.subr.mxu0 0.0
    %2243 = vmatpush1.msra.mxu0 0.0
    %2244 = vmatprep.subr.mxu0 0.0
    %2245 = vmatpush1.msra.mxu0 0.0
    %2246 = vmatprep.subr.mxu0 0.0
    %2247 = vmatpush1.msra.mxu0 0.0
    %2248 = vmatprep.subr.mxu0 0.0
    %2249 = vmatpush1.msra.mxu0 0.0
    %2250 = vmatprep.subr.mxu0 0.0
    %2251 = vmatpush1.msra.mxu0 0.0
    %2252 = vmatprep.subr.mxu0 0.0
    %2253 = vmatpush1.msra.mxu0 0.0
    %2254 = vmatprep.subr.mxu0 0.0
    %2255 = vmatpush1.msra.mxu0 0.0
    %2256 = vmatprep.subr.mxu0 0.0
    %2257 = vmatpush1.msra.mxu0 0.0
    %2258 = vmatprep.subr.mxu0 0.0
    %2259 = vmatpush1.msra.mxu0 0.0
    %2260 = vmatprep.subr.mxu0 0.0
    %2261 = vmatpush1.msra.mxu0 0.0
    %2262 = vmatprep.mubr.f32.mxu0 0.0
    %2263 = vmatmul.mubr.f32.gmra.mrb[0].mxu0 %v2181
    %v2264 = vpop.f32.mrb[0].mxu0
    %v2265 = vadd.f32 %v2163, %v2264
    %v2266 = vpop.f32.mrb[0].mxu0
    %2267 = vmatprep.mubr.f32.mxu0 0.0
    %2268 = vmatmul.mubr.f32.gmra.mrb[0].mxu0 %v2184
    %v2269 = vpop.f32.mrb[0].mxu0
    %v2270 = vadd.f32 %v2163, %v2269
    %v2271 = vpop.f32.mrb[0].mxu0
    %2272 = vmatprep.mubr.f32.mxu0 0.0
    %2273 = vmatmul.mubr.f32.gmra.mrb[0].mxu0 %v2187
    %v2274 = vpop.f32.mrb[0].mxu0
    %v2275 = vadd.f32 %v2163, %v2274
    %v2276 = vpop.f32.mrb[0].mxu0
    %2277 = vmatprep.mubr.f32.mxu0 0.0
    %2278 = vmatmul.mubr.f32.gmra.mrb[0].mxu0 %v2190
    %v2279 = vpop.f32.mrb[0].mxu0
    %v2280 = vadd.f32 %v2163, %v2279
    %v2281 = vpop.f32.mrb[0].mxu0
    %2282 = vmatprep.mubr.f32.mxu0 0.0
    %2283 = vmatmul.mubr.f32.gmra.mrb[0].mxu0 %v2193
    %v2284 = vpop.f32.mrb[0].mxu0
    %v2285 = vadd.f32 %v2163, %v2284
    %v2286 = vpop.f32.mrb[0].mxu0
    %2287 = vmatprep.mubr.f32.mxu0 0.0
    %2288 = vmatmul.mubr.f32.gmra.mrb[0].mxu0 %v2196
    %v2289 = vpop.f32.mrb[0].mxu0
    %v2290 = vadd.f32 %v2163, %v2289
    %v2291 = vpop.f32.mrb[0].mxu0
    %2292 = vdwg.mxu0
    %v2293 = vmul.f32 %v2265, 0.5
    %v2294 = vmul.f32 %v2270, 0.5
    %v2295 = vmul.f32 %v2275, 0.5
    %v2296 = vmul.f32 %v2280, 0.5
    %v2297 = vmul.f32 %v2285, 0.5
    %v2298 = vmul.f32 %v2290, 0.5
    %v2299 = vmul.f32 %v2265, 0.70710677
    %v2300 = vmul.f32 %v2270, 0.70710677
    %v2301 = vmul.f32 %v2275, 0.70710677
    %v2302 = vmul.f32 %v2280, 0.70710677
    %v2303 = vmul.f32 %v2285, 0.70710677
    %v2304 = vmul.f32 %v2290, 0.70710677
    %v2305 = vand.u32 2147483647, %v2299
    %v2306 = vand.u32 2147483647, %v2300
    %v2307 = vand.u32 2147483647, %v2301
    %v2308 = vand.u32 2147483647, %v2302
    %v2309 = vand.u32 2147483647, %v2303
    %v2310 = vand.u32 2147483647, %v2304
    %v2311 = vmul.f32 %v2305, 0.3275911
    %v2312 = vmul.f32 %v2306, 0.3275911
    %v2313 = vmul.f32 %v2307, 0.3275911
    %v2314 = vmul.f32 %v2308, 0.3275911
    %v2315 = vmul.f32 %v2309, 0.3275911
    %v2316 = vmul.f32 %v2310, 0.3275911
    %v2317 = vadd.f32 %v2311, 1.0
    %v2318 = vadd.f32 %v2312, 1.0
    %v2319 = vadd.f32 %v2313, 1.0
    %v2320 = vadd.f32 %v2314, 1.0
    %v2321 = vadd.f32 %v2315, 1.0
    %v2322 = vadd.f32 %v2316, 1.0
    %v2323 = vrcp.pop %v2317
    %v2324 = vmul.f32 1.0, %v2323
    %v2325 = vrcp.pop %v2318
    %v2326 = vmul.f32 1.0, %v2325
    %v2327 = vrcp.pop %v2319
    %v2328 = vmul.f32 1.0, %v2327
    %v2329 = vrcp.pop %v2320
    %v2330 = vmul.f32 1.0, %v2329
    %v2331 = vrcp.pop %v2321
    %v2332 = vmul.f32 1.0, %v2331
    %v2333 = vrcp.pop %v2322
    %v2334 = vmul.f32 1.0, %v2333
    %v2335 = vmul.f32 %v2324, 1.0614054
    %v2336 = vmul.f32 %v2326, 1.0614054
    %v2337 = vmul.f32 %v2328, 1.0614054
    %v2338 = vmul.f32 %v2330, 1.0614054
    %v2339 = vmul.f32 %v2332, 1.0614054
    %v2340 = vmul.f32 %v2334, 1.0614054
    %v2341 = vadd.f32 %v2335, -1.4531521
    %v2342 = vadd.f32 %v2336, -1.4531521
    %v2343 = vadd.f32 %v2337, -1.4531521
    %v2344 = vadd.f32 %v2338, -1.4531521
    %v2345 = vadd.f32 %v2339, -1.4531521
    %v2346 = vadd.f32 %v2340, -1.4531521
    %v2347 = vmul.f32 %v2341, %v2324
    %v2348 = vmul.f32 %v2342, %v2326
    %v2349 = vmul.f32 %v2343, %v2328
    %v2350 = vmul.f32 %v2344, %v2330
    %v2351 = vmul.f32 %v2345, %v2332
    %v2352 = vmul.f32 %v2346, %v2334
    %v2353 = vadd.f32 %v2347, 1.4214138
    %v2354 = vadd.f32 %v2348, 1.4214138
    %v2355 = vadd.f32 %v2349, 1.4214138
    %v2356 = vadd.f32 %v2350, 1.4214138
    %v2357 = vadd.f32 %v2351, 1.4214138
    %v2358 = vadd.f32 %v2352, 1.4214138
    %v2359 = vmul.f32 %v2353, %v2324
    %v2360 = vmul.f32 %v2354, %v2326
    %v2361 = vmul.f32 %v2355, %v2328
    %v2362 = vmul.f32 %v2356, %v2330
    %v2363 = vmul.f32 %v2357, %v2332
    %v2364 = vmul.f32 %v2358, %v2334
    %v2365 = vadd.f32 %v2359, -0.28449672
    %v2366 = vadd.f32 %v2360, -0.28449672
    %v2367 = vadd.f32 %v2361, -0.28449672
    %v2368 = vadd.f32 %v2362, -0.28449672
    %v2369 = vadd.f32 %v2363, -0.28449672
    %v2370 = vadd.f32 %v2364, -0.28449672
    %v2371 = vmul.f32 %v2365, %v2324
    %v2372 = vmul.f32 %v2366, %v2326
    %v2373 = vmul.f32 %v2367, %v2328
    %v2374 = vmul.f32 %v2368, %v2330
    %v2375 = vmul.f32 %v2369, %v2332
    %v2376 = vmul.f32 %v2370, %v2334
    %v2377 = vadd.f32 %v2371, 0.2548296
    %v2378 = vadd.f32 %v2372, 0.2548296
    %v2379 = vadd.f32 %v2373, 0.2548296
    %v2380 = vadd.f32 %v2374, 0.2548296
    %v2381 = vadd.f32 %v2375, 0.2548296
    %v2382 = vadd.f32 %v2376, 0.2548296
    %v2383 = vmul.f32 %v2377, %v2324
    %v2384 = vmul.f32 %v2378, %v2326
    %v2385 = vmul.f32 %v2379, %v2328
    %v2386 = vmul.f32 %v2380, %v2330
    %v2387 = vmul.f32 %v2381, %v2332
    %v2388 = vmul.f32 %v2382, %v2334
    %v2389 = vsub.f32 0.0, %v2305
    %v2390 = vsub.f32 0.0, %v2306
    %v2391 = vsub.f32 0.0, %v2307
    %v2392 = vsub.f32 0.0, %v2308
    %v2393 = vsub.f32 0.0, %v2309
    %v2394 = vsub.f32 0.0, %v2310
    %v2395 = vmul.f32 %v2389, %v2305
    %v2396 = vmul.f32 %v2390, %v2306
    %v2397 = vmul.f32 %v2391, %v2307
    %v2398 = vmul.f32 %v2392, %v2308
    %v2399 = vmul.f32 %v2393, %v2309
    %v2400 = vmul.f32 %v2394, %v2310
    %v2401 = vmul.f32 %v2395, 1.442695
    %v2402 = vpow.pop %v2401
    %v2403 = vmul.f32 %v2396, 1.442695
    %v2404 = vpow.pop %v2403
    %v2405 = vmul.f32 %v2397, 1.442695
    %v2406 = vpow.pop %v2405
    %v2407 = vmul.f32 %v2398, 1.442695
    %v2408 = vpow.pop %v2407
    %v2409 = vmul.f32 %v2399, 1.442695
    %v2410 = vpow.pop %v2409
    %v2411 = vmul.f32 %v2400, 1.442695
    %v2412 = vpow.pop %v2411
    %v2413 = vmul.f32 %v2383, %v2402
    %v2414 = vmul.f32 %v2384, %v2404
    %v2415 = vmul.f32 %v2385, %v2406
    %v2416 = vmul.f32 %v2386, %v2408
    %v2417 = vmul.f32 %v2387, %v2410
    %v2418 = vmul.f32 %v2388, %v2412
    %v2419 = vsub.f32 1.0, %v2413
    %v2420 = vsub.f32 1.0, %v2414
    %v2421 = vsub.f32 1.0, %v2415
    %v2422 = vsub.f32 1.0, %v2416
    %v2423 = vsub.f32 1.0, %v2417
    %v2424 = vsub.f32 1.0, %v2418
    %vm2425 = vcmp.ge.f32.partialorder %v2299, 0.0
    %vm2426 = vcmp.ge.f32.partialorder %v2300, 0.0
    %vm2427 = vcmp.ge.f32.partialorder %v2301, 0.0
    %vm2428 = vcmp.ge.f32.partialorder %v2302, 0.0
    %vm2429 = vcmp.ge.f32.partialorder %v2303, 0.0
    %vm2430 = vcmp.ge.f32.partialorder %v2304, 0.0
    %v2431 = vsub.f32 0.0, %v2419
    %v2432 = vsub.f32 0.0, %v2420
    %v2433 = vsub.f32 0.0, %v2421
    %v2434 = vsub.f32 0.0, %v2422
    %v2435 = vsub.f32 0.0, %v2423
    %v2436 = vsub.f32 0.0, %v2424
    %v2437 = vsel %vm2425, %v2419, %v2431
    %v2438 = vsel %vm2426, %v2420, %v2432
    %v2439 = vsel %vm2427, %v2421, %v2433
    %v2440 = vsel %vm2428, %v2422, %v2434
    %v2441 = vsel %vm2429, %v2423, %v2435
    %v2442 = vsel %vm2430, %v2424, %v2436
    %v2443 = vadd.f32 %v2437, 1.0
    %v2444 = vadd.f32 %v2438, 1.0
    %v2445 = vadd.f32 %v2439, 1.0
    %v2446 = vadd.f32 %v2440, 1.0
    %v2447 = vadd.f32 %v2441, 1.0
    %v2448 = vadd.f32 %v2442, 1.0
    %v2449 = vmul.f32 %v2293, %v2443
    %v2450 = vmul.f32 %v2294, %v2444
    %v2451 = vmul.f32 %v2295, %v2445
    %v2452 = vmul.f32 %v2296, %v2446
    %v2453 = vmul.f32 %v2297, %v2447
    %v2454 = vmul.f32 %v2298, %v2448
    %v2455 = vld [vmem:[%s2 + $0x70] sm:$0xff]
    %v2456 = vld [vmem:[%s2 + $0x78] sm:$0xff]
    %v2457 = vld [vmem:[%s2 + $0x80] sm:$0xff]
    %v2458 = vld [vmem:[%s2 + $0x88] sm:$0xff]
    %v2459 = vld [vmem:[%s2 + $0x90] sm:$0xff]
    %v2460 = vld [vmem:[%s2 + $0x98] sm:$0xff]
    %v2461 = vld [vmem:[%s2 + $0xa0] sm:$0xff]
    %v2462 = vld [vmem:[%s2 + $0xa8] sm:$0xff]
    %v2463 = vlaneseq
    %v2464 = vshrl.u32 %v2463, 7
    %v2465 = vsub.s32 0, %v2464
    %v2466 = vrot.slane %v242, %v2465
    %vm2467 = vcmask 523264
    %v2469 = vsel %vm2467, %v2449, 0
    %v2472 = vsel %vm2467, %v2450, 0
    %v2475 = vsel %vm2467, %v2451, 0
    %v2478 = vsel %vm2467, %v2452, 0
    %v2481 = vsel %vm2467, %v2453, 0
    %v2484 = vsel %vm2467, %v2454, 0
    %2486 = vmatprep.subr.mxu0 0.0
    %2487 = vmatpush1.msra.mxu0 %v2455
    %2488 = vmatprep.subr.mxu0 0.0
    %2489 = vmatpush1.msra.mxu0 %v2456
    %2490 = vmatprep.subr.mxu0 0.0
    %2491 = vmatpush1.msra.mxu0 %v2457
    %2492 = vmatprep.subr.mxu0 0.0
    %2493 = vmatpush1.msra.mxu0 %v2458
    %2494 = vmatprep.subr.mxu0 0.0
    %2495 = vmatpush1.msra.mxu0 %v2459
    %2496 = vmatprep.subr.mxu0 0.0
    %2497 = vmatpush1.msra.mxu0 %v2460
    %2498 = vmatprep.subr.mxu0 0.0
    %2499 = vmatpush1.msra.mxu0 %v2461
    %2500 = vmatprep.subr.mxu0 0.0
    %2501 = vmatpush1.msra.mxu0 %v2462
    %2502 = vmatprep.subr.mxu0 0.0
    %2503 = vmatpush1.msra.mxu0 0.0
    %2504 = vmatprep.subr.mxu0 0.0
    %2505 = vmatpush1.msra.mxu0 0.0
    %2506 = vmatprep.subr.mxu0 0.0
    %2507 = vmatpush1.msra.mxu0 0.0
    %2508 = vmatprep.subr.mxu0 0.0
    %2509 = vmatpush1.msra.mxu0 0.0
    %2510 = vmatprep.subr.mxu0 0.0
    %2511 = vmatpush1.msra.mxu0 0.0
    %2512 = vmatprep.subr.mxu0 0.0
    %2513 = vmatpush1.msra.mxu0 0.0
    %2514 = vmatprep.subr.mxu0 0.0
    %2515 = vmatpush1.msra.mxu0 0.0
    %2516 = vmatprep.subr.mxu0 0.0
    %2517 = vmatpush1.msra.mxu0 0.0
    %2518 = vmatprep.subr.mxu0 0.0
    %2519 = vmatpush1.msra.mxu0 0.0
    %2520 = vmatprep.subr.mxu0 0.0
    %2521 = vmatpush1.msra.mxu0 0.0
    %2522 = vmatprep.subr.mxu0 0.0
    %2523 = vmatpush1.msra.mxu0 0.0
    %2524 = vmatprep.subr.mxu0 0.0
    %2525 = vmatpush1.msra.mxu0 0.0
    %2526 = vmatprep.subr.mxu0 0.0
    %2527 = vmatpush1.msra.mxu0 0.0
    %2528 = vmatprep.subr.mxu0 0.0
    %2529 = vmatpush1.msra.mxu0 0.0
    %2530 = vmatprep.subr.mxu0 0.0
    %2531 = vmatpush1.msra.mxu0 0.0
    %2532 = vmatprep.subr.mxu0 0.0
    %2533 = vmatpush1.msra.mxu0 0.0
    %2534 = vmatprep.subr.mxu0 0.0
    %2535 = vmatpush1.msra.mxu0 0.0
    %2536 = vmatprep.subr.mxu0 0.0
    %2537 = vmatpush1.msra.mxu0 0.0
    %2538 = vmatprep.subr.mxu0 0.0
    %2539 = vmatpush1.msra.mxu0 0.0
    %2540 = vmatprep.subr.mxu0 0.0
    %2541 = vmatpush1.msra.mxu0 0.0
    %2542 = vmatprep.subr.mxu0 0.0
    %2543 = vmatpush1.msra.mxu0 0.0
    %2544 = vmatprep.subr.mxu0 0.0
    %2545 = vmatpush1.msra.mxu0 0.0
    %2546 = vmatprep.subr.mxu0 0.0
    %2547 = vmatpush1.msra.mxu0 0.0
    %2548 = vmatprep.subr.mxu0 0.0
    %2549 = vmatpush1.msra.mxu0 0.0
    %2550 = vmatprep.mubr.f32.mxu0 0.0
    %2551 = vmatmul.mubr.f32.gmra.mrb[0].mxu0 %v2469
    %v2552 = vpop.f32.mrb[0].mxu0
    %v2553 = vadd.f32 %v2466, %v2552
    %v2554 = vpop.f32.mrb[0].mxu0
    %2555 = vmatprep.mubr.f32.mxu0 0.0
    %2556 = vmatmul.mubr.f32.gmra.mrb[0].mxu0 %v2472
    %v2557 = vpop.f32.mrb[0].mxu0
    %v2558 = vadd.f32 %v2466, %v2557
    %v2559 = vpop.f32.mrb[0].mxu0
    %2560 = vmatprep.mubr.f32.mxu0 0.0
    %2561 = vmatmul.mubr.f32.gmra.mrb[0].mxu0 %v2475
    %v2562 = vpop.f32.mrb[0].mxu0
    %v2563 = vadd.f32 %v2466, %v2562
    %v2564 = vpop.f32.mrb[0].mxu0
    %2565 = vmatprep.mubr.f32.mxu0 0.0
    %2566 = vmatmul.mubr.f32.gmra.mrb[0].mxu0 %v2478
    %v2567 = vpop.f32.mrb[0].mxu0
    %v2568 = vadd.f32 %v2466, %v2567
    %v2569 = vpop.f32.mrb[0].mxu0
    %2570 = vmatprep.mubr.f32.mxu0 0.0
    %2571 = vmatmul.mubr.f32.gmra.mrb[0].mxu0 %v2481
    %v2572 = vpop.f32.mrb[0].mxu0
    %v2573 = vadd.f32 %v2466, %v2572
    %v2574 = vpop.f32.mrb[0].mxu0
    %2575 = vmatprep.mubr.f32.mxu0 0.0
    %2576 = vmatmul.mubr.f32.gmra.mrb[0].mxu0 %v2484
    %v2577 = vpop.f32.mrb[0].mxu0
    %v2578 = vadd.f32 %v2466, %v2577
    %v2579 = vpop.f32.mrb[0].mxu0
    %2580 = vdwg.mxu0
    %v2581 = vadd.f32 %v2056, %v2553
    %v2582 = vadd.f32 %v2057, %v2558
    %v2583 = vadd.f32 %v2058, %v2563
    %v2584 = vadd.f32 %v2059, %v2568
    %v2585 = vadd.f32 %v2060, %v2573
    %v2586 = vadd.f32 %v2061, %v2578
    %v2587 = vld [vmem:[%s3 + $0x8] sm:$0x1]
    %v2588 = vld [vmem:[%s3 + $0x9] sm:$0x1]
    %v2589 = vld [vmem:[%s3 + $0xa] sm:$0x1]
    %v2590 = vld [vmem:[%s3 + $0xb] sm:$0x1]
    %v2591 = vld [vmem:[%s3 + $0xc] sm:$0x1]
    %v2592 = vld [vmem:[%s3 + $0xd] sm:$0x1]
    %v2593 = vld [vmem:[%s3 + $0xe] sm:$0x1]
    %v2594 = vld [vmem:[%s3 + $0xf] sm:$0x1]
    %v2595 = vsel %vm243, %v2581, 0.0
    %2596 = vadd.xlane.f32.xlu0 %v2595
    %v2597 = vpop.xlane.xlu0 %2596
    %v2598 = vsel %vm243, %v2582, 0.0
    %2599 = vadd.xlane.f32.xlu0 %v2598
    %v2600 = vpop.xlane.xlu0 %2599
    %v2601 = vsel %vm243, %v2583, 0.0
    %2602 = vadd.xlane.f32.xlu0 %v2601
    %v2603 = vpop.xlane.xlu0 %2602
    %v2604 = vsel %vm243, %v2584, 0.0
    %2605 = vadd.xlane.f32.xlu0 %v2604
    %v2606 = vpop.xlane.xlu0 %2605
    %v2607 = vsel %vm243, %v2585, 0.0
    %2608 = vadd.xlane.f32.xlu0 %v2607
    %v2609 = vpop.xlane.xlu0 %2608
    %v2610 = vsel %vm243, %v2586, 0.0
    %2611 = vadd.xlane.f32.xlu0 %v2610
    %v2612 = vpop.xlane.xlu0 %2611
    %v2613 = vmul.f32 %v2597, %v262
    %v2614 = vmul.f32 %v2600, %v262
    %v2615 = vmul.f32 %v2603, %v262
    %v2616 = vmul.f32 %v2606, %v262
    %v2617 = vmul.f32 %v2609, %v262
    %v2618 = vmul.f32 %v2612, %v262
    %v2619 = vsub.f32 %v2581, %v2613
    %v2620 = vsub.f32 %v2582, %v2614
    %v2621 = vsub.f32 %v2583, %v2615
    %v2622 = vsub.f32 %v2584, %v2616
    %v2623 = vsub.f32 %v2585, %v2617
    %v2624 = vsub.f32 %v2586, %v2618
    %v2625 = vmul.f32 %v2619, %v2619
    %v2626 = vmul.f32 %v2620, %v2620
    %v2627 = vmul.f32 %v2621, %v2621
    %v2628 = vmul.f32 %v2622, %v2622
    %v2629 = vmul.f32 %v2623, %v2623
    %v2630 = vmul.f32 %v2624, %v2624
    %v2631 = vsel %vm243, %v2625, 0.0
    %2632 = vadd.xlane.f32.xlu0 %v2631
    %v2633 = vpop.xlane.xlu0 %2632
    %v2634 = vsel %vm243, %v2626, 0.0
    %2635 = vadd.xlane.f32.xlu0 %v2634
    %v2636 = vpop.xlane.xlu0 %2635
    %v2637 = vsel %vm243, %v2627, 0.0
    %2638 = vadd.xlane.f32.xlu0 %v2637
    %v2639 = vpop.xlane.xlu0 %2638
    %v2640 = vsel %vm243, %v2628, 0.0
    %2641 = vadd.xlane.f32.xlu0 %v2640
    %v2642 = vpop.xlane.xlu0 %2641
    %v2643 = vsel %vm243, %v2629, 0.0
    %2644 = vadd.xlane.f32.xlu0 %v2643
    %v2645 = vpop.xlane.xlu0 %2644
    %v2646 = vsel %vm243, %v2630, 0.0
    %2647 = vadd.xlane.f32.xlu0 %v2646
    %v2648 = vpop.xlane.xlu0 %2647
    %v2649 = vmul.f32 %v2633, %v262
    %v2650 = vmul.f32 %v2636, %v262
    %v2651 = vmul.f32 %v2639, %v262
    %v2652 = vmul.f32 %v2642, %v262
    %v2653 = vmul.f32 %v2645, %v262
    %v2654 = vmul.f32 %v2648, %v262
    %v2655 = vadd.f32 %v2649, 1e-06
    %v2656 = vadd.f32 %v2650, 1e-06
    %v2657 = vadd.f32 %v2651, 1e-06
    %v2658 = vadd.f32 %v2652, 1e-06
    %v2659 = vadd.f32 %v2653, 1e-06
    %v2660 = vadd.f32 %v2654, 1e-06
    %v2661 = vrsqrt.pop %v2655
    %v2662 = vrsqrt.pop %v2656
    %v2663 = vrsqrt.pop %v2657
    %v2664 = vrsqrt.pop %v2658
    %v2665 = vrsqrt.pop %v2659
    %v2666 = vrsqrt.pop %v2660
    %v2667 = vmul.f32 %v2619, %v2661
    %v2668 = vmul.f32 %v2620, %v2662
    %v2669 = vmul.f32 %v2621, %v2663
    %v2670 = vmul.f32 %v2622, %v2664
    %v2671 = vmul.f32 %v2623, %v2665
    %v2672 = vmul.f32 %v2624, %v2666
    %v2673 = vlaneseq
    %v2674 = vshrl.u32 %v2673, 7
    %v2675 = vsub.s32 0, %v2674
    %v2676 = vrot.slane %v2587, %v2675
    %v2677 = vmul.f32 %v2667, %v2676
    %v2678 = vmul.f32 %v2668, %v2676
    %v2679 = vmul.f32 %v2669, %v2676
    %v2680 = vmul.f32 %v2670, %v2676
    %v2681 = vmul.f32 %v2671, %v2676
    %v2682 = vmul.f32 %v2672, %v2676
    %v2683 = vlaneseq
    %v2684 = vshrl.u32 %v2683, 7
    %v2685 = vsub.s32 0, %v2684
    %v2686 = vrot.slane %v2588, %v2685
    %v2687 = vadd.f32 %v2677, %v2686
    %v2688 = vadd.f32 %v2678, %v2686
    %v2689 = vadd.f32 %v2679, %v2686
    %v2690 = vadd.f32 %v2680, %v2686
    %v2691 = vadd.f32 %v2681, %v2686
    %v2692 = vadd.f32 %v2682, %v2686
    %v2693 = vld [vmem:[%s2 + $0xb0] sm:$0xff]
    %v2694 = vld [vmem:[%s2 + $0xb8] sm:$0xff]
    %v2695 = vld [vmem:[%s2 + $0xc0] sm:$0xff]
    %v2696 = vld [vmem:[%s2 + $0xc8] sm:$0xff]
    %v2697 = vlaneseq
    %v2698 = vshrl.u32 %v2697, 7
    %v2699 = vsub.s32 0, %v2698
    %v2700 = vrot.slane %v2589, %v2699
    %v2702 = vsel %vm243, %v2687, 0
    %v2705 = vsel %vm243, %v2688, 0
    %v2708 = vsel %vm243, %v2689, 0
    %v2711 = vsel %vm243, %v2690, 0
    %v2714 = vsel %vm243, %v2691, 0
    %v2717 = vsel %vm243, %v2692, 0
    %2719 = vmatprep.subr.mxu0 0.0
    %2720 = vmatpush1.msra.mxu0 %v2693
    %2721 = vmatprep.subr.mxu0 0.0
    %2722 = vmatpush1.msra.mxu0 %v2694
    %2723 = vmatprep.subr.mxu0 0.0
    %2724 = vmatpush1.msra.mxu0 %v2695
    %2725 = vmatprep.subr.mxu0 0.0
    %2726 = vmatpush1.msra.mxu0 %v2696
    %2727 = vmatprep.subr.mxu0 0.0
    %2728 = vmatpush1.msra.mxu0 0.0
    %2729 = vmatprep.subr.mxu0 0.0
    %2730 = vmatpush1.msra.mxu0 0.0
    %2731 = vmatprep.subr.mxu0 0.0
    %2732 = vmatpush1.msra.mxu0 0.0
    %2733 = vmatprep.subr.mxu0 0.0
    %2734 = vmatpush1.msra.mxu0 0.0
    %2735 = vmatprep.subr.mxu0 0.0
    %2736 = vmatpush1.msra.mxu0 0.0
    %2737 = vmatprep.subr.mxu0 0.0
    %2738 = vmatpush1.msra.mxu0 0.0
    %2739 = vmatprep.subr.mxu0 0.0
    %2740 = vmatpush1.msra.mxu0 0.0
    %2741 = vmatprep.subr.mxu0 0.0
    %2742 = vmatpush1.msra.mxu0 0.0
    %2743 = vmatprep.subr.mxu0 0.0
    %2744 = vmatpush1.msra.mxu0 0.0
    %2745 = vmatprep.subr.mxu0 0.0
    %2746 = vmatpush1.msra.mxu0 0.0
    %2747 = vmatprep.subr.mxu0 0.0
    %2748 = vmatpush1.msra.mxu0 0.0
    %2749 = vmatprep.subr.mxu0 0.0
    %2750 = vmatpush1.msra.mxu0 0.0
    %2751 = vmatprep.subr.mxu0 0.0
    %2752 = vmatpush1.msra.mxu0 0.0
    %2753 = vmatprep.subr.mxu0 0.0
    %2754 = vmatpush1.msra.mxu0 0.0
    %2755 = vmatprep.subr.mxu0 0.0
    %2756 = vmatpush1.msra.mxu0 0.0
    %2757 = vmatprep.subr.mxu0 0.0
    %2758 = vmatpush1.msra.mxu0 0.0
    %2759 = vmatprep.subr.mxu0 0.0
    %2760 = vmatpush1.msra.mxu0 0.0
    %2761 = vmatprep.subr.mxu0 0.0
    %2762 = vmatpush1.msra.mxu0 0.0
    %2763 = vmatprep.subr.mxu0 0.0
    %2764 = vmatpush1.msra.mxu0 0.0
    %2765 = vmatprep.subr.mxu0 0.0
    %2766 = vmatpush1.msra.mxu0 0.0
    %2767 = vmatprep.subr.mxu0 0.0
    %2768 = vmatpush1.msra.mxu0 0.0
    %2769 = vmatprep.subr.mxu0 0.0
    %2770 = vmatpush1.msra.mxu0 0.0
    %2771 = vmatprep.subr.mxu0 0.0
    %2772 = vmatpush1.msra.mxu0 0.0
    %2773 = vmatprep.subr.mxu0 0.0
    %2774 = vmatpush1.msra.mxu0 0.0
    %2775 = vmatprep.subr.mxu0 0.0
    %2776 = vmatpush1.msra.mxu0 0.0
    %2777 = vmatprep.subr.mxu0 0.0
    %2778 = vmatpush1.msra.mxu0 0.0
    %2779 = vmatprep.subr.mxu0 0.0
    %2780 = vmatpush1.msra.mxu0 0.0
    %2781 = vmatprep.subr.mxu0 0.0
    %2782 = vmatpush1.msra.mxu0 0.0
    %2783 = vmatprep.mubr.f32.mxu0 0.0
    %2784 = vmatmul.mubr.f32.gmra.mrb[0].mxu0 %v2702
    %v2785 = vpop.f32.mrb[0].mxu0
    %v2786 = vadd.f32 %v2700, %v2785
    %v2787 = vpop.f32.mrb[0].mxu0
    %2788 = vmatprep.mubr.f32.mxu0 0.0
    %2789 = vmatmul.mubr.f32.gmra.mrb[0].mxu0 %v2705
    %v2790 = vpop.f32.mrb[0].mxu0
    %v2791 = vadd.f32 %v2700, %v2790
    %v2792 = vpop.f32.mrb[0].mxu0
    %2793 = vmatprep.mubr.f32.mxu0 0.0
    %2794 = vmatmul.mubr.f32.gmra.mrb[0].mxu0 %v2708
    %v2795 = vpop.f32.mrb[0].mxu0
    %v2796 = vadd.f32 %v2700, %v2795
    %v2797 = vpop.f32.mrb[0].mxu0
    %2798 = vmatprep.mubr.f32.mxu0 0.0
    %2799 = vmatmul.mubr.f32.gmra.mrb[0].mxu0 %v2711
    %v2800 = vpop.f32.mrb[0].mxu0
    %v2801 = vadd.f32 %v2700, %v2800
    %v2802 = vpop.f32.mrb[0].mxu0
    %2803 = vmatprep.mubr.f32.mxu0 0.0
    %2804 = vmatmul.mubr.f32.gmra.mrb[0].mxu0 %v2714
    %v2805 = vpop.f32.mrb[0].mxu0
    %v2806 = vadd.f32 %v2700, %v2805
    %v2807 = vpop.f32.mrb[0].mxu0
    %2808 = vmatprep.mubr.f32.mxu0 0.0
    %2809 = vmatmul.mubr.f32.gmra.mrb[0].mxu0 %v2717
    %v2810 = vpop.f32.mrb[0].mxu0
    %v2811 = vadd.f32 %v2700, %v2810
    %v2812 = vpop.f32.mrb[0].mxu0
    %2813 = vdwg.mxu0
    %2820 = vrot.lane.b32.xlu0 %v2786, 96
    %v2821 = vpop.permute.xlu0 %2820
    %2822 = vrot.lane.b32.xlu0 %v2791, 96
    %v2823 = vpop.permute.xlu0 %2822
    %2824 = vrot.lane.b32.xlu0 %v2796, 96
    %v2825 = vpop.permute.xlu0 %2824
    %2826 = vrot.lane.b32.xlu0 %v2801, 96
    %v2827 = vpop.permute.xlu0 %2826
    %2828 = vrot.lane.b32.xlu0 %v2806, 96
    %v2829 = vpop.permute.xlu0 %2828
    %2830 = vrot.lane.b32.xlu0 %v2811, 96
    %v2831 = vpop.permute.xlu0 %2830
    %v2832 = vsel %vm482, %v2786, 0
    %v2834 = vsel %vm482, %v2791, 0
    %v2836 = vsel %vm482, %v2796, 0
    %v2838 = vsel %vm482, %v2801, 0
    %v2840 = vsel %vm482, %v2806, 0
    %v2842 = vsel %vm482, %v2811, 0
    %v2844 = vsel %vm482, %v2821, 0
    %v2846 = vsel %vm482, %v2823, 0
    %v2848 = vsel %vm482, %v2825, 0
    %v2850 = vsel %vm482, %v2827, 0
    %v2852 = vsel %vm482, %v2829, 0
    %v2854 = vsel %vm482, %v2831, 0
    %2856 = vmatprep.subr.mxu0 0.0
    %2857 = vmatpush1.xpose.msra.mxu0 %v2844
    %2858 = vmatprep.subr.mxu0 0.0
    %2859 = vmatpush1.xpose.msra.mxu0 %v2846
    %2860 = vmatprep.subr.mxu0 0.0
    %2861 = vmatpush1.xpose.msra.mxu0 %v2848
    %2862 = vmatprep.subr.mxu0 0.0
    %2863 = vmatpush1.xpose.msra.mxu0 %v2850
    %2864 = vmatprep.subr.mxu0 0.0
    %2865 = vmatpush1.xpose.msra.mxu0 %v2852
    %2866 = vmatprep.subr.mxu0 0.0
    %2867 = vmatpush1.xpose.msra.mxu0 %v2854
    %2868 = vmatprep.subr.mxu0 0.0
    %2869 = vmatpush1.xpose.msra.mxu0 0.0
    %2870 = vmatprep.subr.mxu0 0.0
    %2871 = vmatpush1.xpose.msra.mxu0 0.0
    %2872 = vmatprep.subr.mxu0 0.0
    %2873 = vmatpush1.xpose.msra.mxu0 0.0
    %2874 = vmatprep.subr.mxu0 0.0
    %2875 = vmatpush1.xpose.msra.mxu0 0.0
    %2876 = vmatprep.subr.mxu0 0.0
    %2877 = vmatpush1.xpose.msra.mxu0 0.0
    %2878 = vmatprep.subr.mxu0 0.0
    %2879 = vmatpush1.xpose.msra.mxu0 0.0
    %2880 = vmatprep.subr.mxu0 0.0
    %2881 = vmatpush1.xpose.msra.mxu0 0.0
    %2882 = vmatprep.subr.mxu0 0.0
    %2883 = vmatpush1.xpose.msra.mxu0 0.0
    %2884 = vmatprep.subr.mxu0 0.0
    %2885 = vmatpush1.xpose.msra.mxu0 0.0
    %2886 = vmatprep.subr.mxu0 0.0
    %2887 = vmatpush1.xpose.msra.mxu0 0.0
    %2888 = vmatprep.subr.mxu0 0.0
    %2889 = vmatpush1.xpose.msra.mxu0 0.0
    %2890 = vmatprep.subr.mxu0 0.0
    %2891 = vmatpush1.xpose.msra.mxu0 0.0
    %2892 = vmatprep.subr.mxu0 0.0
    %2893 = vmatpush1.xpose.msra.mxu0 0.0
    %2894 = vmatprep.subr.mxu0 0.0
    %2895 = vmatpush1.xpose.msra.mxu0 0.0
    %2896 = vmatprep.subr.mxu0 0.0
    %2897 = vmatpush1.xpose.msra.mxu0 0.0
    %2898 = vmatprep.subr.mxu0 0.0
    %2899 = vmatpush1.xpose.msra.mxu0 0.0
    %2900 = vmatprep.subr.mxu0 0.0
    %2901 = vmatpush1.xpose.msra.mxu0 0.0
    %2902 = vmatprep.subr.mxu0 0.0
    %2903 = vmatpush1.xpose.msra.mxu0 0.0
    %2904 = vmatprep.subr.mxu0 0.0
    %2905 = vmatpush1.xpose.msra.mxu0 0.0
    %2906 = vmatprep.subr.mxu0 0.0
    %2907 = vmatpush1.xpose.msra.mxu0 0.0
    %2908 = vmatprep.subr.mxu0 0.0
    %2909 = vmatpush1.xpose.msra.mxu0 0.0
    %2910 = vmatprep.subr.mxu0 0.0
    %2911 = vmatpush1.xpose.msra.mxu0 0.0
    %2912 = vmatprep.subr.mxu0 0.0
    %2913 = vmatpush1.xpose.msra.mxu0 0.0
    %2914 = vmatprep.subr.mxu0 0.0
    %2915 = vmatpush1.xpose.msra.mxu0 0.0
    %2916 = vmatprep.subr.mxu0 0.0
    %2917 = vmatpush1.xpose.msra.mxu0 0.0
    %2918 = vmatprep.subr.mxu0 0.0
    %2919 = vmatpush1.xpose.msra.mxu0 0.0
    %2920 = vmatprep.mubr.f32.mxu0 0.0
    %2921 = vmatmul.mubr.f32.gmra.mrb[0].mxu0 %v2832
    %v2922 = vpop.f32.mrb[0].mxu0
    %v2923 = vadd.f32 %v97, %v2922
    %v2924 = vpop.f32.mrb[0].mxu0
    %2925 = vmatprep.mubr.f32.mxu0 0.0
    %2926 = vmatmul.mubr.f32.gmra.mrb[0].mxu0 %v2834
    %v2927 = vpop.f32.mrb[0].mxu0
    %v2928 = vadd.f32 %v98, %v2927
    %v2929 = vpop.f32.mrb[0].mxu0
    %2930 = vmatprep.mubr.f32.mxu0 0.0
    %2931 = vmatmul.mubr.f32.gmra.mrb[0].mxu0 %v2836
    %v2932 = vpop.f32.mrb[0].mxu0
    %v2933 = vadd.f32 %v99, %v2932
    %v2934 = vpop.f32.mrb[0].mxu0
    %2935 = vmatprep.mubr.f32.mxu0 0.0
    %2936 = vmatmul.mubr.f32.gmra.mrb[0].mxu0 %v2838
    %v2937 = vpop.f32.mrb[0].mxu0
    %v2938 = vadd.f32 %v100, %v2937
    %v2939 = vpop.f32.mrb[0].mxu0
    %2940 = vmatprep.mubr.f32.mxu0 0.0
    %2941 = vmatmul.mubr.f32.gmra.mrb[0].mxu0 %v2840
    %v2942 = vpop.f32.mrb[0].mxu0
    %v2943 = vadd.f32 %v101, %v2942
    %v2944 = vpop.f32.mrb[0].mxu0
    %2945 = vmatprep.mubr.f32.mxu0 0.0
    %2946 = vmatmul.mubr.f32.gmra.mrb[0].mxu0 %v2842
    %v2947 = vpop.f32.mrb[0].mxu0
    %v2948 = vadd.f32 %v102, %v2947
    %v2949 = vpop.f32.mrb[0].mxu0
    %2950 = vdwg.mxu0
    %v2951 = vsel %vm121, %v2923, -inf
    %2952 = vmax.xlane.f32.xlu0 %v2951
    %v2953 = vpop.xlane.xlu0 %2952
    %v2954 = vsel %vm121, %v2928, -inf
    %2955 = vmax.xlane.f32.xlu0 %v2954
    %v2956 = vpop.xlane.xlu0 %2955
    %v2957 = vsel %vm121, %v2933, -inf
    %2958 = vmax.xlane.f32.xlu0 %v2957
    %v2959 = vpop.xlane.xlu0 %2958
    %v2960 = vsel %vm121, %v2938, -inf
    %2961 = vmax.xlane.f32.xlu0 %v2960
    %v2962 = vpop.xlane.xlu0 %2961
    %v2963 = vsel %vm121, %v2943, -inf
    %2964 = vmax.xlane.f32.xlu0 %v2963
    %v2965 = vpop.xlane.xlu0 %2964
    %v2966 = vsel %vm121, %v2948, -inf
    %2967 = vmax.xlane.f32.xlu0 %v2966
    %v2968 = vpop.xlane.xlu0 %2967
    %v2969 = vsub.f32 %v2923, %v2953
    %v2970 = vsub.f32 %v2928, %v2956
    %v2971 = vsub.f32 %v2933, %v2959
    %v2972 = vsub.f32 %v2938, %v2962
    %v2973 = vsub.f32 %v2943, %v2965
    %v2974 = vsub.f32 %v2948, %v2968
    %v2975 = vmul.f32 %v2969, 1.442695
    %v2976 = vpow.pop %v2975
    %v2977 = vmul.f32 %v2970, 1.442695
    %v2978 = vpow.pop %v2977
    %v2979 = vmul.f32 %v2971, 1.442695
    %v2980 = vpow.pop %v2979
    %v2981 = vmul.f32 %v2972, 1.442695
    %v2982 = vpow.pop %v2981
    %v2983 = vmul.f32 %v2973, 1.442695
    %v2984 = vpow.pop %v2983
    %v2985 = vmul.f32 %v2974, 1.442695
    %v2986 = vpow.pop %v2985
    %2987 = vrot.lane.b32.xlu0 %v2786, 64
    %v2988 = vpop.permute.xlu0 %2987
    %2989 = vrot.lane.b32.xlu0 %v2791, 64
    %v2990 = vpop.permute.xlu0 %2989
    %2991 = vrot.lane.b32.xlu0 %v2796, 64
    %v2992 = vpop.permute.xlu0 %2991
    %2993 = vrot.lane.b32.xlu0 %v2801, 64
    %v2994 = vpop.permute.xlu0 %2993
    %2995 = vrot.lane.b32.xlu0 %v2806, 64
    %v2996 = vpop.permute.xlu0 %2995
    %2997 = vrot.lane.b32.xlu0 %v2811, 64
    %v2998 = vpop.permute.xlu0 %2997
    %v3006 = vsel %vm121, %v2976, 0
    %v3009 = vsel %vm121, %v2978, 0
    %v3012 = vsel %vm121, %v2980, 0
    %v3015 = vsel %vm121, %v2982, 0
    %v3018 = vsel %vm121, %v2984, 0
    %v3021 = vsel %vm121, %v2986, 0
    %3023 = vmatprep.subr.mxu0 0.0
    %3024 = vmatpush1.msra.mxu0 %v2988
    %3025 = vmatprep.subr.mxu0 0.0
    %3026 = vmatpush1.msra.mxu0 %v2990
    %3027 = vmatprep.subr.mxu0 0.0
    %3028 = vmatpush1.msra.mxu0 %v2992
    %3029 = vmatprep.subr.mxu0 0.0
    %3030 = vmatpush1.msra.mxu0 %v2994
    %3031 = vmatprep.subr.mxu0 0.0
    %3032 = vmatpush1.msra.mxu0 %v2996
    %3033 = vmatprep.subr.mxu0 0.0
    %3034 = vmatpush1.msra.mxu0 %v2998
    %3035 = vmatprep.subr.mxu0 0.0
    %3036 = vmatpush1.msra.mxu0 0.0
    %3037 = vmatprep.subr.mxu0 0.0
    %3038 = vmatpush1.msra.mxu0 0.0
    %3039 = vmatprep.subr.mxu0 0.0
    %3040 = vmatpush1.msra.mxu0 0.0
    %3041 = vmatprep.subr.mxu0 0.0
    %3042 = vmatpush1.msra.mxu0 0.0
    %3043 = vmatprep.subr.mxu0 0.0
    %3044 = vmatpush1.msra.mxu0 0.0
    %3045 = vmatprep.subr.mxu0 0.0
    %3046 = vmatpush1.msra.mxu0 0.0
    %3047 = vmatprep.subr.mxu0 0.0
    %3048 = vmatpush1.msra.mxu0 0.0
    %3049 = vmatprep.subr.mxu0 0.0
    %3050 = vmatpush1.msra.mxu0 0.0
    %3051 = vmatprep.subr.mxu0 0.0
    %3052 = vmatpush1.msra.mxu0 0.0
    %3053 = vmatprep.subr.mxu0 0.0
    %3054 = vmatpush1.msra.mxu0 0.0
    %3055 = vmatprep.subr.mxu0 0.0
    %3056 = vmatpush1.msra.mxu0 0.0
    %3057 = vmatprep.subr.mxu0 0.0
    %3058 = vmatpush1.msra.mxu0 0.0
    %3059 = vmatprep.subr.mxu0 0.0
    %3060 = vmatpush1.msra.mxu0 0.0
    %3061 = vmatprep.subr.mxu0 0.0
    %3062 = vmatpush1.msra.mxu0 0.0
    %3063 = vmatprep.subr.mxu0 0.0
    %3064 = vmatpush1.msra.mxu0 0.0
    %3065 = vmatprep.subr.mxu0 0.0
    %3066 = vmatpush1.msra.mxu0 0.0
    %3067 = vmatprep.subr.mxu0 0.0
    %3068 = vmatpush1.msra.mxu0 0.0
    %3069 = vmatprep.subr.mxu0 0.0
    %3070 = vmatpush1.msra.mxu0 0.0
    %3071 = vmatprep.subr.mxu0 0.0
    %3072 = vmatpush1.msra.mxu0 0.0
    %3073 = vmatprep.subr.mxu0 0.0
    %3074 = vmatpush1.msra.mxu0 0.0
    %3075 = vmatprep.subr.mxu0 0.0
    %3076 = vmatpush1.msra.mxu0 0.0
    %3077 = vmatprep.subr.mxu0 0.0
    %3078 = vmatpush1.msra.mxu0 0.0
    %3079 = vmatprep.subr.mxu0 0.0
    %3080 = vmatpush1.msra.mxu0 0.0
    %3081 = vmatprep.subr.mxu0 0.0
    %3082 = vmatpush1.msra.mxu0 0.0
    %3083 = vmatprep.subr.mxu0 0.0
    %3084 = vmatpush1.msra.mxu0 0.0
    %3085 = vmatprep.subr.mxu0 0.0
    %3086 = vmatpush1.msra.mxu0 0.0
    %3087 = vmatprep.mubr.f32.mxu0 0.0
    %3088 = vmatmul.mubr.f32.gmra.mrb[0].mxu0 %v3006
    %v3089 = vpop.f32.mrb[0].mxu0
    %v3090 = vadd.f32 0.0, %v3089
    %v3091 = vpop.f32.mrb[0].mxu0
    %3092 = vmatprep.mubr.f32.mxu0 0.0
    %3093 = vmatmul.mubr.f32.gmra.mrb[0].mxu0 %v3009
    %v3094 = vpop.f32.mrb[0].mxu0
    %v3095 = vadd.f32 0.0, %v3094
    %v3096 = vpop.f32.mrb[0].mxu0
    %3097 = vmatprep.mubr.f32.mxu0 0.0
    %3098 = vmatmul.mubr.f32.gmra.mrb[0].mxu0 %v3012
    %v3099 = vpop.f32.mrb[0].mxu0
    %v3100 = vadd.f32 0.0, %v3099
    %v3101 = vpop.f32.mrb[0].mxu0
    %3102 = vmatprep.mubr.f32.mxu0 0.0
    %3103 = vmatmul.mubr.f32.gmra.mrb[0].mxu0 %v3015
    %v3104 = vpop.f32.mrb[0].mxu0
    %v3105 = vadd.f32 0.0, %v3104
    %v3106 = vpop.f32.mrb[0].mxu0
    %3107 = vmatprep.mubr.f32.mxu0 0.0
    %3108 = vmatmul.mubr.f32.gmra.mrb[0].mxu0 %v3018
    %v3109 = vpop.f32.mrb[0].mxu0
    %v3110 = vadd.f32 0.0, %v3109
    %v3111 = vpop.f32.mrb[0].mxu0
    %3112 = vmatprep.mubr.f32.mxu0 0.0
    %3113 = vmatmul.mubr.f32.gmra.mrb[0].mxu0 %v3021
    %v3114 = vpop.f32.mrb[0].mxu0
    %v3115 = vadd.f32 0.0, %v3114
    %v3116 = vpop.f32.mrb[0].mxu0
    %3117 = vdwg.mxu0
    %v3118 = vsel %vm121, %v2976, 0.0
    %3119 = vadd.xlane.f32.xlu0 %v3118
    %v3120 = vpop.xlane.xlu0 %3119
    %v3121 = vsel %vm121, %v2978, 0.0
    %3122 = vadd.xlane.f32.xlu0 %v3121
    %v3123 = vpop.xlane.xlu0 %3122
    %v3124 = vsel %vm121, %v2980, 0.0
    %3125 = vadd.xlane.f32.xlu0 %v3124
    %v3126 = vpop.xlane.xlu0 %3125
    %v3127 = vsel %vm121, %v2982, 0.0
    %3128 = vadd.xlane.f32.xlu0 %v3127
    %v3129 = vpop.xlane.xlu0 %3128
    %v3130 = vsel %vm121, %v2984, 0.0
    %3131 = vadd.xlane.f32.xlu0 %v3130
    %v3132 = vpop.xlane.xlu0 %3131
    %v3133 = vsel %vm121, %v2986, 0.0
    %3134 = vadd.xlane.f32.xlu0 %v3133
    %v3135 = vpop.xlane.xlu0 %3134
    %v3136 = vrcp.pop %v3120
    %v3137 = vmul.f32 1.0, %v3136
    %v3138 = vrcp.pop %v3123
    %v3139 = vmul.f32 1.0, %v3138
    %v3140 = vrcp.pop %v3126
    %v3141 = vmul.f32 1.0, %v3140
    %v3142 = vrcp.pop %v3129
    %v3143 = vmul.f32 1.0, %v3142
    %v3144 = vrcp.pop %v3132
    %v3145 = vmul.f32 1.0, %v3144
    %v3146 = vrcp.pop %v3135
    %v3147 = vmul.f32 1.0, %v3146
    %v3148 = vmul.f32 %v3090, %v3137
    %v3149 = vmul.f32 %v3095, %v3139
    %v3150 = vmul.f32 %v3100, %v3141
    %v3151 = vmul.f32 %v3105, %v3143
    %v3152 = vmul.f32 %v3110, %v3145
    %v3153 = vmul.f32 %v3115, %v3147
    %3154 = vrot.lane.b32.xlu0 %v2786, 120
    %v3155 = vpop.permute.xlu0 %3154
    %3156 = vrot.lane.b32.xlu0 %v2791, 120
    %v3157 = vpop.permute.xlu0 %3156
    %3158 = vrot.lane.b32.xlu0 %v2796, 120
    %v3159 = vpop.permute.xlu0 %3158
    %3160 = vrot.lane.b32.xlu0 %v2801, 120
    %v3161 = vpop.permute.xlu0 %3160
    %3162 = vrot.lane.b32.xlu0 %v2806, 120
    %v3163 = vpop.permute.xlu0 %3162
    %3164 = vrot.lane.b32.xlu0 %v2811, 120
    %v3165 = vpop.permute.xlu0 %3164
    %3166 = vrot.lane.b32.xlu0 %v2786, 88
    %v3167 = vpop.permute.xlu0 %3166
    %3168 = vrot.lane.b32.xlu0 %v2791, 88
    %v3169 = vpop.permute.xlu0 %3168
    %3170 = vrot.lane.b32.xlu0 %v2796, 88
    %v3171 = vpop.permute.xlu0 %3170
    %3172 = vrot.lane.b32.xlu0 %v2801, 88
    %v3173 = vpop.permute.xlu0 %3172
    %3174 = vrot.lane.b32.xlu0 %v2806, 88
    %v3175 = vpop.permute.xlu0 %3174
    %3176 = vrot.lane.b32.xlu0 %v2811, 88
    %v3177 = vpop.permute.xlu0 %3176
    %v3178 = vsel %vm482, %v3155, 0
    %v3180 = vsel %vm482, %v3157, 0
    %v3182 = vsel %vm482, %v3159, 0
    %v3184 = vsel %vm482, %v3161, 0
    %v3186 = vsel %vm482, %v3163, 0
    %v3188 = vsel %vm482, %v3165, 0
    %v3190 = vsel %vm482, %v3167, 0
    %v3192 = vsel %vm482, %v3169, 0
    %v3194 = vsel %vm482, %v3171, 0
    %v3196 = vsel %vm482, %v3173, 0
    %v3198 = vsel %vm482, %v3175, 0
    %v3200 = vsel %vm482, %v3177, 0
    %3202 = vmatprep.subr.mxu0 0.0
    %3203 = vmatpush1.xpose.msra.mxu0 %v3190
    %3204 = vmatprep.subr.mxu0 0.0
    %3205 = vmatpush1.xpose.msra.mxu0 %v3192
    %3206 = vmatprep.subr.mxu0 0.0
    %3207 = vmatpush1.xpose.msra.mxu0 %v3194
    %3208 = vmatprep.subr.mxu0 0.0
    %3209 = vmatpush1.xpose.msra.mxu0 %v3196
    %3210 = vmatprep.subr.mxu0 0.0
    %3211 = vmatpush1.xpose.msra.mxu0 %v3198
    %3212 = vmatprep.subr.mxu0 0.0
    %3213 = vmatpush1.xpose.msra.mxu0 %v3200
    %3214 = vmatprep.subr.mxu0 0.0
    %3215 = vmatpush1.xpose.msra.mxu0 0.0
    %3216 = vmatprep.subr.mxu0 0.0
    %3217 = vmatpush1.xpose.msra.mxu0 0.0
    %3218 = vmatprep.subr.mxu0 0.0
    %3219 = vmatpush1.xpose.msra.mxu0 0.0
    %3220 = vmatprep.subr.mxu0 0.0
    %3221 = vmatpush1.xpose.msra.mxu0 0.0
    %3222 = vmatprep.subr.mxu0 0.0
    %3223 = vmatpush1.xpose.msra.mxu0 0.0
    %3224 = vmatprep.subr.mxu0 0.0
    %3225 = vmatpush1.xpose.msra.mxu0 0.0
    %3226 = vmatprep.subr.mxu0 0.0
    %3227 = vmatpush1.xpose.msra.mxu0 0.0
    %3228 = vmatprep.subr.mxu0 0.0
    %3229 = vmatpush1.xpose.msra.mxu0 0.0
    %3230 = vmatprep.subr.mxu0 0.0
    %3231 = vmatpush1.xpose.msra.mxu0 0.0
    %3232 = vmatprep.subr.mxu0 0.0
    %3233 = vmatpush1.xpose.msra.mxu0 0.0
    %3234 = vmatprep.subr.mxu0 0.0
    %3235 = vmatpush1.xpose.msra.mxu0 0.0
    %3236 = vmatprep.subr.mxu0 0.0
    %3237 = vmatpush1.xpose.msra.mxu0 0.0
    %3238 = vmatprep.subr.mxu0 0.0
    %3239 = vmatpush1.xpose.msra.mxu0 0.0
    %3240 = vmatprep.subr.mxu0 0.0
    %3241 = vmatpush1.xpose.msra.mxu0 0.0
    %3242 = vmatprep.subr.mxu0 0.0
    %3243 = vmatpush1.xpose.msra.mxu0 0.0
    %3244 = vmatprep.subr.mxu0 0.0
    %3245 = vmatpush1.xpose.msra.mxu0 0.0
    %3246 = vmatprep.subr.mxu0 0.0
    %3247 = vmatpush1.xpose.msra.mxu0 0.0
    %3248 = vmatprep.subr.mxu0 0.0
    %3249 = vmatpush1.xpose.msra.mxu0 0.0
    %3250 = vmatprep.subr.mxu0 0.0
    %3251 = vmatpush1.xpose.msra.mxu0 0.0
    %3252 = vmatprep.subr.mxu0 0.0
    %3253 = vmatpush1.xpose.msra.mxu0 0.0
    %3254 = vmatprep.subr.mxu0 0.0
    %3255 = vmatpush1.xpose.msra.mxu0 0.0
    %3256 = vmatprep.subr.mxu0 0.0
    %3257 = vmatpush1.xpose.msra.mxu0 0.0
    %3258 = vmatprep.subr.mxu0 0.0
    %3259 = vmatpush1.xpose.msra.mxu0 0.0
    %3260 = vmatprep.subr.mxu0 0.0
    %3261 = vmatpush1.xpose.msra.mxu0 0.0
    %3262 = vmatprep.subr.mxu0 0.0
    %3263 = vmatpush1.xpose.msra.mxu0 0.0
    %3264 = vmatprep.subr.mxu0 0.0
    %3265 = vmatpush1.xpose.msra.mxu0 0.0
    %3266 = vmatprep.mubr.f32.mxu0 0.0
    %3267 = vmatmul.mubr.f32.gmra.mrb[0].mxu0 %v3178
    %v3268 = vpop.f32.mrb[0].mxu0
    %v3269 = vadd.f32 %v97, %v3268
    %v3270 = vpop.f32.mrb[0].mxu0
    %3271 = vmatprep.mubr.f32.mxu0 0.0
    %3272 = vmatmul.mubr.f32.gmra.mrb[0].mxu0 %v3180
    %v3273 = vpop.f32.mrb[0].mxu0
    %v3274 = vadd.f32 %v98, %v3273
    %v3275 = vpop.f32.mrb[0].mxu0
    %3276 = vmatprep.mubr.f32.mxu0 0.0
    %3277 = vmatmul.mubr.f32.gmra.mrb[0].mxu0 %v3182
    %v3278 = vpop.f32.mrb[0].mxu0
    %v3279 = vadd.f32 %v99, %v3278
    %v3280 = vpop.f32.mrb[0].mxu0
    %3281 = vmatprep.mubr.f32.mxu0 0.0
    %3282 = vmatmul.mubr.f32.gmra.mrb[0].mxu0 %v3184
    %v3283 = vpop.f32.mrb[0].mxu0
    %v3284 = vadd.f32 %v100, %v3283
    %v3285 = vpop.f32.mrb[0].mxu0
    %3286 = vmatprep.mubr.f32.mxu0 0.0
    %3287 = vmatmul.mubr.f32.gmra.mrb[0].mxu0 %v3186
    %v3288 = vpop.f32.mrb[0].mxu0
    %v3289 = vadd.f32 %v101, %v3288
    %v3290 = vpop.f32.mrb[0].mxu0
    %3291 = vmatprep.mubr.f32.mxu0 0.0
    %3292 = vmatmul.mubr.f32.gmra.mrb[0].mxu0 %v3188
    %v3293 = vpop.f32.mrb[0].mxu0
    %v3294 = vadd.f32 %v102, %v3293
    %v3295 = vpop.f32.mrb[0].mxu0
    %3296 = vdwg.mxu0
    %v3297 = vsel %vm121, %v3269, -inf
    %3298 = vmax.xlane.f32.xlu0 %v3297
    %v3299 = vpop.xlane.xlu0 %3298
    %v3300 = vsel %vm121, %v3274, -inf
    %3301 = vmax.xlane.f32.xlu0 %v3300
    %v3302 = vpop.xlane.xlu0 %3301
    %v3303 = vsel %vm121, %v3279, -inf
    %3304 = vmax.xlane.f32.xlu0 %v3303
    %v3305 = vpop.xlane.xlu0 %3304
    %v3306 = vsel %vm121, %v3284, -inf
    %3307 = vmax.xlane.f32.xlu0 %v3306
    %v3308 = vpop.xlane.xlu0 %3307
    %v3309 = vsel %vm121, %v3289, -inf
    %3310 = vmax.xlane.f32.xlu0 %v3309
    %v3311 = vpop.xlane.xlu0 %3310
    %v3312 = vsel %vm121, %v3294, -inf
    %3313 = vmax.xlane.f32.xlu0 %v3312
    %v3314 = vpop.xlane.xlu0 %3313
    %v3315 = vsub.f32 %v3269, %v3299
    %v3316 = vsub.f32 %v3274, %v3302
    %v3317 = vsub.f32 %v3279, %v3305
    %v3318 = vsub.f32 %v3284, %v3308
    %v3319 = vsub.f32 %v3289, %v3311
    %v3320 = vsub.f32 %v3294, %v3314
    %v3321 = vmul.f32 %v3315, 1.442695
    %v3322 = vpow.pop %v3321
    %v3323 = vmul.f32 %v3316, 1.442695
    %v3324 = vpow.pop %v3323
    %v3325 = vmul.f32 %v3317, 1.442695
    %v3326 = vpow.pop %v3325
    %v3327 = vmul.f32 %v3318, 1.442695
    %v3328 = vpow.pop %v3327
    %v3329 = vmul.f32 %v3319, 1.442695
    %v3330 = vpow.pop %v3329
    %v3331 = vmul.f32 %v3320, 1.442695
    %v3332 = vpow.pop %v3331
    %3333 = vrot.lane.b32.xlu0 %v2786, 56
    %v3334 = vpop.permute.xlu0 %3333
    %3335 = vrot.lane.b32.xlu0 %v2791, 56
    %v3336 = vpop.permute.xlu0 %3335
    %3337 = vrot.lane.b32.xlu0 %v2796, 56
    %v3338 = vpop.permute.xlu0 %3337
    %3339 = vrot.lane.b32.xlu0 %v2801, 56
    %v3340 = vpop.permute.xlu0 %3339
    %3341 = vrot.lane.b32.xlu0 %v2806, 56
    %v3342 = vpop.permute.xlu0 %3341
    %3343 = vrot.lane.b32.xlu0 %v2811, 56
    %v3344 = vpop.permute.xlu0 %3343
    %v3352 = vsel %vm121, %v3322, 0
    %v3355 = vsel %vm121, %v3324, 0
    %v3358 = vsel %vm121, %v3326, 0
    %v3361 = vsel %vm121, %v3328, 0
    %v3364 = vsel %vm121, %v3330, 0
    %v3367 = vsel %vm121, %v3332, 0
    %3369 = vmatprep.subr.mxu0 0.0
    %3370 = vmatpush1.msra.mxu0 %v3334
    %3371 = vmatprep.subr.mxu0 0.0
    %3372 = vmatpush1.msra.mxu0 %v3336
    %3373 = vmatprep.subr.mxu0 0.0
    %3374 = vmatpush1.msra.mxu0 %v3338
    %3375 = vmatprep.subr.mxu0 0.0
    %3376 = vmatpush1.msra.mxu0 %v3340
    %3377 = vmatprep.subr.mxu0 0.0
    %3378 = vmatpush1.msra.mxu0 %v3342
    %3379 = vmatprep.subr.mxu0 0.0
    %3380 = vmatpush1.msra.mxu0 %v3344
    %3381 = vmatprep.subr.mxu0 0.0
    %3382 = vmatpush1.msra.mxu0 0.0
    %3383 = vmatprep.subr.mxu0 0.0
    %3384 = vmatpush1.msra.mxu0 0.0
    %3385 = vmatprep.subr.mxu0 0.0
    %3386 = vmatpush1.msra.mxu0 0.0
    %3387 = vmatprep.subr.mxu0 0.0
    %3388 = vmatpush1.msra.mxu0 0.0
    %3389 = vmatprep.subr.mxu0 0.0
    %3390 = vmatpush1.msra.mxu0 0.0
    %3391 = vmatprep.subr.mxu0 0.0
    %3392 = vmatpush1.msra.mxu0 0.0
    %3393 = vmatprep.subr.mxu0 0.0
    %3394 = vmatpush1.msra.mxu0 0.0
    %3395 = vmatprep.subr.mxu0 0.0
    %3396 = vmatpush1.msra.mxu0 0.0
    %3397 = vmatprep.subr.mxu0 0.0
    %3398 = vmatpush1.msra.mxu0 0.0
    %3399 = vmatprep.subr.mxu0 0.0
    %3400 = vmatpush1.msra.mxu0 0.0
    %3401 = vmatprep.subr.mxu0 0.0
    %3402 = vmatpush1.msra.mxu0 0.0
    %3403 = vmatprep.subr.mxu0 0.0
    %3404 = vmatpush1.msra.mxu0 0.0
    %3405 = vmatprep.subr.mxu0 0.0
    %3406 = vmatpush1.msra.mxu0 0.0
    %3407 = vmatprep.subr.mxu0 0.0
    %3408 = vmatpush1.msra.mxu0 0.0
    %3409 = vmatprep.subr.mxu0 0.0
    %3410 = vmatpush1.msra.mxu0 0.0
    %3411 = vmatprep.subr.mxu0 0.0
    %3412 = vmatpush1.msra.mxu0 0.0
    %3413 = vmatprep.subr.mxu0 0.0
    %3414 = vmatpush1.msra.mxu0 0.0
    %3415 = vmatprep.subr.mxu0 0.0
    %3416 = vmatpush1.msra.mxu0 0.0
    %3417 = vmatprep.subr.mxu0 0.0
    %3418 = vmatpush1.msra.mxu0 0.0
    %3419 = vmatprep.subr.mxu0 0.0
    %3420 = vmatpush1.msra.mxu0 0.0
    %3421 = vmatprep.subr.mxu0 0.0
    %3422 = vmatpush1.msra.mxu0 0.0
    %3423 = vmatprep.subr.mxu0 0.0
    %3424 = vmatpush1.msra.mxu0 0.0
    %3425 = vmatprep.subr.mxu0 0.0
    %3426 = vmatpush1.msra.mxu0 0.0
    %3427 = vmatprep.subr.mxu0 0.0
    %3428 = vmatpush1.msra.mxu0 0.0
    %3429 = vmatprep.subr.mxu0 0.0
    %3430 = vmatpush1.msra.mxu0 0.0
    %3431 = vmatprep.subr.mxu0 0.0
    %3432 = vmatpush1.msra.mxu0 0.0
    %3433 = vmatprep.mubr.f32.mxu0 0.0
    %3434 = vmatmul.mubr.f32.gmra.mrb[0].mxu0 %v3352
    %v3435 = vpop.f32.mrb[0].mxu0
    %v3436 = vadd.f32 0.0, %v3435
    %v3437 = vpop.f32.mrb[0].mxu0
    %3438 = vmatprep.mubr.f32.mxu0 0.0
    %3439 = vmatmul.mubr.f32.gmra.mrb[0].mxu0 %v3355
    %v3440 = vpop.f32.mrb[0].mxu0
    %v3441 = vadd.f32 0.0, %v3440
    %v3442 = vpop.f32.mrb[0].mxu0
    %3443 = vmatprep.mubr.f32.mxu0 0.0
    %3444 = vmatmul.mubr.f32.gmra.mrb[0].mxu0 %v3358
    %v3445 = vpop.f32.mrb[0].mxu0
    %v3446 = vadd.f32 0.0, %v3445
    %v3447 = vpop.f32.mrb[0].mxu0
    %3448 = vmatprep.mubr.f32.mxu0 0.0
    %3449 = vmatmul.mubr.f32.gmra.mrb[0].mxu0 %v3361
    %v3450 = vpop.f32.mrb[0].mxu0
    %v3451 = vadd.f32 0.0, %v3450
    %v3452 = vpop.f32.mrb[0].mxu0
    %3453 = vmatprep.mubr.f32.mxu0 0.0
    %3454 = vmatmul.mubr.f32.gmra.mrb[0].mxu0 %v3364
    %v3455 = vpop.f32.mrb[0].mxu0
    %v3456 = vadd.f32 0.0, %v3455
    %v3457 = vpop.f32.mrb[0].mxu0
    %3458 = vmatprep.mubr.f32.mxu0 0.0
    %3459 = vmatmul.mubr.f32.gmra.mrb[0].mxu0 %v3367
    %v3460 = vpop.f32.mrb[0].mxu0
    %v3461 = vadd.f32 0.0, %v3460
    %v3462 = vpop.f32.mrb[0].mxu0
    %3463 = vdwg.mxu0
    %v3464 = vsel %vm121, %v3322, 0.0
    %3465 = vadd.xlane.f32.xlu0 %v3464
    %v3466 = vpop.xlane.xlu0 %3465
    %v3467 = vsel %vm121, %v3324, 0.0
    %3468 = vadd.xlane.f32.xlu0 %v3467
    %v3469 = vpop.xlane.xlu0 %3468
    %v3470 = vsel %vm121, %v3326, 0.0
    %3471 = vadd.xlane.f32.xlu0 %v3470
    %v3472 = vpop.xlane.xlu0 %3471
    %v3473 = vsel %vm121, %v3328, 0.0
    %3474 = vadd.xlane.f32.xlu0 %v3473
    %v3475 = vpop.xlane.xlu0 %3474
    %v3476 = vsel %vm121, %v3330, 0.0
    %3477 = vadd.xlane.f32.xlu0 %v3476
    %v3478 = vpop.xlane.xlu0 %3477
    %v3479 = vsel %vm121, %v3332, 0.0
    %3480 = vadd.xlane.f32.xlu0 %v3479
    %v3481 = vpop.xlane.xlu0 %3480
    %v3482 = vrcp.pop %v3466
    %v3483 = vmul.f32 1.0, %v3482
    %v3484 = vrcp.pop %v3469
    %v3485 = vmul.f32 1.0, %v3484
    %v3486 = vrcp.pop %v3472
    %v3487 = vmul.f32 1.0, %v3486
    %v3488 = vrcp.pop %v3475
    %v3489 = vmul.f32 1.0, %v3488
    %v3490 = vrcp.pop %v3478
    %v3491 = vmul.f32 1.0, %v3490
    %v3492 = vrcp.pop %v3481
    %v3493 = vmul.f32 1.0, %v3492
    %v3494 = vmul.f32 %v3436, %v3483
    %v3495 = vmul.f32 %v3441, %v3485
    %v3496 = vmul.f32 %v3446, %v3487
    %v3497 = vmul.f32 %v3451, %v3489
    %v3498 = vmul.f32 %v3456, %v3491
    %v3499 = vmul.f32 %v3461, %v3493
    %3500 = vrot.lane.b32.xlu0 %v2786, 112
    %v3501 = vpop.permute.xlu0 %3500
    %3502 = vrot.lane.b32.xlu0 %v2791, 112
    %v3503 = vpop.permute.xlu0 %3502
    %3504 = vrot.lane.b32.xlu0 %v2796, 112
    %v3505 = vpop.permute.xlu0 %3504
    %3506 = vrot.lane.b32.xlu0 %v2801, 112
    %v3507 = vpop.permute.xlu0 %3506
    %3508 = vrot.lane.b32.xlu0 %v2806, 112
    %v3509 = vpop.permute.xlu0 %3508
    %3510 = vrot.lane.b32.xlu0 %v2811, 112
    %v3511 = vpop.permute.xlu0 %3510
    %3512 = vrot.lane.b32.xlu0 %v2786, 80
    %v3513 = vpop.permute.xlu0 %3512
    %3514 = vrot.lane.b32.xlu0 %v2791, 80
    %v3515 = vpop.permute.xlu0 %3514
    %3516 = vrot.lane.b32.xlu0 %v2796, 80
    %v3517 = vpop.permute.xlu0 %3516
    %3518 = vrot.lane.b32.xlu0 %v2801, 80
    %v3519 = vpop.permute.xlu0 %3518
    %3520 = vrot.lane.b32.xlu0 %v2806, 80
    %v3521 = vpop.permute.xlu0 %3520
    %3522 = vrot.lane.b32.xlu0 %v2811, 80
    %v3523 = vpop.permute.xlu0 %3522
    %v3524 = vsel %vm482, %v3501, 0
    %v3526 = vsel %vm482, %v3503, 0
    %v3528 = vsel %vm482, %v3505, 0
    %v3530 = vsel %vm482, %v3507, 0
    %v3532 = vsel %vm482, %v3509, 0
    %v3534 = vsel %vm482, %v3511, 0
    %v3536 = vsel %vm482, %v3513, 0
    %v3538 = vsel %vm482, %v3515, 0
    %v3540 = vsel %vm482, %v3517, 0
    %v3542 = vsel %vm482, %v3519, 0
    %v3544 = vsel %vm482, %v3521, 0
    %v3546 = vsel %vm482, %v3523, 0
    %3548 = vmatprep.subr.mxu0 0.0
    %3549 = vmatpush1.xpose.msra.mxu0 %v3536
    %3550 = vmatprep.subr.mxu0 0.0
    %3551 = vmatpush1.xpose.msra.mxu0 %v3538
    %3552 = vmatprep.subr.mxu0 0.0
    %3553 = vmatpush1.xpose.msra.mxu0 %v3540
    %3554 = vmatprep.subr.mxu0 0.0
    %3555 = vmatpush1.xpose.msra.mxu0 %v3542
    %3556 = vmatprep.subr.mxu0 0.0
    %3557 = vmatpush1.xpose.msra.mxu0 %v3544
    %3558 = vmatprep.subr.mxu0 0.0
    %3559 = vmatpush1.xpose.msra.mxu0 %v3546
    %3560 = vmatprep.subr.mxu0 0.0
    %3561 = vmatpush1.xpose.msra.mxu0 0.0
    %3562 = vmatprep.subr.mxu0 0.0
    %3563 = vmatpush1.xpose.msra.mxu0 0.0
    %3564 = vmatprep.subr.mxu0 0.0
    %3565 = vmatpush1.xpose.msra.mxu0 0.0
    %3566 = vmatprep.subr.mxu0 0.0
    %3567 = vmatpush1.xpose.msra.mxu0 0.0
    %3568 = vmatprep.subr.mxu0 0.0
    %3569 = vmatpush1.xpose.msra.mxu0 0.0
    %3570 = vmatprep.subr.mxu0 0.0
    %3571 = vmatpush1.xpose.msra.mxu0 0.0
    %3572 = vmatprep.subr.mxu0 0.0
    %3573 = vmatpush1.xpose.msra.mxu0 0.0
    %3574 = vmatprep.subr.mxu0 0.0
    %3575 = vmatpush1.xpose.msra.mxu0 0.0
    %3576 = vmatprep.subr.mxu0 0.0
    %3577 = vmatpush1.xpose.msra.mxu0 0.0
    %3578 = vmatprep.subr.mxu0 0.0
    %3579 = vmatpush1.xpose.msra.mxu0 0.0
    %3580 = vmatprep.subr.mxu0 0.0
    %3581 = vmatpush1.xpose.msra.mxu0 0.0
    %3582 = vmatprep.subr.mxu0 0.0
    %3583 = vmatpush1.xpose.msra.mxu0 0.0
    %3584 = vmatprep.subr.mxu0 0.0
    %3585 = vmatpush1.xpose.msra.mxu0 0.0
    %3586 = vmatprep.subr.mxu0 0.0
    %3587 = vmatpush1.xpose.msra.mxu0 0.0
    %3588 = vmatprep.subr.mxu0 0.0
    %3589 = vmatpush1.xpose.msra.mxu0 0.0
    %3590 = vmatprep.subr.mxu0 0.0
    %3591 = vmatpush1.xpose.msra.mxu0 0.0
    %3592 = vmatprep.subr.mxu0 0.0
    %3593 = vmatpush1.xpose.msra.mxu0 0.0
    %3594 = vmatprep.subr.mxu0 0.0
    %3595 = vmatpush1.xpose.msra.mxu0 0.0
    %3596 = vmatprep.subr.mxu0 0.0
    %3597 = vmatpush1.xpose.msra.mxu0 0.0
    %3598 = vmatprep.subr.mxu0 0.0
    %3599 = vmatpush1.xpose.msra.mxu0 0.0
    %3600 = vmatprep.subr.mxu0 0.0
    %3601 = vmatpush1.xpose.msra.mxu0 0.0
    %3602 = vmatprep.subr.mxu0 0.0
    %3603 = vmatpush1.xpose.msra.mxu0 0.0
    %3604 = vmatprep.subr.mxu0 0.0
    %3605 = vmatpush1.xpose.msra.mxu0 0.0
    %3606 = vmatprep.subr.mxu0 0.0
    %3607 = vmatpush1.xpose.msra.mxu0 0.0
    %3608 = vmatprep.subr.mxu0 0.0
    %3609 = vmatpush1.xpose.msra.mxu0 0.0
    %3610 = vmatprep.subr.mxu0 0.0
    %3611 = vmatpush1.xpose.msra.mxu0 0.0
    %3612 = vmatprep.mubr.f32.mxu0 0.0
    %3613 = vmatmul.mubr.f32.gmra.mrb[0].mxu0 %v3524
    %v3614 = vpop.f32.mrb[0].mxu0
    %v3615 = vadd.f32 %v97, %v3614
    %v3616 = vpop.f32.mrb[0].mxu0
    %3617 = vmatprep.mubr.f32.mxu0 0.0
    %3618 = vmatmul.mubr.f32.gmra.mrb[0].mxu0 %v3526
    %v3619 = vpop.f32.mrb[0].mxu0
    %v3620 = vadd.f32 %v98, %v3619
    %v3621 = vpop.f32.mrb[0].mxu0
    %3622 = vmatprep.mubr.f32.mxu0 0.0
    %3623 = vmatmul.mubr.f32.gmra.mrb[0].mxu0 %v3528
    %v3624 = vpop.f32.mrb[0].mxu0
    %v3625 = vadd.f32 %v99, %v3624
    %v3626 = vpop.f32.mrb[0].mxu0
    %3627 = vmatprep.mubr.f32.mxu0 0.0
    %3628 = vmatmul.mubr.f32.gmra.mrb[0].mxu0 %v3530
    %v3629 = vpop.f32.mrb[0].mxu0
    %v3630 = vadd.f32 %v100, %v3629
    %v3631 = vpop.f32.mrb[0].mxu0
    %3632 = vmatprep.mubr.f32.mxu0 0.0
    %3633 = vmatmul.mubr.f32.gmra.mrb[0].mxu0 %v3532
    %v3634 = vpop.f32.mrb[0].mxu0
    %v3635 = vadd.f32 %v101, %v3634
    %v3636 = vpop.f32.mrb[0].mxu0
    %3637 = vmatprep.mubr.f32.mxu0 0.0
    %3638 = vmatmul.mubr.f32.gmra.mrb[0].mxu0 %v3534
    %v3639 = vpop.f32.mrb[0].mxu0
    %v3640 = vadd.f32 %v102, %v3639
    %v3641 = vpop.f32.mrb[0].mxu0
    %3642 = vdwg.mxu0
    %v3643 = vsel %vm121, %v3615, -inf
    %3644 = vmax.xlane.f32.xlu0 %v3643
    %v3645 = vpop.xlane.xlu0 %3644
    %v3646 = vsel %vm121, %v3620, -inf
    %3647 = vmax.xlane.f32.xlu0 %v3646
    %v3648 = vpop.xlane.xlu0 %3647
    %v3649 = vsel %vm121, %v3625, -inf
    %3650 = vmax.xlane.f32.xlu0 %v3649
    %v3651 = vpop.xlane.xlu0 %3650
    %v3652 = vsel %vm121, %v3630, -inf
    %3653 = vmax.xlane.f32.xlu0 %v3652
    %v3654 = vpop.xlane.xlu0 %3653
    %v3655 = vsel %vm121, %v3635, -inf
    %3656 = vmax.xlane.f32.xlu0 %v3655
    %v3657 = vpop.xlane.xlu0 %3656
    %v3658 = vsel %vm121, %v3640, -inf
    %3659 = vmax.xlane.f32.xlu0 %v3658
    %v3660 = vpop.xlane.xlu0 %3659
    %v3661 = vsub.f32 %v3615, %v3645
    %v3662 = vsub.f32 %v3620, %v3648
    %v3663 = vsub.f32 %v3625, %v3651
    %v3664 = vsub.f32 %v3630, %v3654
    %v3665 = vsub.f32 %v3635, %v3657
    %v3666 = vsub.f32 %v3640, %v3660
    %v3667 = vmul.f32 %v3661, 1.442695
    %v3668 = vpow.pop %v3667
    %v3669 = vmul.f32 %v3662, 1.442695
    %v3670 = vpow.pop %v3669
    %v3671 = vmul.f32 %v3663, 1.442695
    %v3672 = vpow.pop %v3671
    %v3673 = vmul.f32 %v3664, 1.442695
    %v3674 = vpow.pop %v3673
    %v3675 = vmul.f32 %v3665, 1.442695
    %v3676 = vpow.pop %v3675
    %v3677 = vmul.f32 %v3666, 1.442695
    %v3678 = vpow.pop %v3677
    %3679 = vrot.lane.b32.xlu0 %v2786, 48
    %v3680 = vpop.permute.xlu0 %3679
    %3681 = vrot.lane.b32.xlu0 %v2791, 48
    %v3682 = vpop.permute.xlu0 %3681
    %3683 = vrot.lane.b32.xlu0 %v2796, 48
    %v3684 = vpop.permute.xlu0 %3683
    %3685 = vrot.lane.b32.xlu0 %v2801, 48
    %v3686 = vpop.permute.xlu0 %3685
    %3687 = vrot.lane.b32.xlu0 %v2806, 48
    %v3688 = vpop.permute.xlu0 %3687
    %3689 = vrot.lane.b32.xlu0 %v2811, 48
    %v3690 = vpop.permute.xlu0 %3689
    %v3698 = vsel %vm121, %v3668, 0
    %v3701 = vsel %vm121, %v3670, 0
    %v3704 = vsel %vm121, %v3672, 0
    %v3707 = vsel %vm121, %v3674, 0
    %v3710 = vsel %vm121, %v3676, 0
    %v3713 = vsel %vm121, %v3678, 0
    %3715 = vmatprep.subr.mxu0 0.0
    %3716 = vmatpush1.msra.mxu0 %v3680
    %3717 = vmatprep.subr.mxu0 0.0
    %3718 = vmatpush1.msra.mxu0 %v3682
    %3719 = vmatprep.subr.mxu0 0.0
    %3720 = vmatpush1.msra.mxu0 %v3684
    %3721 = vmatprep.subr.mxu0 0.0
    %3722 = vmatpush1.msra.mxu0 %v3686
    %3723 = vmatprep.subr.mxu0 0.0
    %3724 = vmatpush1.msra.mxu0 %v3688
    %3725 = vmatprep.subr.mxu0 0.0
    %3726 = vmatpush1.msra.mxu0 %v3690
    %3727 = vmatprep.subr.mxu0 0.0
    %3728 = vmatpush1.msra.mxu0 0.0
    %3729 = vmatprep.subr.mxu0 0.0
    %3730 = vmatpush1.msra.mxu0 0.0
    %3731 = vmatprep.subr.mxu0 0.0
    %3732 = vmatpush1.msra.mxu0 0.0
    %3733 = vmatprep.subr.mxu0 0.0
    %3734 = vmatpush1.msra.mxu0 0.0
    %3735 = vmatprep.subr.mxu0 0.0
    %3736 = vmatpush1.msra.mxu0 0.0
    %3737 = vmatprep.subr.mxu0 0.0
    %3738 = vmatpush1.msra.mxu0 0.0
    %3739 = vmatprep.subr.mxu0 0.0
    %3740 = vmatpush1.msra.mxu0 0.0
    %3741 = vmatprep.subr.mxu0 0.0
    %3742 = vmatpush1.msra.mxu0 0.0
    %3743 = vmatprep.subr.mxu0 0.0
    %3744 = vmatpush1.msra.mxu0 0.0
    %3745 = vmatprep.subr.mxu0 0.0
    %3746 = vmatpush1.msra.mxu0 0.0
    %3747 = vmatprep.subr.mxu0 0.0
    %3748 = vmatpush1.msra.mxu0 0.0
    %3749 = vmatprep.subr.mxu0 0.0
    %3750 = vmatpush1.msra.mxu0 0.0
    %3751 = vmatprep.subr.mxu0 0.0
    %3752 = vmatpush1.msra.mxu0 0.0
    %3753 = vmatprep.subr.mxu0 0.0
    %3754 = vmatpush1.msra.mxu0 0.0
    %3755 = vmatprep.subr.mxu0 0.0
    %3756 = vmatpush1.msra.mxu0 0.0
    %3757 = vmatprep.subr.mxu0 0.0
    %3758 = vmatpush1.msra.mxu0 0.0
    %3759 = vmatprep.subr.mxu0 0.0
    %3760 = vmatpush1.msra.mxu0 0.0
    %3761 = vmatprep.subr.mxu0 0.0
    %3762 = vmatpush1.msra.mxu0 0.0
    %3763 = vmatprep.subr.mxu0 0.0
    %3764 = vmatpush1.msra.mxu0 0.0
    %3765 = vmatprep.subr.mxu0 0.0
    %3766 = vmatpush1.msra.mxu0 0.0
    %3767 = vmatprep.subr.mxu0 0.0
    %3768 = vmatpush1.msra.mxu0 0.0
    %3769 = vmatprep.subr.mxu0 0.0
    %3770 = vmatpush1.msra.mxu0 0.0
    %3771 = vmatprep.subr.mxu0 0.0
    %3772 = vmatpush1.msra.mxu0 0.0
    %3773 = vmatprep.subr.mxu0 0.0
    %3774 = vmatpush1.msra.mxu0 0.0
    %3775 = vmatprep.subr.mxu0 0.0
    %3776 = vmatpush1.msra.mxu0 0.0
    %3777 = vmatprep.subr.mxu0 0.0
    %3778 = vmatpush1.msra.mxu0 0.0
    %3779 = vmatprep.mubr.f32.mxu0 0.0
    %3780 = vmatmul.mubr.f32.gmra.mrb[0].mxu0 %v3698
    %v3781 = vpop.f32.mrb[0].mxu0
    %v3782 = vadd.f32 0.0, %v3781
    %v3783 = vpop.f32.mrb[0].mxu0
    %3784 = vmatprep.mubr.f32.mxu0 0.0
    %3785 = vmatmul.mubr.f32.gmra.mrb[0].mxu0 %v3701
    %v3786 = vpop.f32.mrb[0].mxu0
    %v3787 = vadd.f32 0.0, %v3786
    %v3788 = vpop.f32.mrb[0].mxu0
    %3789 = vmatprep.mubr.f32.mxu0 0.0
    %3790 = vmatmul.mubr.f32.gmra.mrb[0].mxu0 %v3704
    %v3791 = vpop.f32.mrb[0].mxu0
    %v3792 = vadd.f32 0.0, %v3791
    %v3793 = vpop.f32.mrb[0].mxu0
    %3794 = vmatprep.mubr.f32.mxu0 0.0
    %3795 = vmatmul.mubr.f32.gmra.mrb[0].mxu0 %v3707
    %v3796 = vpop.f32.mrb[0].mxu0
    %v3797 = vadd.f32 0.0, %v3796
    %v3798 = vpop.f32.mrb[0].mxu0
    %3799 = vmatprep.mubr.f32.mxu0 0.0
    %3800 = vmatmul.mubr.f32.gmra.mrb[0].mxu0 %v3710
    %v3801 = vpop.f32.mrb[0].mxu0
    %v3802 = vadd.f32 0.0, %v3801
    %v3803 = vpop.f32.mrb[0].mxu0
    %3804 = vmatprep.mubr.f32.mxu0 0.0
    %3805 = vmatmul.mubr.f32.gmra.mrb[0].mxu0 %v3713
    %v3806 = vpop.f32.mrb[0].mxu0
    %v3807 = vadd.f32 0.0, %v3806
    %v3808 = vpop.f32.mrb[0].mxu0
    %3809 = vdwg.mxu0
    %v3810 = vsel %vm121, %v3668, 0.0
    %3811 = vadd.xlane.f32.xlu0 %v3810
    %v3812 = vpop.xlane.xlu0 %3811
    %v3813 = vsel %vm121, %v3670, 0.0
    %3814 = vadd.xlane.f32.xlu0 %v3813
    %v3815 = vpop.xlane.xlu0 %3814
    %v3816 = vsel %vm121, %v3672, 0.0
    %3817 = vadd.xlane.f32.xlu0 %v3816
    %v3818 = vpop.xlane.xlu0 %3817
    %v3819 = vsel %vm121, %v3674, 0.0
    %3820 = vadd.xlane.f32.xlu0 %v3819
    %v3821 = vpop.xlane.xlu0 %3820
    %v3822 = vsel %vm121, %v3676, 0.0
    %3823 = vadd.xlane.f32.xlu0 %v3822
    %v3824 = vpop.xlane.xlu0 %3823
    %v3825 = vsel %vm121, %v3678, 0.0
    %3826 = vadd.xlane.f32.xlu0 %v3825
    %v3827 = vpop.xlane.xlu0 %3826
    %v3828 = vrcp.pop %v3812
    %v3829 = vmul.f32 1.0, %v3828
    %v3830 = vrcp.pop %v3815
    %v3831 = vmul.f32 1.0, %v3830
    %v3832 = vrcp.pop %v3818
    %v3833 = vmul.f32 1.0, %v3832
    %v3834 = vrcp.pop %v3821
    %v3835 = vmul.f32 1.0, %v3834
    %v3836 = vrcp.pop %v3824
    %v3837 = vmul.f32 1.0, %v3836
    %v3838 = vrcp.pop %v3827
    %v3839 = vmul.f32 1.0, %v3838
    %v3840 = vmul.f32 %v3782, %v3829
    %v3841 = vmul.f32 %v3787, %v3831
    %v3842 = vmul.f32 %v3792, %v3833
    %v3843 = vmul.f32 %v3797, %v3835
    %v3844 = vmul.f32 %v3802, %v3837
    %v3845 = vmul.f32 %v3807, %v3839
    %3846 = vrot.lane.b32.xlu0 %v2786, 104
    %v3847 = vpop.permute.xlu0 %3846
    %3848 = vrot.lane.b32.xlu0 %v2791, 104
    %v3849 = vpop.permute.xlu0 %3848
    %3850 = vrot.lane.b32.xlu0 %v2796, 104
    %v3851 = vpop.permute.xlu0 %3850
    %3852 = vrot.lane.b32.xlu0 %v2801, 104
    %v3853 = vpop.permute.xlu0 %3852
    %3854 = vrot.lane.b32.xlu0 %v2806, 104
    %v3855 = vpop.permute.xlu0 %3854
    %3856 = vrot.lane.b32.xlu0 %v2811, 104
    %v3857 = vpop.permute.xlu0 %3856
    %3858 = vrot.lane.b32.xlu0 %v2786, 72
    %v3859 = vpop.permute.xlu0 %3858
    %3860 = vrot.lane.b32.xlu0 %v2791, 72
    %v3861 = vpop.permute.xlu0 %3860
    %3862 = vrot.lane.b32.xlu0 %v2796, 72
    %v3863 = vpop.permute.xlu0 %3862
    %3864 = vrot.lane.b32.xlu0 %v2801, 72
    %v3865 = vpop.permute.xlu0 %3864
    %3866 = vrot.lane.b32.xlu0 %v2806, 72
    %v3867 = vpop.permute.xlu0 %3866
    %3868 = vrot.lane.b32.xlu0 %v2811, 72
    %v3869 = vpop.permute.xlu0 %3868
    %v3870 = vsel %vm482, %v3847, 0
    %v3872 = vsel %vm482, %v3849, 0
    %v3874 = vsel %vm482, %v3851, 0
    %v3876 = vsel %vm482, %v3853, 0
    %v3878 = vsel %vm482, %v3855, 0
    %v3880 = vsel %vm482, %v3857, 0
    %v3882 = vsel %vm482, %v3859, 0
    %v3884 = vsel %vm482, %v3861, 0
    %v3886 = vsel %vm482, %v3863, 0
    %v3888 = vsel %vm482, %v3865, 0
    %v3890 = vsel %vm482, %v3867, 0
    %v3892 = vsel %vm482, %v3869, 0
    %3894 = vmatprep.subr.mxu0 0.0
    %3895 = vmatpush1.xpose.msra.mxu0 %v3882
    %3896 = vmatprep.subr.mxu0 0.0
    %3897 = vmatpush1.xpose.msra.mxu0 %v3884
    %3898 = vmatprep.subr.mxu0 0.0
    %3899 = vmatpush1.xpose.msra.mxu0 %v3886
    %3900 = vmatprep.subr.mxu0 0.0
    %3901 = vmatpush1.xpose.msra.mxu0 %v3888
    %3902 = vmatprep.subr.mxu0 0.0
    %3903 = vmatpush1.xpose.msra.mxu0 %v3890
    %3904 = vmatprep.subr.mxu0 0.0
    %3905 = vmatpush1.xpose.msra.mxu0 %v3892
    %3906 = vmatprep.subr.mxu0 0.0
    %3907 = vmatpush1.xpose.msra.mxu0 0.0
    %3908 = vmatprep.subr.mxu0 0.0
    %3909 = vmatpush1.xpose.msra.mxu0 0.0
    %3910 = vmatprep.subr.mxu0 0.0
    %3911 = vmatpush1.xpose.msra.mxu0 0.0
    %3912 = vmatprep.subr.mxu0 0.0
    %3913 = vmatpush1.xpose.msra.mxu0 0.0
    %3914 = vmatprep.subr.mxu0 0.0
    %3915 = vmatpush1.xpose.msra.mxu0 0.0
    %3916 = vmatprep.subr.mxu0 0.0
    %3917 = vmatpush1.xpose.msra.mxu0 0.0
    %3918 = vmatprep.subr.mxu0 0.0
    %3919 = vmatpush1.xpose.msra.mxu0 0.0
    %3920 = vmatprep.subr.mxu0 0.0
    %3921 = vmatpush1.xpose.msra.mxu0 0.0
    %3922 = vmatprep.subr.mxu0 0.0
    %3923 = vmatpush1.xpose.msra.mxu0 0.0
    %3924 = vmatprep.subr.mxu0 0.0
    %3925 = vmatpush1.xpose.msra.mxu0 0.0
    %3926 = vmatprep.subr.mxu0 0.0
    %3927 = vmatpush1.xpose.msra.mxu0 0.0
    %3928 = vmatprep.subr.mxu0 0.0
    %3929 = vmatpush1.xpose.msra.mxu0 0.0
    %3930 = vmatprep.subr.mxu0 0.0
    %3931 = vmatpush1.xpose.msra.mxu0 0.0
    %3932 = vmatprep.subr.mxu0 0.0
    %3933 = vmatpush1.xpose.msra.mxu0 0.0
    %3934 = vmatprep.subr.mxu0 0.0
    %3935 = vmatpush1.xpose.msra.mxu0 0.0
    %3936 = vmatprep.subr.mxu0 0.0
    %3937 = vmatpush1.xpose.msra.mxu0 0.0
    %3938 = vmatprep.subr.mxu0 0.0
    %3939 = vmatpush1.xpose.msra.mxu0 0.0
    %3940 = vmatprep.subr.mxu0 0.0
    %3941 = vmatpush1.xpose.msra.mxu0 0.0
    %3942 = vmatprep.subr.mxu0 0.0
    %3943 = vmatpush1.xpose.msra.mxu0 0.0
    %3944 = vmatprep.subr.mxu0 0.0
    %3945 = vmatpush1.xpose.msra.mxu0 0.0
    %3946 = vmatprep.subr.mxu0 0.0
    %3947 = vmatpush1.xpose.msra.mxu0 0.0
    %3948 = vmatprep.subr.mxu0 0.0
    %3949 = vmatpush1.xpose.msra.mxu0 0.0
    %3950 = vmatprep.subr.mxu0 0.0
    %3951 = vmatpush1.xpose.msra.mxu0 0.0
    %3952 = vmatprep.subr.mxu0 0.0
    %3953 = vmatpush1.xpose.msra.mxu0 0.0
    %3954 = vmatprep.subr.mxu0 0.0
    %3955 = vmatpush1.xpose.msra.mxu0 0.0
    %3956 = vmatprep.subr.mxu0 0.0
    %3957 = vmatpush1.xpose.msra.mxu0 0.0
    %3958 = vmatprep.mubr.f32.mxu0 0.0
    %3959 = vmatmul.mubr.f32.gmra.mrb[0].mxu0 %v3870
    %v3960 = vpop.f32.mrb[0].mxu0
    %v3961 = vadd.f32 %v97, %v3960
    %v3962 = vpop.f32.mrb[0].mxu0
    %3963 = vmatprep.mubr.f32.mxu0 0.0
    %3964 = vmatmul.mubr.f32.gmra.mrb[0].mxu0 %v3872
    %v3965 = vpop.f32.mrb[0].mxu0
    %v3966 = vadd.f32 %v98, %v3965
    %v3967 = vpop.f32.mrb[0].mxu0
    %3968 = vmatprep.mubr.f32.mxu0 0.0
    %3969 = vmatmul.mubr.f32.gmra.mrb[0].mxu0 %v3874
    %v3970 = vpop.f32.mrb[0].mxu0
    %v3971 = vadd.f32 %v99, %v3970
    %v3972 = vpop.f32.mrb[0].mxu0
    %3973 = vmatprep.mubr.f32.mxu0 0.0
    %3974 = vmatmul.mubr.f32.gmra.mrb[0].mxu0 %v3876
    %v3975 = vpop.f32.mrb[0].mxu0
    %v3976 = vadd.f32 %v100, %v3975
    %v3977 = vpop.f32.mrb[0].mxu0
    %3978 = vmatprep.mubr.f32.mxu0 0.0
    %3979 = vmatmul.mubr.f32.gmra.mrb[0].mxu0 %v3878
    %v3980 = vpop.f32.mrb[0].mxu0
    %v3981 = vadd.f32 %v101, %v3980
    %v3982 = vpop.f32.mrb[0].mxu0
    %3983 = vmatprep.mubr.f32.mxu0 0.0
    %3984 = vmatmul.mubr.f32.gmra.mrb[0].mxu0 %v3880
    %v3985 = vpop.f32.mrb[0].mxu0
    %v3986 = vadd.f32 %v102, %v3985
    %v3987 = vpop.f32.mrb[0].mxu0
    %3988 = vdwg.mxu0
    %v3989 = vsel %vm121, %v3961, -inf
    %3990 = vmax.xlane.f32.xlu0 %v3989
    %v3991 = vpop.xlane.xlu0 %3990
    %v3992 = vsel %vm121, %v3966, -inf
    %3993 = vmax.xlane.f32.xlu0 %v3992
    %v3994 = vpop.xlane.xlu0 %3993
    %v3995 = vsel %vm121, %v3971, -inf
    %3996 = vmax.xlane.f32.xlu0 %v3995
    %v3997 = vpop.xlane.xlu0 %3996
    %v3998 = vsel %vm121, %v3976, -inf
    %3999 = vmax.xlane.f32.xlu0 %v3998
    %v4000 = vpop.xlane.xlu0 %3999
    %v4001 = vsel %vm121, %v3981, -inf
    %4002 = vmax.xlane.f32.xlu0 %v4001
    %v4003 = vpop.xlane.xlu0 %4002
    %v4004 = vsel %vm121, %v3986, -inf
    %4005 = vmax.xlane.f32.xlu0 %v4004
    %v4006 = vpop.xlane.xlu0 %4005
    %v4007 = vsub.f32 %v3961, %v3991
    %v4008 = vsub.f32 %v3966, %v3994
    %v4009 = vsub.f32 %v3971, %v3997
    %v4010 = vsub.f32 %v3976, %v4000
    %v4011 = vsub.f32 %v3981, %v4003
    %v4012 = vsub.f32 %v3986, %v4006
    %v4013 = vmul.f32 %v4007, 1.442695
    %v4014 = vpow.pop %v4013
    %v4015 = vmul.f32 %v4008, 1.442695
    %v4016 = vpow.pop %v4015
    %v4017 = vmul.f32 %v4009, 1.442695
    %v4018 = vpow.pop %v4017
    %v4019 = vmul.f32 %v4010, 1.442695
    %v4020 = vpow.pop %v4019
    %v4021 = vmul.f32 %v4011, 1.442695
    %v4022 = vpow.pop %v4021
    %v4023 = vmul.f32 %v4012, 1.442695
    %v4024 = vpow.pop %v4023
    %4025 = vrot.lane.b32.xlu0 %v2786, 40
    %v4026 = vpop.permute.xlu0 %4025
    %4027 = vrot.lane.b32.xlu0 %v2791, 40
    %v4028 = vpop.permute.xlu0 %4027
    %4029 = vrot.lane.b32.xlu0 %v2796, 40
    %v4030 = vpop.permute.xlu0 %4029
    %4031 = vrot.lane.b32.xlu0 %v2801, 40
    %v4032 = vpop.permute.xlu0 %4031
    %4033 = vrot.lane.b32.xlu0 %v2806, 40
    %v4034 = vpop.permute.xlu0 %4033
    %4035 = vrot.lane.b32.xlu0 %v2811, 40
    %v4036 = vpop.permute.xlu0 %4035
    %v4044 = vsel %vm121, %v4014, 0
    %v4047 = vsel %vm121, %v4016, 0
    %v4050 = vsel %vm121, %v4018, 0
    %v4053 = vsel %vm121, %v4020, 0
    %v4056 = vsel %vm121, %v4022, 0
    %v4059 = vsel %vm121, %v4024, 0
    %4061 = vmatprep.subr.mxu0 0.0
    %4062 = vmatpush1.msra.mxu0 %v4026
    %4063 = vmatprep.subr.mxu0 0.0
    %4064 = vmatpush1.msra.mxu0 %v4028
    %4065 = vmatprep.subr.mxu0 0.0
    %4066 = vmatpush1.msra.mxu0 %v4030
    %4067 = vmatprep.subr.mxu0 0.0
    %4068 = vmatpush1.msra.mxu0 %v4032
    %4069 = vmatprep.subr.mxu0 0.0
    %4070 = vmatpush1.msra.mxu0 %v4034
    %4071 = vmatprep.subr.mxu0 0.0
    %4072 = vmatpush1.msra.mxu0 %v4036
    %4073 = vmatprep.subr.mxu0 0.0
    %4074 = vmatpush1.msra.mxu0 0.0
    %4075 = vmatprep.subr.mxu0 0.0
    %4076 = vmatpush1.msra.mxu0 0.0
    %4077 = vmatprep.subr.mxu0 0.0
    %4078 = vmatpush1.msra.mxu0 0.0
    %4079 = vmatprep.subr.mxu0 0.0
    %4080 = vmatpush1.msra.mxu0 0.0
    %4081 = vmatprep.subr.mxu0 0.0
    %4082 = vmatpush1.msra.mxu0 0.0
    %4083 = vmatprep.subr.mxu0 0.0
    %4084 = vmatpush1.msra.mxu0 0.0
    %4085 = vmatprep.subr.mxu0 0.0
    %4086 = vmatpush1.msra.mxu0 0.0
    %4087 = vmatprep.subr.mxu0 0.0
    %4088 = vmatpush1.msra.mxu0 0.0
    %4089 = vmatprep.subr.mxu0 0.0
    %4090 = vmatpush1.msra.mxu0 0.0
    %4091 = vmatprep.subr.mxu0 0.0
    %4092 = vmatpush1.msra.mxu0 0.0
    %4093 = vmatprep.subr.mxu0 0.0
    %4094 = vmatpush1.msra.mxu0 0.0
    %4095 = vmatprep.subr.mxu0 0.0
    %4096 = vmatpush1.msra.mxu0 0.0
    %4097 = vmatprep.subr.mxu0 0.0
    %4098 = vmatpush1.msra.mxu0 0.0
    %4099 = vmatprep.subr.mxu0 0.0
    %4100 = vmatpush1.msra.mxu0 0.0
    %4101 = vmatprep.subr.mxu0 0.0
    %4102 = vmatpush1.msra.mxu0 0.0
    %4103 = vmatprep.subr.mxu0 0.0
    %4104 = vmatpush1.msra.mxu0 0.0
    %4105 = vmatprep.subr.mxu0 0.0
    %4106 = vmatpush1.msra.mxu0 0.0
    %4107 = vmatprep.subr.mxu0 0.0
    %4108 = vmatpush1.msra.mxu0 0.0
    %4109 = vmatprep.subr.mxu0 0.0
    %4110 = vmatpush1.msra.mxu0 0.0
    %4111 = vmatprep.subr.mxu0 0.0
    %4112 = vmatpush1.msra.mxu0 0.0
    %4113 = vmatprep.subr.mxu0 0.0
    %4114 = vmatpush1.msra.mxu0 0.0
    %4115 = vmatprep.subr.mxu0 0.0
    %4116 = vmatpush1.msra.mxu0 0.0
    %4117 = vmatprep.subr.mxu0 0.0
    %4118 = vmatpush1.msra.mxu0 0.0
    %4119 = vmatprep.subr.mxu0 0.0
    %4120 = vmatpush1.msra.mxu0 0.0
    %4121 = vmatprep.subr.mxu0 0.0
    %4122 = vmatpush1.msra.mxu0 0.0
    %4123 = vmatprep.subr.mxu0 0.0
    %4124 = vmatpush1.msra.mxu0 0.0
    %4125 = vmatprep.mubr.f32.mxu0 0.0
    %4126 = vmatmul.mubr.f32.gmra.mrb[0].mxu0 %v4044
    %v4127 = vpop.f32.mrb[0].mxu0
    %v4128 = vadd.f32 0.0, %v4127
    %v4129 = vpop.f32.mrb[0].mxu0
    %4130 = vmatprep.mubr.f32.mxu0 0.0
    %4131 = vmatmul.mubr.f32.gmra.mrb[0].mxu0 %v4047
    %v4132 = vpop.f32.mrb[0].mxu0
    %v4133 = vadd.f32 0.0, %v4132
    %v4134 = vpop.f32.mrb[0].mxu0
    %4135 = vmatprep.mubr.f32.mxu0 0.0
    %4136 = vmatmul.mubr.f32.gmra.mrb[0].mxu0 %v4050
    %v4137 = vpop.f32.mrb[0].mxu0
    %v4138 = vadd.f32 0.0, %v4137
    %v4139 = vpop.f32.mrb[0].mxu0
    %4140 = vmatprep.mubr.f32.mxu0 0.0
    %4141 = vmatmul.mubr.f32.gmra.mrb[0].mxu0 %v4053
    %v4142 = vpop.f32.mrb[0].mxu0
    %v4143 = vadd.f32 0.0, %v4142
    %v4144 = vpop.f32.mrb[0].mxu0
    %4145 = vmatprep.mubr.f32.mxu0 0.0
    %4146 = vmatmul.mubr.f32.gmra.mrb[0].mxu0 %v4056
    %v4147 = vpop.f32.mrb[0].mxu0
    %v4148 = vadd.f32 0.0, %v4147
    %v4149 = vpop.f32.mrb[0].mxu0
    %4150 = vmatprep.mubr.f32.mxu0 0.0
    %4151 = vmatmul.mubr.f32.gmra.mrb[0].mxu0 %v4059
    %v4152 = vpop.f32.mrb[0].mxu0
    %v4153 = vadd.f32 0.0, %v4152
    %v4154 = vpop.f32.mrb[0].mxu0
    %4155 = vdwg.mxu0
    %v4156 = vsel %vm121, %v4014, 0.0
    %4157 = vadd.xlane.f32.xlu0 %v4156
    %v4158 = vpop.xlane.xlu0 %4157
    %v4159 = vsel %vm121, %v4016, 0.0
    %4160 = vadd.xlane.f32.xlu0 %v4159
    %v4161 = vpop.xlane.xlu0 %4160
    %v4162 = vsel %vm121, %v4018, 0.0
    %4163 = vadd.xlane.f32.xlu0 %v4162
    %v4164 = vpop.xlane.xlu0 %4163
    %v4165 = vsel %vm121, %v4020, 0.0
    %4166 = vadd.xlane.f32.xlu0 %v4165
    %v4167 = vpop.xlane.xlu0 %4166
    %v4168 = vsel %vm121, %v4022, 0.0
    %4169 = vadd.xlane.f32.xlu0 %v4168
    %v4170 = vpop.xlane.xlu0 %4169
    %v4171 = vsel %vm121, %v4024, 0.0
    %4172 = vadd.xlane.f32.xlu0 %v4171
    %v4173 = vpop.xlane.xlu0 %4172
    %v4174 = vrcp.pop %v4158
    %v4175 = vmul.f32 1.0, %v4174
    %v4176 = vrcp.pop %v4161
    %v4177 = vmul.f32 1.0, %v4176
    %v4178 = vrcp.pop %v4164
    %v4179 = vmul.f32 1.0, %v4178
    %v4180 = vrcp.pop %v4167
    %v4181 = vmul.f32 1.0, %v4180
    %v4182 = vrcp.pop %v4170
    %v4183 = vmul.f32 1.0, %v4182
    %v4184 = vrcp.pop %v4173
    %v4185 = vmul.f32 1.0, %v4184
    %v4186 = vmul.f32 %v4128, %v4175
    %v4187 = vmul.f32 %v4133, %v4177
    %v4188 = vmul.f32 %v4138, %v4179
    %v4189 = vmul.f32 %v4143, %v4181
    %v4190 = vmul.f32 %v4148, %v4183
    %v4191 = vmul.f32 %v4153, %v4185
    %4198 = vrot.lane.b32.xlu0 %v3494, 8
    %v4199 = vpop.permute.xlu0 %4198
    %4200 = vrot.lane.b32.xlu0 %v3495, 8
    %v4201 = vpop.permute.xlu0 %4200
    %4202 = vrot.lane.b32.xlu0 %v3496, 8
    %v4203 = vpop.permute.xlu0 %4202
    %4204 = vrot.lane.b32.xlu0 %v3497, 8
    %v4205 = vpop.permute.xlu0 %4204
    %4206 = vrot.lane.b32.xlu0 %v3498, 8
    %v4207 = vpop.permute.xlu0 %4206
    %4208 = vrot.lane.b32.xlu0 %v3499, 8
    %v4209 = vpop.permute.xlu0 %4208
    %4222 = vrot.lane.b32.xlu0 %v3840, 16
    %v4223 = vpop.permute.xlu0 %4222
    %4224 = vrot.lane.b32.xlu0 %v3841, 16
    %v4225 = vpop.permute.xlu0 %4224
    %4226 = vrot.lane.b32.xlu0 %v3842, 16
    %v4227 = vpop.permute.xlu0 %4226
    %4228 = vrot.lane.b32.xlu0 %v3843, 16
    %v4229 = vpop.permute.xlu0 %4228
    %4230 = vrot.lane.b32.xlu0 %v3844, 16
    %v4231 = vpop.permute.xlu0 %4230
    %4232 = vrot.lane.b32.xlu0 %v3845, 16
    %v4233 = vpop.permute.xlu0 %4232
    %4246 = vrot.lane.b32.xlu0 %v4186, 24
    %v4247 = vpop.permute.xlu0 %4246
    %4248 = vrot.lane.b32.xlu0 %v4187, 24
    %v4249 = vpop.permute.xlu0 %4248
    %4250 = vrot.lane.b32.xlu0 %v4188, 24
    %v4251 = vpop.permute.xlu0 %4250
    %4252 = vrot.lane.b32.xlu0 %v4189, 24
    %v4253 = vpop.permute.xlu0 %4252
    %4254 = vrot.lane.b32.xlu0 %v4190, 24
    %v4255 = vpop.permute.xlu0 %4254
    %4256 = vrot.lane.b32.xlu0 %v4191, 24
    %v4257 = vpop.permute.xlu0 %4256
    %v4264 = vsel %vm482, %v3148, %v4199
    %v4265 = vsel %vm482, %v3149, %v4201
    %v4266 = vsel %vm482, %v3150, %v4203
    %v4267 = vsel %vm482, %v3151, %v4205
    %v4268 = vsel %vm482, %v3152, %v4207
    %v4269 = vsel %vm482, %v3153, %v4209
    %v4270 = vsel %vm1921, %v4264, %v4223
    %v4271 = vsel %vm1921, %v4265, %v4225
    %v4272 = vsel %vm1921, %v4266, %v4227
    %v4273 = vsel %vm1921, %v4267, %v4229
    %v4274 = vsel %vm1921, %v4268, %v4231
    %v4275 = vsel %vm1921, %v4269, %v4233
    %v4276 = vsel %vm1928, %v4270, %v4247
    %v4277 = vsel %vm1928, %v4271, %v4249
    %v4278 = vsel %vm1928, %v4272, %v4251
    %v4279 = vsel %vm1928, %v4273, %v4253
    %v4280 = vsel %vm1928, %v4274, %v4255
    %v4281 = vsel %vm1928, %v4275, %v4257
    %v4282 = vld [vmem:[%s2 + $0xd0] sm:$0xff]
    %v4283 = vld [vmem:[%s2 + $0xd8] sm:$0xff]
    %v4284 = vld [vmem:[%s2 + $0xe0] sm:$0xff]
    %v4285 = vld [vmem:[%s2 + $0xe8] sm:$0xff]
    %v4286 = vlaneseq
    %v4287 = vshrl.u32 %v4286, 7
    %v4288 = vsub.s32 0, %v4287
    %v4289 = vrot.slane %v2590, %v4288
    %v4291 = vsel %vm243, %v4276, 0
    %v4294 = vsel %vm243, %v4277, 0
    %v4297 = vsel %vm243, %v4278, 0
    %v4300 = vsel %vm243, %v4279, 0
    %v4303 = vsel %vm243, %v4280, 0
    %v4306 = vsel %vm243, %v4281, 0
    %4308 = vmatprep.subr.mxu0 0.0
    %4309 = vmatpush1.msra.mxu0 %v4282
    %4310 = vmatprep.subr.mxu0 0.0
    %4311 = vmatpush1.msra.mxu0 %v4283
    %4312 = vmatprep.subr.mxu0 0.0
    %4313 = vmatpush1.msra.mxu0 %v4284
    %4314 = vmatprep.subr.mxu0 0.0
    %4315 = vmatpush1.msra.mxu0 %v4285
    %4316 = vmatprep.subr.mxu0 0.0
    %4317 = vmatpush1.msra.mxu0 0.0
    %4318 = vmatprep.subr.mxu0 0.0
    %4319 = vmatpush1.msra.mxu0 0.0
    %4320 = vmatprep.subr.mxu0 0.0
    %4321 = vmatpush1.msra.mxu0 0.0
    %4322 = vmatprep.subr.mxu0 0.0
    %4323 = vmatpush1.msra.mxu0 0.0
    %4324 = vmatprep.subr.mxu0 0.0
    %4325 = vmatpush1.msra.mxu0 0.0
    %4326 = vmatprep.subr.mxu0 0.0
    %4327 = vmatpush1.msra.mxu0 0.0
    %4328 = vmatprep.subr.mxu0 0.0
    %4329 = vmatpush1.msra.mxu0 0.0
    %4330 = vmatprep.subr.mxu0 0.0
    %4331 = vmatpush1.msra.mxu0 0.0
    %4332 = vmatprep.subr.mxu0 0.0
    %4333 = vmatpush1.msra.mxu0 0.0
    %4334 = vmatprep.subr.mxu0 0.0
    %4335 = vmatpush1.msra.mxu0 0.0
    %4336 = vmatprep.subr.mxu0 0.0
    %4337 = vmatpush1.msra.mxu0 0.0
    %4338 = vmatprep.subr.mxu0 0.0
    %4339 = vmatpush1.msra.mxu0 0.0
    %4340 = vmatprep.subr.mxu0 0.0
    %4341 = vmatpush1.msra.mxu0 0.0
    %4342 = vmatprep.subr.mxu0 0.0
    %4343 = vmatpush1.msra.mxu0 0.0
    %4344 = vmatprep.subr.mxu0 0.0
    %4345 = vmatpush1.msra.mxu0 0.0
    %4346 = vmatprep.subr.mxu0 0.0
    %4347 = vmatpush1.msra.mxu0 0.0
    %4348 = vmatprep.subr.mxu0 0.0
    %4349 = vmatpush1.msra.mxu0 0.0
    %4350 = vmatprep.subr.mxu0 0.0
    %4351 = vmatpush1.msra.mxu0 0.0
    %4352 = vmatprep.subr.mxu0 0.0
    %4353 = vmatpush1.msra.mxu0 0.0
    %4354 = vmatprep.subr.mxu0 0.0
    %4355 = vmatpush1.msra.mxu0 0.0
    %4356 = vmatprep.subr.mxu0 0.0
    %4357 = vmatpush1.msra.mxu0 0.0
    %4358 = vmatprep.subr.mxu0 0.0
    %4359 = vmatpush1.msra.mxu0 0.0
    %4360 = vmatprep.subr.mxu0 0.0
    %4361 = vmatpush1.msra.mxu0 0.0
    %4362 = vmatprep.subr.mxu0 0.0
    %4363 = vmatpush1.msra.mxu0 0.0
    %4364 = vmatprep.subr.mxu0 0.0
    %4365 = vmatpush1.msra.mxu0 0.0
    %4366 = vmatprep.subr.mxu0 0.0
    %4367 = vmatpush1.msra.mxu0 0.0
    %4368 = vmatprep.subr.mxu0 0.0
    %4369 = vmatpush1.msra.mxu0 0.0
    %4370 = vmatprep.subr.mxu0 0.0
    %4371 = vmatpush1.msra.mxu0 0.0
    %4372 = vmatprep.mubr.f32.mxu0 0.0
    %4373 = vmatmul.mubr.f32.gmra.mrb[0].mxu0 %v4291
    %v4374 = vpop.f32.mrb[0].mxu0
    %v4375 = vadd.f32 %v4289, %v4374
    %v4376 = vpop.f32.mrb[0].mxu0
    %4377 = vmatprep.mubr.f32.mxu0 0.0
    %4378 = vmatmul.mubr.f32.gmra.mrb[0].mxu0 %v4294
    %v4379 = vpop.f32.mrb[0].mxu0
    %v4380 = vadd.f32 %v4289, %v4379
    %v4381 = vpop.f32.mrb[0].mxu0
    %4382 = vmatprep.mubr.f32.mxu0 0.0
    %4383 = vmatmul.mubr.f32.gmra.mrb[0].mxu0 %v4297
    %v4384 = vpop.f32.mrb[0].mxu0
    %v4385 = vadd.f32 %v4289, %v4384
    %v4386 = vpop.f32.mrb[0].mxu0
    %4387 = vmatprep.mubr.f32.mxu0 0.0
    %4388 = vmatmul.mubr.f32.gmra.mrb[0].mxu0 %v4300
    %v4389 = vpop.f32.mrb[0].mxu0
    %v4390 = vadd.f32 %v4289, %v4389
    %v4391 = vpop.f32.mrb[0].mxu0
    %4392 = vmatprep.mubr.f32.mxu0 0.0
    %4393 = vmatmul.mubr.f32.gmra.mrb[0].mxu0 %v4303
    %v4394 = vpop.f32.mrb[0].mxu0
    %v4395 = vadd.f32 %v4289, %v4394
    %v4396 = vpop.f32.mrb[0].mxu0
    %4397 = vmatprep.mubr.f32.mxu0 0.0
    %4398 = vmatmul.mubr.f32.gmra.mrb[0].mxu0 %v4306
    %v4399 = vpop.f32.mrb[0].mxu0
    %v4400 = vadd.f32 %v4289, %v4399
    %v4401 = vpop.f32.mrb[0].mxu0
    %4402 = vdwg.mxu0
    %v4403 = vadd.f32 %v2581, %v4375
    %v4404 = vadd.f32 %v2582, %v4380
    %v4405 = vadd.f32 %v2583, %v4385
    %v4406 = vadd.f32 %v2584, %v4390
    %v4407 = vadd.f32 %v2585, %v4395
    %v4408 = vadd.f32 %v2586, %v4400
    %v4409 = vsel %vm243, %v4403, 0.0
    %4410 = vadd.xlane.f32.xlu0 %v4409
    %v4411 = vpop.xlane.xlu0 %4410
    %v4412 = vsel %vm243, %v4404, 0.0
    %4413 = vadd.xlane.f32.xlu0 %v4412
    %v4414 = vpop.xlane.xlu0 %4413
    %v4415 = vsel %vm243, %v4405, 0.0
    %4416 = vadd.xlane.f32.xlu0 %v4415
    %v4417 = vpop.xlane.xlu0 %4416
    %v4418 = vsel %vm243, %v4406, 0.0
    %4419 = vadd.xlane.f32.xlu0 %v4418
    %v4420 = vpop.xlane.xlu0 %4419
    %v4421 = vsel %vm243, %v4407, 0.0
    %4422 = vadd.xlane.f32.xlu0 %v4421
    %v4423 = vpop.xlane.xlu0 %4422
    %v4424 = vsel %vm243, %v4408, 0.0
    %4425 = vadd.xlane.f32.xlu0 %v4424
    %v4426 = vpop.xlane.xlu0 %4425
    %v4427 = vmul.f32 %v4411, %v262
    %v4428 = vmul.f32 %v4414, %v262
    %v4429 = vmul.f32 %v4417, %v262
    %v4430 = vmul.f32 %v4420, %v262
    %v4431 = vmul.f32 %v4423, %v262
    %v4432 = vmul.f32 %v4426, %v262
    %v4433 = vsub.f32 %v4403, %v4427
    %v4434 = vsub.f32 %v4404, %v4428
    %v4435 = vsub.f32 %v4405, %v4429
    %v4436 = vsub.f32 %v4406, %v4430
    %v4437 = vsub.f32 %v4407, %v4431
    %v4438 = vsub.f32 %v4408, %v4432
    %v4439 = vmul.f32 %v4433, %v4433
    %v4440 = vmul.f32 %v4434, %v4434
    %v4441 = vmul.f32 %v4435, %v4435
    %v4442 = vmul.f32 %v4436, %v4436
    %v4443 = vmul.f32 %v4437, %v4437
    %v4444 = vmul.f32 %v4438, %v4438
    %v4445 = vsel %vm243, %v4439, 0.0
    %4446 = vadd.xlane.f32.xlu0 %v4445
    %v4447 = vpop.xlane.xlu0 %4446
    %v4448 = vsel %vm243, %v4440, 0.0
    %4449 = vadd.xlane.f32.xlu0 %v4448
    %v4450 = vpop.xlane.xlu0 %4449
    %v4451 = vsel %vm243, %v4441, 0.0
    %4452 = vadd.xlane.f32.xlu0 %v4451
    %v4453 = vpop.xlane.xlu0 %4452
    %v4454 = vsel %vm243, %v4442, 0.0
    %4455 = vadd.xlane.f32.xlu0 %v4454
    %v4456 = vpop.xlane.xlu0 %4455
    %v4457 = vsel %vm243, %v4443, 0.0
    %4458 = vadd.xlane.f32.xlu0 %v4457
    %v4459 = vpop.xlane.xlu0 %4458
    %v4460 = vsel %vm243, %v4444, 0.0
    %4461 = vadd.xlane.f32.xlu0 %v4460
    %v4462 = vpop.xlane.xlu0 %4461
    %v4463 = vmul.f32 %v4447, %v262
    %v4464 = vmul.f32 %v4450, %v262
    %v4465 = vmul.f32 %v4453, %v262
    %v4466 = vmul.f32 %v4456, %v262
    %v4467 = vmul.f32 %v4459, %v262
    %v4468 = vmul.f32 %v4462, %v262
    %v4469 = vadd.f32 %v4463, 1e-06
    %v4470 = vadd.f32 %v4464, 1e-06
    %v4471 = vadd.f32 %v4465, 1e-06
    %v4472 = vadd.f32 %v4466, 1e-06
    %v4473 = vadd.f32 %v4467, 1e-06
    %v4474 = vadd.f32 %v4468, 1e-06
    %v4475 = vrsqrt.pop %v4469
    %v4476 = vrsqrt.pop %v4470
    %v4477 = vrsqrt.pop %v4471
    %v4478 = vrsqrt.pop %v4472
    %v4479 = vrsqrt.pop %v4473
    %v4480 = vrsqrt.pop %v4474
    %v4481 = vmul.f32 %v4433, %v4475
    %v4482 = vmul.f32 %v4434, %v4476
    %v4483 = vmul.f32 %v4435, %v4477
    %v4484 = vmul.f32 %v4436, %v4478
    %v4485 = vmul.f32 %v4437, %v4479
    %v4486 = vmul.f32 %v4438, %v4480
    %v4487 = vlaneseq
    %v4488 = vshrl.u32 %v4487, 7
    %v4489 = vsub.s32 0, %v4488
    %v4490 = vrot.slane %v2591, %v4489
    %v4491 = vmul.f32 %v4481, %v4490
    %v4492 = vmul.f32 %v4482, %v4490
    %v4493 = vmul.f32 %v4483, %v4490
    %v4494 = vmul.f32 %v4484, %v4490
    %v4495 = vmul.f32 %v4485, %v4490
    %v4496 = vmul.f32 %v4486, %v4490
    %v4497 = vlaneseq
    %v4498 = vshrl.u32 %v4497, 7
    %v4499 = vsub.s32 0, %v4498
    %v4500 = vrot.slane %v2592, %v4499
    %v4501 = vadd.f32 %v4491, %v4500
    %v4502 = vadd.f32 %v4492, %v4500
    %v4503 = vadd.f32 %v4493, %v4500
    %v4504 = vadd.f32 %v4494, %v4500
    %v4505 = vadd.f32 %v4495, %v4500
    %v4506 = vadd.f32 %v4496, %v4500
    %v4507 = vlaneseq
    %v4508 = vshrl.u32 %v4507, 7
    %v4509 = vsub.s32 0, %v4508
    %v4510 = vrot.slane %v2593, %v4509
    %4515 = vrot.lane.b32.xlu0 %v4282, 96
    %v4516 = vpop.permute.xlu0 %4515
    %4517 = vrot.lane.b32.xlu0 %v4283, 96
    %v4518 = vpop.permute.xlu0 %4517
    %4519 = vrot.lane.b32.xlu0 %v4284, 96
    %v4520 = vpop.permute.xlu0 %4519
    %4521 = vrot.lane.b32.xlu0 %v4285, 96
    %v4522 = vpop.permute.xlu0 %4521
    %v4528 = vsel %vm243, %v4501, 0
    %v4531 = vsel %vm243, %v4502, 0
    %v4534 = vsel %vm243, %v4503, 0
    %v4537 = vsel %vm243, %v4504, 0
    %v4540 = vsel %vm243, %v4505, 0
    %v4543 = vsel %vm243, %v4506, 0
    %4545 = vmatprep.subr.mxu0 0.0
    %4546 = vmatpush1.msra.mxu0 %v4516
    %4547 = vmatprep.subr.mxu0 0.0
    %4548 = vmatpush1.msra.mxu0 %v4518
    %4549 = vmatprep.subr.mxu0 0.0
    %4550 = vmatpush1.msra.mxu0 %v4520
    %4551 = vmatprep.subr.mxu0 0.0
    %4552 = vmatpush1.msra.mxu0 %v4522
    %4553 = vmatprep.subr.mxu0 0.0
    %4554 = vmatpush1.msra.mxu0 0.0
    %4555 = vmatprep.subr.mxu0 0.0
    %4556 = vmatpush1.msra.mxu0 0.0
    %4557 = vmatprep.subr.mxu0 0.0
    %4558 = vmatpush1.msra.mxu0 0.0
    %4559 = vmatprep.subr.mxu0 0.0
    %4560 = vmatpush1.msra.mxu0 0.0
    %4561 = vmatprep.subr.mxu0 0.0
    %4562 = vmatpush1.msra.mxu0 0.0
    %4563 = vmatprep.subr.mxu0 0.0
    %4564 = vmatpush1.msra.mxu0 0.0
    %4565 = vmatprep.subr.mxu0 0.0
    %4566 = vmatpush1.msra.mxu0 0.0
    %4567 = vmatprep.subr.mxu0 0.0
    %4568 = vmatpush1.msra.mxu0 0.0
    %4569 = vmatprep.subr.mxu0 0.0
    %4570 = vmatpush1.msra.mxu0 0.0
    %4571 = vmatprep.subr.mxu0 0.0
    %4572 = vmatpush1.msra.mxu0 0.0
    %4573 = vmatprep.subr.mxu0 0.0
    %4574 = vmatpush1.msra.mxu0 0.0
    %4575 = vmatprep.subr.mxu0 0.0
    %4576 = vmatpush1.msra.mxu0 0.0
    %4577 = vmatprep.subr.mxu0 0.0
    %4578 = vmatpush1.msra.mxu0 0.0
    %4579 = vmatprep.subr.mxu0 0.0
    %4580 = vmatpush1.msra.mxu0 0.0
    %4581 = vmatprep.subr.mxu0 0.0
    %4582 = vmatpush1.msra.mxu0 0.0
    %4583 = vmatprep.subr.mxu0 0.0
    %4584 = vmatpush1.msra.mxu0 0.0
    %4585 = vmatprep.subr.mxu0 0.0
    %4586 = vmatpush1.msra.mxu0 0.0
    %4587 = vmatprep.subr.mxu0 0.0
    %4588 = vmatpush1.msra.mxu0 0.0
    %4589 = vmatprep.subr.mxu0 0.0
    %4590 = vmatpush1.msra.mxu0 0.0
    %4591 = vmatprep.subr.mxu0 0.0
    %4592 = vmatpush1.msra.mxu0 0.0
    %4593 = vmatprep.subr.mxu0 0.0
    %4594 = vmatpush1.msra.mxu0 0.0
    %4595 = vmatprep.subr.mxu0 0.0
    %4596 = vmatpush1.msra.mxu0 0.0
    %4597 = vmatprep.subr.mxu0 0.0
    %4598 = vmatpush1.msra.mxu0 0.0
    %4599 = vmatprep.subr.mxu0 0.0
    %4600 = vmatpush1.msra.mxu0 0.0
    %4601 = vmatprep.subr.mxu0 0.0
    %4602 = vmatpush1.msra.mxu0 0.0
    %4603 = vmatprep.subr.mxu0 0.0
    %4604 = vmatpush1.msra.mxu0 0.0
    %4605 = vmatprep.subr.mxu0 0.0
    %4606 = vmatpush1.msra.mxu0 0.0
    %4607 = vmatprep.subr.mxu0 0.0
    %4608 = vmatpush1.msra.mxu0 0.0
    %4609 = vmatprep.mubr.f32.mxu0 0.0
    %4610 = vmatmul.mubr.f32.gmra.mrb[0].mxu0 %v4528
    %v4611 = vpop.f32.mrb[0].mxu0
    %v4612 = vadd.f32 %v4510, %v4611
    %v4613 = vpop.f32.mrb[0].mxu0
    %4614 = vmatprep.mubr.f32.mxu0 0.0
    %4615 = vmatmul.mubr.f32.gmra.mrb[0].mxu0 %v4531
    %v4616 = vpop.f32.mrb[0].mxu0
    %v4617 = vadd.f32 %v4510, %v4616
    %v4618 = vpop.f32.mrb[0].mxu0
    %4619 = vmatprep.mubr.f32.mxu0 0.0
    %4620 = vmatmul.mubr.f32.gmra.mrb[0].mxu0 %v4534
    %v4621 = vpop.f32.mrb[0].mxu0
    %v4622 = vadd.f32 %v4510, %v4621
    %v4623 = vpop.f32.mrb[0].mxu0
    %4624 = vmatprep.mubr.f32.mxu0 0.0
    %4625 = vmatmul.mubr.f32.gmra.mrb[0].mxu0 %v4537
    %v4626 = vpop.f32.mrb[0].mxu0
    %v4627 = vadd.f32 %v4510, %v4626
    %v4628 = vpop.f32.mrb[0].mxu0
    %4629 = vmatprep.mubr.f32.mxu0 0.0
    %4630 = vmatmul.mubr.f32.gmra.mrb[0].mxu0 %v4540
    %v4631 = vpop.f32.mrb[0].mxu0
    %v4632 = vadd.f32 %v4510, %v4631
    %v4633 = vpop.f32.mrb[0].mxu0
    %4634 = vmatprep.mubr.f32.mxu0 0.0
    %4635 = vmatmul.mubr.f32.gmra.mrb[0].mxu0 %v4543
    %v4636 = vpop.f32.mrb[0].mxu0
    %v4637 = vadd.f32 %v4510, %v4636
    %v4638 = vpop.f32.mrb[0].mxu0
    %4639 = vdwg.mxu0
    %v4640 = vmul.f32 %v4612, 0.5
    %v4641 = vmul.f32 %v4617, 0.5
    %v4642 = vmul.f32 %v4622, 0.5
    %v4643 = vmul.f32 %v4627, 0.5
    %v4644 = vmul.f32 %v4632, 0.5
    %v4645 = vmul.f32 %v4637, 0.5
    %v4646 = vmul.f32 %v4612, 0.70710677
    %v4647 = vmul.f32 %v4617, 0.70710677
    %v4648 = vmul.f32 %v4622, 0.70710677
    %v4649 = vmul.f32 %v4627, 0.70710677
    %v4650 = vmul.f32 %v4632, 0.70710677
    %v4651 = vmul.f32 %v4637, 0.70710677
    %v4652 = vand.u32 2147483647, %v4646
    %v4653 = vand.u32 2147483647, %v4647
    %v4654 = vand.u32 2147483647, %v4648
    %v4655 = vand.u32 2147483647, %v4649
    %v4656 = vand.u32 2147483647, %v4650
    %v4657 = vand.u32 2147483647, %v4651
    %v4658 = vmul.f32 %v4652, 0.3275911
    %v4659 = vmul.f32 %v4653, 0.3275911
    %v4660 = vmul.f32 %v4654, 0.3275911
    %v4661 = vmul.f32 %v4655, 0.3275911
    %v4662 = vmul.f32 %v4656, 0.3275911
    %v4663 = vmul.f32 %v4657, 0.3275911
    %v4664 = vadd.f32 %v4658, 1.0
    %v4665 = vadd.f32 %v4659, 1.0
    %v4666 = vadd.f32 %v4660, 1.0
    %v4667 = vadd.f32 %v4661, 1.0
    %v4668 = vadd.f32 %v4662, 1.0
    %v4669 = vadd.f32 %v4663, 1.0
    %v4670 = vrcp.pop %v4664
    %v4671 = vmul.f32 1.0, %v4670
    %v4672 = vrcp.pop %v4665
    %v4673 = vmul.f32 1.0, %v4672
    %v4674 = vrcp.pop %v4666
    %v4675 = vmul.f32 1.0, %v4674
    %v4676 = vrcp.pop %v4667
    %v4677 = vmul.f32 1.0, %v4676
    %v4678 = vrcp.pop %v4668
    %v4679 = vmul.f32 1.0, %v4678
    %v4680 = vrcp.pop %v4669
    %v4681 = vmul.f32 1.0, %v4680
    %v4682 = vmul.f32 %v4671, 1.0614054
    %v4683 = vmul.f32 %v4673, 1.0614054
    %v4684 = vmul.f32 %v4675, 1.0614054
    %v4685 = vmul.f32 %v4677, 1.0614054
    %v4686 = vmul.f32 %v4679, 1.0614054
    %v4687 = vmul.f32 %v4681, 1.0614054
    %v4688 = vadd.f32 %v4682, -1.4531521
    %v4689 = vadd.f32 %v4683, -1.4531521
    %v4690 = vadd.f32 %v4684, -1.4531521
    %v4691 = vadd.f32 %v4685, -1.4531521
    %v4692 = vadd.f32 %v4686, -1.4531521
    %v4693 = vadd.f32 %v4687, -1.4531521
    %v4694 = vmul.f32 %v4688, %v4671
    %v4695 = vmul.f32 %v4689, %v4673
    %v4696 = vmul.f32 %v4690, %v4675
    %v4697 = vmul.f32 %v4691, %v4677
    %v4698 = vmul.f32 %v4692, %v4679
    %v4699 = vmul.f32 %v4693, %v4681
    %v4700 = vadd.f32 %v4694, 1.4214138
    %v4701 = vadd.f32 %v4695, 1.4214138
    %v4702 = vadd.f32 %v4696, 1.4214138
    %v4703 = vadd.f32 %v4697, 1.4214138
    %v4704 = vadd.f32 %v4698, 1.4214138
    %v4705 = vadd.f32 %v4699, 1.4214138
    %v4706 = vmul.f32 %v4700, %v4671
    %v4707 = vmul.f32 %v4701, %v4673
    %v4708 = vmul.f32 %v4702, %v4675
    %v4709 = vmul.f32 %v4703, %v4677
    %v4710 = vmul.f32 %v4704, %v4679
    %v4711 = vmul.f32 %v4705, %v4681
    %v4712 = vadd.f32 %v4706, -0.28449672
    %v4713 = vadd.f32 %v4707, -0.28449672
    %v4714 = vadd.f32 %v4708, -0.28449672
    %v4715 = vadd.f32 %v4709, -0.28449672
    %v4716 = vadd.f32 %v4710, -0.28449672
    %v4717 = vadd.f32 %v4711, -0.28449672
    %v4718 = vmul.f32 %v4712, %v4671
    %v4719 = vmul.f32 %v4713, %v4673
    %v4720 = vmul.f32 %v4714, %v4675
    %v4721 = vmul.f32 %v4715, %v4677
    %v4722 = vmul.f32 %v4716, %v4679
    %v4723 = vmul.f32 %v4717, %v4681
    %v4724 = vadd.f32 %v4718, 0.2548296
    %v4725 = vadd.f32 %v4719, 0.2548296
    %v4726 = vadd.f32 %v4720, 0.2548296
    %v4727 = vadd.f32 %v4721, 0.2548296
    %v4728 = vadd.f32 %v4722, 0.2548296
    %v4729 = vadd.f32 %v4723, 0.2548296
    %v4730 = vmul.f32 %v4724, %v4671
    %v4731 = vmul.f32 %v4725, %v4673
    %v4732 = vmul.f32 %v4726, %v4675
    %v4733 = vmul.f32 %v4727, %v4677
    %v4734 = vmul.f32 %v4728, %v4679
    %v4735 = vmul.f32 %v4729, %v4681
    %v4736 = vsub.f32 0.0, %v4652
    %v4737 = vsub.f32 0.0, %v4653
    %v4738 = vsub.f32 0.0, %v4654
    %v4739 = vsub.f32 0.0, %v4655
    %v4740 = vsub.f32 0.0, %v4656
    %v4741 = vsub.f32 0.0, %v4657
    %v4742 = vmul.f32 %v4736, %v4652
    %v4743 = vmul.f32 %v4737, %v4653
    %v4744 = vmul.f32 %v4738, %v4654
    %v4745 = vmul.f32 %v4739, %v4655
    %v4746 = vmul.f32 %v4740, %v4656
    %v4747 = vmul.f32 %v4741, %v4657
    %v4748 = vmul.f32 %v4742, 1.442695
    %v4749 = vpow.pop %v4748
    %v4750 = vmul.f32 %v4743, 1.442695
    %v4751 = vpow.pop %v4750
    %v4752 = vmul.f32 %v4744, 1.442695
    %v4753 = vpow.pop %v4752
    %v4754 = vmul.f32 %v4745, 1.442695
    %v4755 = vpow.pop %v4754
    %v4756 = vmul.f32 %v4746, 1.442695
    %v4757 = vpow.pop %v4756
    %v4758 = vmul.f32 %v4747, 1.442695
    %v4759 = vpow.pop %v4758
    %v4760 = vmul.f32 %v4730, %v4749
    %v4761 = vmul.f32 %v4731, %v4751
    %v4762 = vmul.f32 %v4732, %v4753
    %v4763 = vmul.f32 %v4733, %v4755
    %v4764 = vmul.f32 %v4734, %v4757
    %v4765 = vmul.f32 %v4735, %v4759
    %v4766 = vsub.f32 1.0, %v4760
    %v4767 = vsub.f32 1.0, %v4761
    %v4768 = vsub.f32 1.0, %v4762
    %v4769 = vsub.f32 1.0, %v4763
    %v4770 = vsub.f32 1.0, %v4764
    %v4771 = vsub.f32 1.0, %v4765
    %vm4772 = vcmp.ge.f32.partialorder %v4646, 0.0
    %vm4773 = vcmp.ge.f32.partialorder %v4647, 0.0
    %vm4774 = vcmp.ge.f32.partialorder %v4648, 0.0
    %vm4775 = vcmp.ge.f32.partialorder %v4649, 0.0
    %vm4776 = vcmp.ge.f32.partialorder %v4650, 0.0
    %vm4777 = vcmp.ge.f32.partialorder %v4651, 0.0
    %v4778 = vsub.f32 0.0, %v4766
    %v4779 = vsub.f32 0.0, %v4767
    %v4780 = vsub.f32 0.0, %v4768
    %v4781 = vsub.f32 0.0, %v4769
    %v4782 = vsub.f32 0.0, %v4770
    %v4783 = vsub.f32 0.0, %v4771
    %v4784 = vsel %vm4772, %v4766, %v4778
    %v4785 = vsel %vm4773, %v4767, %v4779
    %v4786 = vsel %vm4774, %v4768, %v4780
    %v4787 = vsel %vm4775, %v4769, %v4781
    %v4788 = vsel %vm4776, %v4770, %v4782
    %v4789 = vsel %vm4777, %v4771, %v4783
    %v4790 = vadd.f32 %v4784, 1.0
    %v4791 = vadd.f32 %v4785, 1.0
    %v4792 = vadd.f32 %v4786, 1.0
    %v4793 = vadd.f32 %v4787, 1.0
    %v4794 = vadd.f32 %v4788, 1.0
    %v4795 = vadd.f32 %v4789, 1.0
    %v4796 = vmul.f32 %v4640, %v4790
    %v4797 = vmul.f32 %v4641, %v4791
    %v4798 = vmul.f32 %v4642, %v4792
    %v4799 = vmul.f32 %v4643, %v4793
    %v4800 = vmul.f32 %v4644, %v4794
    %v4801 = vmul.f32 %v4645, %v4795
    %v4802 = vld [vmem:[%s2 + $0xf0] sm:$0xff]
    %v4803 = vld [vmem:[%s2 + $0xf8] sm:$0xff]
    %v4804 = vld [vmem:[%s2 + $0x100] sm:$0xff]
    %v4805 = vld [vmem:[%s2 + $0x108] sm:$0xff]
    %v4806 = vld [vmem:[%s2 + $0x110] sm:$0xff]
    %v4807 = vld [vmem:[%s2 + $0x118] sm:$0xff]
    %v4808 = vld [vmem:[%s2 + $0x120] sm:$0xff]
    %v4809 = vld [vmem:[%s2 + $0x128] sm:$0xff]
    %v4810 = vlaneseq
    %v4811 = vshrl.u32 %v4810, 7
    %v4812 = vsub.s32 0, %v4811
    %v4813 = vrot.slane %v2594, %v4812
    %v4815 = vsel %vm2467, %v4796, 0
    %v4818 = vsel %vm2467, %v4797, 0
    %v4821 = vsel %vm2467, %v4798, 0
    %v4824 = vsel %vm2467, %v4799, 0
    %v4827 = vsel %vm2467, %v4800, 0
    %v4830 = vsel %vm2467, %v4801, 0
    %4832 = vmatprep.subr.mxu0 0.0
    %4833 = vmatpush1.msra.mxu0 %v4802
    %4834 = vmatprep.subr.mxu0 0.0
    %4835 = vmatpush1.msra.mxu0 %v4803
    %4836 = vmatprep.subr.mxu0 0.0
    %4837 = vmatpush1.msra.mxu0 %v4804
    %4838 = vmatprep.subr.mxu0 0.0
    %4839 = vmatpush1.msra.mxu0 %v4805
    %4840 = vmatprep.subr.mxu0 0.0
    %4841 = vmatpush1.msra.mxu0 %v4806
    %4842 = vmatprep.subr.mxu0 0.0
    %4843 = vmatpush1.msra.mxu0 %v4807
    %4844 = vmatprep.subr.mxu0 0.0
    %4845 = vmatpush1.msra.mxu0 %v4808
    %4846 = vmatprep.subr.mxu0 0.0
    %4847 = vmatpush1.msra.mxu0 %v4809
    %4848 = vmatprep.subr.mxu0 0.0
    %4849 = vmatpush1.msra.mxu0 0.0
    %4850 = vmatprep.subr.mxu0 0.0
    %4851 = vmatpush1.msra.mxu0 0.0
    %4852 = vmatprep.subr.mxu0 0.0
    %4853 = vmatpush1.msra.mxu0 0.0
    %4854 = vmatprep.subr.mxu0 0.0
    %4855 = vmatpush1.msra.mxu0 0.0
    %4856 = vmatprep.subr.mxu0 0.0
    %4857 = vmatpush1.msra.mxu0 0.0
    %4858 = vmatprep.subr.mxu0 0.0
    %4859 = vmatpush1.msra.mxu0 0.0
    %4860 = vmatprep.subr.mxu0 0.0
    %4861 = vmatpush1.msra.mxu0 0.0
    %4862 = vmatprep.subr.mxu0 0.0
    %4863 = vmatpush1.msra.mxu0 0.0
    %4864 = vmatprep.subr.mxu0 0.0
    %4865 = vmatpush1.msra.mxu0 0.0
    %4866 = vmatprep.subr.mxu0 0.0
    %4867 = vmatpush1.msra.mxu0 0.0
    %4868 = vmatprep.subr.mxu0 0.0
    %4869 = vmatpush1.msra.mxu0 0.0
    %4870 = vmatprep.subr.mxu0 0.0
    %4871 = vmatpush1.msra.mxu0 0.0
    %4872 = vmatprep.subr.mxu0 0.0
    %4873 = vmatpush1.msra.mxu0 0.0
    %4874 = vmatprep.subr.mxu0 0.0
    %4875 = vmatpush1.msra.mxu0 0.0
    %4876 = vmatprep.subr.mxu0 0.0
    %4877 = vmatpush1.msra.mxu0 0.0
    %4878 = vmatprep.subr.mxu0 0.0
    %4879 = vmatpush1.msra.mxu0 0.0
    %4880 = vmatprep.subr.mxu0 0.0
    %4881 = vmatpush1.msra.mxu0 0.0
    %4882 = vmatprep.subr.mxu0 0.0
    %4883 = vmatpush1.msra.mxu0 0.0
    %4884 = vmatprep.subr.mxu0 0.0
    %4885 = vmatpush1.msra.mxu0 0.0
    %4886 = vmatprep.subr.mxu0 0.0
    %4887 = vmatpush1.msra.mxu0 0.0
    %4888 = vmatprep.subr.mxu0 0.0
    %4889 = vmatpush1.msra.mxu0 0.0
    %4890 = vmatprep.subr.mxu0 0.0
    %4891 = vmatpush1.msra.mxu0 0.0
    %4892 = vmatprep.subr.mxu0 0.0
    %4893 = vmatpush1.msra.mxu0 0.0
    %4894 = vmatprep.subr.mxu0 0.0
    %4895 = vmatpush1.msra.mxu0 0.0
    %4896 = vmatprep.mubr.f32.mxu0 0.0
    %4897 = vmatmul.mubr.f32.gmra.mrb[0].mxu0 %v4815
    %v4898 = vpop.f32.mrb[0].mxu0
    %v4899 = vadd.f32 %v4813, %v4898
    %v4900 = vpop.f32.mrb[0].mxu0
    %4901 = vmatprep.mubr.f32.mxu0 0.0
    %4902 = vmatmul.mubr.f32.gmra.mrb[0].mxu0 %v4818
    %v4903 = vpop.f32.mrb[0].mxu0
    %v4904 = vpop.f32.mrb[0].mxu0
    %4905 = vmatprep.mubr.f32.mxu0 0.0
    %4906 = vmatmul.mubr.f32.gmra.mrb[0].mxu0 %v4821
    %v4907 = vpop.f32.mrb[0].mxu0
    %v4908 = vpop.f32.mrb[0].mxu0
    %4909 = vmatprep.mubr.f32.mxu0 0.0
    %4910 = vmatmul.mubr.f32.gmra.mrb[0].mxu0 %v4824
    %v4911 = vpop.f32.mrb[0].mxu0
    %v4912 = vadd.f32 %v4813, %v4911
    %v4913 = vpop.f32.mrb[0].mxu0
    %4914 = vmatprep.mubr.f32.mxu0 0.0
    %4915 = vmatmul.mubr.f32.gmra.mrb[0].mxu0 %v4827
    %v4916 = vpop.f32.mrb[0].mxu0
    %v4917 = vpop.f32.mrb[0].mxu0
    %4918 = vmatprep.mubr.f32.mxu0 0.0
    %4919 = vmatmul.mubr.f32.gmra.mrb[0].mxu0 %v4830
    %v4920 = vpop.f32.mrb[0].mxu0
    %v4921 = vpop.f32.mrb[0].mxu0
    %4922 = vdwg.mxu0
    %v4923 = vadd.f32 %v4403, %v4899
    %v4924 = vadd.f32 %v4406, %v4912
    %v4926 = vrot.slane %v4924, 7
    %vm4928 = vcmask 1040384
    %v4929 = vsel %vm4928, %v4923, %v4926
    %v4930 = vld [vmem:[%s3 + $0x10] sm:$0x1]
    %v4931 = vld [vmem:[%s3 + $0x11] sm:$0x1]
    %vm4932 = vcmask 254976
    %v4933 = vsel %vm4932, %v4929, 0.0
    %4934 = vadd.xlane.f32.xlu0 %v4933
    %v4935 = vpop.xlane.xlu0 %4934
    %v4936 = vmul.f32 %v4935, %v262
    %v4937 = vsub.f32 %v4929, %v4936
    %v4938 = vmul.f32 %v4937, %v4937
    %v4939 = vsel %vm4932, %v4938, 0.0
    %4940 = vadd.xlane.f32.xlu0 %v4939
    %v4941 = vpop.xlane.xlu0 %4940
    %v4942 = vmul.f32 %v4941, %v262
    %v4943 = vadd.f32 %v4942, 1e-06
    %v4944 = vrsqrt.pop %v4943
    %v4945 = vmul.f32 %v4937, %v4944
    %v4946 = vlaneseq
    %v4947 = vshrl.u32 %v4946, 7
    %v4948 = vsub.s32 0, %v4947
    %v4949 = vrot.slane %v4930, %v4948
    %v4950 = vmul.f32 %v4945, %v4949
    %v4951 = vlaneseq
    %v4952 = vshrl.u32 %v4951, 7
    %v4953 = vsub.s32 0, %v4952
    %v4954 = vrot.slane %v4931, %v4953
    %v4955 = vadd.f32 %v4950, %v4954
    %v4956 = vld [vmem:[%s2 + $0x130] sm:$0xff]
    %v4957 = vld [vmem:[%s2 + $0x138] sm:$0xff]
    %v4958 = vld [vmem:[%s2 + $0x140] sm:$0xff]
    %v4959 = vld [vmem:[%s2 + $0x148] sm:$0xff]
    %v4960 = vld [vmem:[%s3 + $0x12] sm:$0x1]
    %v4961 = vlaneseq
    %v4962 = vshrl.u32 %v4961, 7
    %v4963 = vsub.s32 0, %v4962
    %v4964 = vrot.slane %v4960, %v4963
    %v4966 = vsel %vm243, %v4955, 0
    %4968 = vmatprep.subr.mxu0 0.0
    %4969 = vmatpush1.msra.mxu0 %v4956
    %4970 = vmatprep.subr.mxu0 0.0
    %4971 = vmatpush1.msra.mxu0 %v4957
    %4972 = vmatprep.subr.mxu0 0.0
    %4973 = vmatpush1.msra.mxu0 %v4958
    %4974 = vmatprep.subr.mxu0 0.0
    %4975 = vmatpush1.msra.mxu0 %v4959
    %4976 = vmatprep.subr.mxu0 0.0
    %4977 = vmatpush1.msra.mxu0 0.0
    %4978 = vmatprep.subr.mxu0 0.0
    %4979 = vmatpush1.msra.mxu0 0.0
    %4980 = vmatprep.subr.mxu0 0.0
    %4981 = vmatpush1.msra.mxu0 0.0
    %4982 = vmatprep.subr.mxu0 0.0
    %4983 = vmatpush1.msra.mxu0 0.0
    %4984 = vmatprep.subr.mxu0 0.0
    %4985 = vmatpush1.msra.mxu0 0.0
    %4986 = vmatprep.subr.mxu0 0.0
    %4987 = vmatpush1.msra.mxu0 0.0
    %4988 = vmatprep.subr.mxu0 0.0
    %4989 = vmatpush1.msra.mxu0 0.0
    %4990 = vmatprep.subr.mxu0 0.0
    %4991 = vmatpush1.msra.mxu0 0.0
    %4992 = vmatprep.subr.mxu0 0.0
    %4993 = vmatpush1.msra.mxu0 0.0
    %4994 = vmatprep.subr.mxu0 0.0
    %4995 = vmatpush1.msra.mxu0 0.0
    %4996 = vmatprep.subr.mxu0 0.0
    %4997 = vmatpush1.msra.mxu0 0.0
    %4998 = vmatprep.subr.mxu0 0.0
    %4999 = vmatpush1.msra.mxu0 0.0
    %5000 = vmatprep.subr.mxu0 0.0
    %5001 = vmatpush1.msra.mxu0 0.0
    %5002 = vmatprep.subr.mxu0 0.0
    %5003 = vmatpush1.msra.mxu0 0.0
    %5004 = vmatprep.subr.mxu0 0.0
    %5005 = vmatpush1.msra.mxu0 0.0
    %5006 = vmatprep.subr.mxu0 0.0
    %5007 = vmatpush1.msra.mxu0 0.0
    %5008 = vmatprep.subr.mxu0 0.0
    %5009 = vmatpush1.msra.mxu0 0.0
    %5010 = vmatprep.subr.mxu0 0.0
    %5011 = vmatpush1.msra.mxu0 0.0
    %5012 = vmatprep.subr.mxu0 0.0
    %5013 = vmatpush1.msra.mxu0 0.0
    %5014 = vmatprep.subr.mxu0 0.0
    %5015 = vmatpush1.msra.mxu0 0.0
    %5016 = vmatprep.subr.mxu0 0.0
    %5017 = vmatpush1.msra.mxu0 0.0
    %5018 = vmatprep.subr.mxu0 0.0
    %5019 = vmatpush1.msra.mxu0 0.0
    %5020 = vmatprep.subr.mxu0 0.0
    %5021 = vmatpush1.msra.mxu0 0.0
    %5022 = vmatprep.subr.mxu0 0.0
    %5023 = vmatpush1.msra.mxu0 0.0
    %5024 = vmatprep.subr.mxu0 0.0
    %5025 = vmatpush1.msra.mxu0 0.0
    %5026 = vmatprep.subr.mxu0 0.0
    %5027 = vmatpush1.msra.mxu0 0.0
    %5028 = vmatprep.subr.mxu0 0.0
    %5029 = vmatpush1.msra.mxu0 0.0
    %5030 = vmatprep.subr.mxu0 0.0
    %5031 = vmatpush1.msra.mxu0 0.0
    %5032 = vmatprep.mubr.f32.mxu0 0.0
    %5033 = vmatmul.mubr.f32.gmra.mrb[0].mxu0 %v4966
    %v5034 = vpop.f32.mrb[0].mxu0
    %v5035 = vadd.f32 %v4964, %v5034
    %v5036 = vpop.f32.mrb[0].mxu0
    %5037 = vdwg.mxu0
    %vm5038 = vcmask 74752
    %5039 = vst.msk [vmem:[#allocation2] sm:$0x3] %vm5038, %v5035
    // Predicated region
    $region18: #{tpu_custom_call.1} parent=1 // pred_check
      _
    $region19: #{tpu_custom_call.1} parent=1 // pred_check_branch
      %5041 = sbr.rel (0) target = $region21
    $region20: #{tpu_custom_call.1} parent=1 // pred_region
      %s5043 = ssub.s32 32, 32
      %5044 = vsyncadd [#allocation3], %s5043
      %s5046 = sshll.u32 [#allocation2], 4
      %s5047 = int_to_ptr.vmem [resolvable:$true] %s5046
      %5049 = dma.vmem_to_hbm [thread:$0]  %s5047, 32, %s4, [#allocation3]
    $region21: #{tpu_custom_call.1} parent=1 // pred_fallthru
      _
    // Predicated region
    $region22: #{tpu_custom_call.1} parent=1 // pred_check
      _
    $region23: #{tpu_custom_call.1} parent=1 // pred_check_branch
      %5051 = sbr.rel (0) target = $region25
    $region24: #{tpu_custom_call.1} parent=1 // pred_region
      %5052 = dma.done [#allocation3], 32
    $region25: #{tpu_custom_call.1} parent=1 // pred_fallthru
      _
    %5053 = vsyncpa [#allocation3], 1

</llo_original>
